<compile_context>
chip_gen: v6e
topology: v6e:2x2x1
jax: 0.10.0
libtpu: 0.0.40
codegen_flags: <defaults>
</compile_context>

<pallas_src>
import functools

import jax
import jax.numpy as jnp
from jax.experimental import pallas as pl
from jax.experimental.pallas import tpu as pltpu


# ----------------------------------------------------------------------------
# Fused kernel: 1x1 conv (+BN+ReLU)  ->  depthwise 3x3 conv (+BN+ReLU)
# ----------------------------------------------------------------------------
def _fused_block_kernel(x_ref, wpw_ref, bpw_ref, wdw_ref, bdw_ref, o_ref,
                        acc_ref, *, TB, H, W):
    k = pl.program_id(2)

    @pl.when(k == 0)
    def _():
        acc_ref[...] = jnp.zeros_like(acc_ref)

    # (TB*H*W, tk) bf16 @ (tk, tn) bf16 -> f32 accumulate (native MXU rate).
    x = x_ref[...].reshape(TB * H * W, x_ref.shape[-1])
    acc_ref[...] += jnp.dot(x, wpw_ref[...],
                            preferred_element_type=jnp.float32)

    @pl.when(k == pl.num_programs(2) - 1)
    def _():
        tc = o_ref.shape[-1]

        # 1x1-conv epilogue: folded-BN bias + ReLU, back to (TB, H, W, tc).
        y = jnp.maximum(acc_ref[...] + bpw_ref[...], 0.0).reshape(TB, H, W, tc)

        # Depthwise 3x3, zero padding entirely in VMEM:
        #  - H padding: concat along a cheap outer axis.
        #  - W shifts: 3 precomputed shifted copies (instead of 9 unaligned
        #    sublane slices).
        zrow = jnp.zeros((TB, 1, W, tc), jnp.float32)
        yh = jnp.concatenate([zrow, y, zrow], axis=1)          # (TB, H+2, W, tc)
        zcol = jnp.zeros((TB, H + 2, 1, tc), jnp.float32)
        y_shift = (
            jnp.concatenate([zcol, yh[:, :, :W - 1, :]], axis=2),   # col j-1
            yh,                                                     # col j
            jnp.concatenate([yh[:, :, 1:, :], zcol], axis=2),       # col j+1
        )

        wdw = wdw_ref[...]                                     # (9, tc) f32
        acc = jnp.zeros((TB, H, W, tc), jnp.float32)
        for ki in range(3):
            for kj in range(3):
                acc = acc + y_shift[kj][:, ki:ki + H, :, :] * wdw[ki * 3 + kj]

        o_ref[...] = jnp.maximum(acc + bdw_ref[0, :], 0.0).astype(o_ref.dtype)


# ----------------------------------------------------------------------------
# Wrapper
# ----------------------------------------------------------------------------
def _round_up(v, m):
    return ((v + m - 1) // m) * m


def _pick_tile(dim, preferred):
    """Largest tile <= preferred that is a multiple of 128 and divides the
    128-rounded dim (so channel padding stays minimal)."""
    dim_r = _round_up(dim, 128)
    t = max(128, (min(preferred, dim_r) // 128) * 128)
    while dim_r % t != 0:
        t -= 128
    return t, dim_r


def _pick_batch_tile(batch, hw, max_rows=1024):
    """Largest divisor of `batch` whose row tile (tb*H*W) stays <= max_rows."""
    cap = max(1, max_rows // max(hw, 1))
    tb = 1
    for d in range(1, batch + 1):
        if batch % d == 0 and d <= cap:
            tb = d
    return tb


def fused_conv_block(x_nhwc, w_pw, b_pw, w_dw, b_dw, *, tk=512, tn=256):
    """x: (B, H, W, Cin) f32; w_pw: (Cin, Cout); w_dw: (9, Cout).
    Returns (B, H, W, Cout) f32 = relu(BN(dwconv3x3(relu(BN(x @ w_pw)))))."""
    B, H, W, cin = x_nhwc.shape
    cout = w_pw.shape[1]

    tk, cin_p = _pick_tile(cin, tk)
    tn, cout_p = _pick_tile(cout, tn)
    tb = _pick_batch_tile(B, H * W)

    # Zero-pad channels to tile multiples (zeros contribute nothing).
    x_p = x_nhwc if cin_p == cin else jnp.pad(
        x_nhwc, ((0, 0), (0, 0), (0, 0), (0, cin_p - cin)))
    w_pw_p = jnp.pad(w_pw, ((0, cin_p - cin), (0, cout_p - cout)))
    b_pw_p = jnp.pad(b_pw, ((0, cout_p - cout),)).reshape(1, cout_p)
    w_dw_p = jnp.pad(w_dw, ((0, 0), (0, cout_p - cout)))
    b_dw_p = jnp.pad(b_dw, ((0, cout_p - cout),)).reshape(1, cout_p)

    # bf16 feed for the MXU (f32 accumulation in VMEM scratch).
    x_bf = x_p.astype(jnp.bfloat16)
    w_pw_bf = w_pw_p.astype(jnp.bfloat16)

    grid = (B // tb, cout_p // tn, cin_p // tk)
    kernel = functools.partial(_fused_block_kernel, TB=tb, H=H, W=W)
    out = pl.pallas_call(
        kernel,
        out_shape=jax.ShapeDtypeStruct((B, H, W, cout_p), jnp.float32),
        grid=grid,
        in_specs=[
            pl.BlockSpec((tb, H, W, tk), lambda b, n, k: (b, 0, 0, k)),
            pl.BlockSpec((tk, tn), lambda b, n, k: (k, n)),
            pl.BlockSpec((1, tn), lambda b, n, k: (0, n)),
            pl.BlockSpec((9, tn), lambda b, n, k: (0, n)),
            pl.BlockSpec((1, tn), lambda b, n, k: (0, n)),
        ],
        out_specs=pl.BlockSpec((tb, H, W, tn), lambda b, n, k: (b, 0, 0, n)),
        scratch_shapes=[pltpu.VMEM((tb * H * W, tn), jnp.float32)],
        compiler_params=pltpu.CompilerParams(
            dimension_semantics=("parallel", "parallel", "arbitrary"),
            vmem_limit_bytes=32 * 1024 * 1024),
    )(x_bf, w_pw_bf, b_pw_p, w_dw_p, b_dw_p)

    return out if cout_p == cout else out[..., :cout]


def conv_forward(x_nchw, params, *, tk=512, tn=256):
    """PyTorch-style NCHW in, NCHW out."""
    x = jnp.transpose(x_nchw, (0, 2, 3, 1)).astype(jnp.float32)
    y = fused_conv_block(x, params["w_pw"], params["b_pw"],
                         params["w_dw"], params["b_dw"], tk=tk, tn=tn)
    return jnp.transpose(y, (0, 3, 1, 2))


# ----------------------------------------------------------------------------
# Deterministic parameter init (BatchNorm folded, eval mode)
# ----------------------------------------------------------------------------
def _fold_bn(w, b, gamma, beta, mean, var, eps=1e-5):
    scale = gamma / jnp.sqrt(var + eps)
    return w * scale, (b - mean) * scale + beta


def init_params(key, *, in_embedding, out_embedding):
    ks = jax.random.split(key, 12)
    w_pw = jax.random.normal(ks[0], (in_embedding, out_embedding),
                             jnp.float32) * 0.05
    b_pw = jax.random.normal(ks[1], (out_embedding,), jnp.float32) * 0.1
    g0 = jax.random.uniform(ks[2], (out_embedding,), jnp.float32, 0.5, 1.5)
    bt0 = jax.random.normal(ks[3], (out_embedding,), jnp.float32) * 0.1
    mu0 = jax.random.normal(ks[4], (out_embedding,), jnp.float32) * 0.1
    v0 = jax.random.uniform(ks[5], (out_embedding,), jnp.float32, 0.5, 1.5)
    w_pw, b_pw = _fold_bn(w_pw, b_pw, g0, bt0, mu0, v0)

    w_dw = jax.random.normal(ks[6], (9, out_embedding), jnp.float32) * 0.1
    b_dw = jax.random.normal(ks[7], (out_embedding,), jnp.float32) * 0.1
    g1 = jax.random.uniform(ks[8], (out_embedding,), jnp.float32, 0.5, 1.5)
    bt1 = jax.random.normal(ks[9], (out_embedding,), jnp.float32) * 0.1
    mu1 = jax.random.normal(ks[10], (out_embedding,), jnp.float32) * 0.1
    v1 = jax.random.uniform(ks[11], (out_embedding,), jnp.float32, 0.5, 1.5)
    w_dw, b_dw = _fold_bn(w_dw, b_dw, g1, bt1, mu1, v1)

    # TODO(synk): training-mode BatchNorm (batch statistics) is not modeled;
    # eval-mode folding only.
    return {"w_pw": w_pw, "b_pw": b_pw, "w_dw": w_dw, "b_dw": b_dw}


# ----------------------------------------------------------------------------
# Pure-JAX f32 reference (sanity check)
# ----------------------------------------------------------------------------
def ref_forward(x_nchw, params):
    x = jnp.transpose(x_nchw, (0, 2, 3, 1)).astype(jnp.float32)
    y = jnp.maximum(
        jnp.einsum("bhwc,cd->bhwd", x, params["w_pw"],
                   precision=jax.lax.Precision.HIGHEST) + params["b_pw"], 0.0)
    B, H, W, C = y.shape
    yp = jnp.pad(y, ((0, 0), (1, 1), (1, 1), (0, 0)))
    acc = jnp.zeros_like(y)
    for ki in range(3):
        for kj in range(3):
            acc = acc + yp[:, ki:ki + H, kj:kj + W, :] * params["w_dw"][ki * 3 + kj]
    y = jnp.maximum(acc + params["b_dw"], 0.0)
    return jnp.transpose(y, (0, 3, 1, 2))


# ----------------------------------------------------------------------------
if __name__ == "__main__":
    # Small shapes consistent with the module (defaults are 768 -> 768).
    B = 2
    in_embedding = 256
    out_embedding = 320     # not a multiple of 128 -> exercises padding path
    H = W = 16

    key = jax.random.PRNGKey(0)
    kx, kp = jax.random.split(key)
    params = init_params(kp, in_embedding=in_embedding,
                         out_embedding=out_embedding)
    x = jax.random.normal(kx, (B, in_embedding, H, W), jnp.float32)

    # Small tiles so the test exercises both the K-reduction grid axis and
    # multiple Cout tiles (production defaults: tk=512, tn=256).
    out = conv_forward(x, params, tk=128, tn=128)
    out = jax.block_until_ready(out)
    assert out.shape == (B, out_embedding, H, W), out.shape

    ref = jax.block_until_ready(ref_forward(x, params))
    err = float(jnp.max(jnp.abs(out - ref)))
    # bf16-fed MXU with f32 accumulation vs full-f32 reference: consciously
    # loosened tolerance.
    assert err < 2e-2, err

    print("KERNEL_OK")
</pallas_src>

<mosaic_0001>
module attributes {stable_mosaic.version = 11 : i64} {
  func.func @_fused_block_kernel(%arg0: i32, %arg1: i32, %arg2: i32, %arg3: memref<2x16x16x128xbf16, #tpu.memory_space<vmem>>, %arg4: memref<128x128xbf16, #tpu.memory_space<vmem>>, %arg5: memref<1x128xf32, #tpu.memory_space<vmem>>, %arg6: memref<9x128xf32, #tpu.memory_space<vmem>>, %arg7: memref<1x128xf32, #tpu.memory_space<vmem>>, %arg8: memref<2x16x16x128xf32, #tpu.memory_space<vmem>>, %arg9: memref<512x128xf32, #tpu.memory_space<vmem>>) attributes {dimension_semantics = [#tpu.dimension_semantics<parallel>, #tpu.dimension_semantics<parallel>, #tpu.dimension_semantics<arbitrary>], iteration_bounds = array<i64: 1, 3, 2>, scalar_prefetch = 0 : i64, scratch_operands = 1 : i64, tpu.core_type = #tpu.core_type<tc>, window_params = [{transform_indices = @transform_0, window_bounds = array<i64: 2, 16, 16, 128>}, {transform_indices = @transform_1, window_bounds = array<i64: 128, 128>}, {transform_indices = @transform_2, window_bounds = array<i64: 1, 128>}, {transform_indices = @transform_3, window_bounds = array<i64: 9, 128>}, {transform_indices = @transform_4, window_bounds = array<i64: 1, 128>}, {transform_indices = @transform_5, window_bounds = array<i64: 2, 16, 16, 128>}]} {
    %c0_i32 = arith.constant 0 : i32
    %0 = arith.cmpi eq, %arg2, %c0_i32 : i32
    %1 = arith.extui %0 : i1 to i32
    %c0_i32_0 = arith.constant 0 : i32
    %2 = arith.cmpi ne, %1, %c0_i32_0 : i32
    scf.if %2 {
      %cst_11 = arith.constant 0.000000e+00 : f32
      %13 = vector.broadcast %cst_11 : f32 to vector<512x128xf32>
      %c0_12 = arith.constant 0 : index
      %c0_13 = arith.constant 0 : index
      %14 = vector.load %arg9[%c0_12, %c0_13] : memref<512x128xf32, #tpu.memory_space<vmem>>, vector<512x128xf32>
      tpu.vector_store %arg9[%c0_12, %c0_13], %13 {strides = array<i32>} : memref<512x128xf32, #tpu.memory_space<vmem>>, vector<512x128xf32>,
    } else {
    }
    %c0 = arith.constant 0 : index
    %c0_1 = arith.constant 0 : index
    %c0_2 = arith.constant 0 : index
    %c0_3 = arith.constant 0 : index
    %3 = vector.load %arg3[%c0, %c0_1, %c0_2, %c0_3] : memref<2x16x16x128xbf16, #tpu.memory_space<vmem>>, vector<2x16x16x128xbf16>
    %4 = vector.shape_cast %3 : vector<2x16x16x128xbf16> to vector<512x128xbf16>
    %c0_4 = arith.constant 0 : index
    %c0_5 = arith.constant 0 : index
    %5 = vector.load %arg9[%c0_4, %c0_5] : memref<512x128xf32, #tpu.memory_space<vmem>>, vector<512x128xf32>
    %c0_6 = arith.constant 0 : index
    %c0_7 = arith.constant 0 : index
    %6 = vector.load %arg4[%c0_6, %c0_7] : memref<128x128xbf16, #tpu.memory_space<vmem>>, vector<128x128xbf16>
    %cst = arith.constant dense<0.000000e+00> : vector<512x128xf32>
    %7 = tpu.matmul %4, %6, %cst {dimension_numbers = #tpu.dot_dimension_numbers<[1], [0], [0], [1], [0, 0, 1, 1], [], []>} : vector<512x128xbf16>, vector<128x128xbf16>, vector<512x128xf32> -> vector<512x128xf32>
    %8 = arith.addf %5, %7 : vector<512x128xf32>
    %c0_8 = arith.constant 0 : index
    %c0_9 = arith.constant 0 : index
    %9 = vector.load %arg9[%c0_8, %c0_9] : memref<512x128xf32, #tpu.memory_space<vmem>>, vector<512x128xf32>
    tpu.vector_store %arg9[%c0_8, %c0_9], %8 {strides = array<i32>} : memref<512x128xf32, #tpu.memory_space<vmem>>, vector<512x128xf32>,
    %c1_i32 = arith.constant 1 : i32
    %10 = arith.cmpi eq, %arg2, %c1_i32 : i32
    %11 = arith.extui %10 : i1 to i32
    %c0_i32_10 = arith.constant 0 : i32
    %12 = arith.cmpi ne, %11, %c0_i32_10 : i32
    scf.if %12 {
      %c0_11 = arith.constant 0 : index
      %c0_12 = arith.constant 0 : index
      %13 = vector.load %arg9[%c0_11, %c0_12] : memref<512x128xf32, #tpu.memory_space<vmem>>, vector<512x128xf32>
      %c0_13 = arith.constant 0 : index
      %c0_14 = arith.constant 0 : index
      %14 = vector.load %arg5[%c0_13, %c0_14] : memref<1x128xf32, #tpu.memory_space<vmem>>, vector<1x128xf32>
      %15 = vector.broadcast %14 : vector<1x128xf32> to vector<512x128xf32>
      %16 = arith.addf %13, %15 : vector<512x128xf32>
      %cst_15 = arith.constant 0.000000e+00 : f32
      %17 = vector.broadcast %cst_15 : f32 to vector<512x128xf32>
      %18 = arith.maximumf %16, %17 : vector<512x128xf32>
      %19 = vector.shape_cast %18 : vector<512x128xf32> to vector<2x16x16x128xf32>
      %cst_16 = arith.constant 0.000000e+00 : f32
      %20 = vector.broadcast %cst_16 : f32 to vector<2x1x16x128xf32>
      %21 = tpu.concatenate %20, %19, %20 in 1 : vector<2x1x16x128xf32>, vector<2x16x16x128xf32>, vector<2x1x16x128xf32> -> vector<2x18x16x128xf32>
      %cst_17 = arith.constant 0.000000e+00 : f32
      %22 = vector.broadcast %cst_17 : f32 to vector<2x18x1x128xf32>
      %23 = vector.extract_strided_slice %21 {offsets = [0, 0, 0, 0], sizes = [2, 18, 15, 128], strides = [1, 1, 1, 1]} : vector<2x18x16x128xf32> to vector<2x18x15x128xf32>
      %24 = tpu.concatenate %22, %23 in 2 : vector<2x18x1x128xf32>, vector<2x18x15x128xf32> -> vector<2x18x16x128xf32>
      %25 = vector.extract_strided_slice %21 {offsets = [0, 0, 1, 0], sizes = [2, 18, 15, 128], strides = [1, 1, 1, 1]} : vector<2x18x16x128xf32> to vector<2x18x15x128xf32>
      %26 = tpu.concatenate %25, %22 in 2 : vector<2x18x15x128xf32>, vector<2x18x1x128xf32> -> vector<2x18x16x128xf32>
      %c0_18 = arith.constant 0 : index
      %c0_19 = arith.constant 0 : index
      %27 = vector.load %arg6[%c0_18, %c0_19] : memref<9x128xf32, #tpu.memory_space<vmem>>, vector<9x128xf32>
      %cst_20 = arith.constant 0.000000e+00 : f32
      %28 = vector.broadcast %cst_20 : f32 to vector<2x16x16x128xf32>
      %29 = vector.extract_strided_slice %24 {offsets = [0, 0, 0, 0], sizes = [2, 16, 16, 128], strides = [1, 1, 1, 1]} : vector<2x18x16x128xf32> to vector<2x16x16x128xf32>
      %30 = vector.extract_strided_slice %27 {offsets = [0, 0], sizes = [1, 128], strides = [1, 1]} : vector<9x128xf32> to vector<1x128xf32>
      %31 = vector.shape_cast %30 : vector<1x128xf32> to vector<128xf32>
      %32 = vector.shape_cast %31 : vector<128xf32> to vector<1x1x1x128xf32>
      %33 = vector.broadcast %32 : vector<1x1x1x128xf32> to vector<2x16x16x128xf32>
      %34 = arith.mulf %29, %33 : vector<2x16x16x128xf32>
      %35 = arith.addf %28, %34 : vector<2x16x16x128xf32>
      %36 = vector.extract_strided_slice %21 {offsets = [0, 0, 0, 0], sizes = [2, 16, 16, 128], strides = [1, 1, 1, 1]} : vector<2x18x16x128xf32> to vector<2x16x16x128xf32>
      %37 = vector.extract_strided_slice %27 {offsets = [1, 0], sizes = [1, 128], strides = [1, 1]} : vector<9x128xf32> to vector<1x128xf32>
      %38 = vector.shape_cast %37 : vector<1x128xf32> to vector<128xf32>
      %39 = vector.shape_cast %38 : vector<128xf32> to vector<1x1x1x128xf32>
      %40 = vector.broadcast %39 : vector<1x1x1x128xf32> to vector<2x16x16x128xf32>
      %41 = arith.mulf %36, %40 : vector<2x16x16x128xf32>
      %42 = arith.addf %35, %41 : vector<2x16x16x128xf32>
      %43 = vector.extract_strided_slice %26 {offsets = [0, 0, 0, 0], sizes = [2, 16, 16, 128], strides = [1, 1, 1, 1]} : vector<2x18x16x128xf32> to vector<2x16x16x128xf32>
      %44 = vector.extract_strided_slice %27 {offsets = [2, 0], sizes = [1, 128], strides = [1, 1]} : vector<9x128xf32> to vector<1x128xf32>
      %45 = vector.shape_cast %44 : vector<1x128xf32> to vector<128xf32>
      %46 = vector.shape_cast %45 : vector<128xf32> to vector<1x1x1x128xf32>
      %47 = vector.broadcast %46 : vector<1x1x1x128xf32> to vector<2x16x16x128xf32>
      %48 = arith.mulf %43, %47 : vector<2x16x16x128xf32>
      %49 = arith.addf %42, %48 : vector<2x16x16x128xf32>
      %50 = vector.extract_strided_slice %24 {offsets = [0, 1, 0, 0], sizes = [2, 16, 16, 128], strides = [1, 1, 1, 1]} : vector<2x18x16x128xf32> to vector<2x16x16x128xf32>
      %51 = vector.extract_strided_slice %27 {offsets = [3, 0], sizes = [1, 128], strides = [1, 1]} : vector<9x128xf32> to vector<1x128xf32>
      %52 = vector.shape_cast %51 : vector<1x128xf32> to vector<128xf32>
      %53 = vector.shape_cast %52 : vector<128xf32> to vector<1x1x1x128xf32>
      %54 = vector.broadcast %53 : vector<1x1x1x128xf32> to vector<2x16x16x128xf32>
      %55 = arith.mulf %50, %54 : vector<2x16x16x128xf32>
      %56 = arith.addf %49, %55 : vector<2x16x16x128xf32>
      %57 = vector.extract_strided_slice %21 {offsets = [0, 1, 0, 0], sizes = [2, 16, 16, 128], strides = [1, 1, 1, 1]} : vector<2x18x16x128xf32> to vector<2x16x16x128xf32>
      %58 = vector.extract_strided_slice %27 {offsets = [4, 0], sizes = [1, 128], strides = [1, 1]} : vector<9x128xf32> to vector<1x128xf32>
      %59 = vector.shape_cast %58 : vector<1x128xf32> to vector<128xf32>
      %60 = vector.shape_cast %59 : vector<128xf32> to vector<1x1x1x128xf32>
      %61 = vector.broadcast %60 : vector<1x1x1x128xf32> to vector<2x16x16x128xf32>
      %62 = arith.mulf %57, %61 : vector<2x16x16x128xf32>
      %63 = arith.addf %56, %62 : vector<2x16x16x128xf32>
      %64 = vector.extract_strided_slice %26 {offsets = [0, 1, 0, 0], sizes = [2, 16, 16, 128], strides = [1, 1, 1, 1]} : vector<2x18x16x128xf32> to vector<2x16x16x128xf32>
      %65 = vector.extract_strided_slice %27 {offsets = [5, 0], sizes = [1, 128], strides = [1, 1]} : vector<9x128xf32> to vector<1x128xf32>
      %66 = vector.shape_cast %65 : vector<1x128xf32> to vector<128xf32>
      %67 = vector.shape_cast %66 : vector<128xf32> to vector<1x1x1x128xf32>
      %68 = vector.broadcast %67 : vector<1x1x1x128xf32> to vector<2x16x16x128xf32>
      %69 = arith.mulf %64, %68 : vector<2x16x16x128xf32>
      %70 = arith.addf %63, %69 : vector<2x16x16x128xf32>
      %71 = vector.extract_strided_slice %24 {offsets = [0, 2, 0, 0], sizes = [2, 16, 16, 128], strides = [1, 1, 1, 1]} : vector<2x18x16x128xf32> to vector<2x16x16x128xf32>
      %72 = vector.extract_strided_slice %27 {offsets = [6, 0], sizes = [1, 128], strides = [1, 1]} : vector<9x128xf32> to vector<1x128xf32>
      %73 = vector.shape_cast %72 : vector<1x128xf32> to vector<128xf32>
      %74 = vector.shape_cast %73 : vector<128xf32> to vector<1x1x1x128xf32>
      %75 = vector.broadcast %74 : vector<1x1x1x128xf32> to vector<2x16x16x128xf32>
      %76 = arith.mulf %71, %75 : vector<2x16x16x128xf32>
      %77 = arith.addf %70, %76 : vector<2x16x16x128xf32>
      %78 = vector.extract_strided_slice %21 {offsets = [0, 2, 0, 0], sizes = [2, 16, 16, 128], strides = [1, 1, 1, 1]} : vector<2x18x16x128xf32> to vector<2x16x16x128xf32>
      %79 = vector.extract_strided_slice %27 {offsets = [7, 0], sizes = [1, 128], strides = [1, 1]} : vector<9x128xf32> to vector<1x128xf32>
      %80 = vector.shape_cast %79 : vector<1x128xf32> to vector<128xf32>
      %81 = vector.shape_cast %80 : vector<128xf32> to vector<1x1x1x128xf32>
      %82 = vector.broadcast %81 : vector<1x1x1x128xf32> to vector<2x16x16x128xf32>
      %83 = arith.mulf %78, %82 : vector<2x16x16x128xf32>
      %84 = arith.addf %77, %83 : vector<2x16x16x128xf32>
      %85 = vector.extract_strided_slice %26 {offsets = [0, 2, 0, 0], sizes = [2, 16, 16, 128], strides = [1, 1, 1, 1]} : vector<2x18x16x128xf32> to vector<2x16x16x128xf32>
      %86 = vector.extract_strided_slice %27 {offsets = [8, 0], sizes = [1, 128], strides = [1, 1]} : vector<9x128xf32> to vector<1x128xf32>
      %87 = vector.shape_cast %86 : vector<1x128xf32> to vector<128xf32>
      %88 = vector.shape_cast %87 : vector<128xf32> to vector<1x1x1x128xf32>
      %89 = vector.broadcast %88 : vector<1x1x1x128xf32> to vector<2x16x16x128xf32>
      %90 = arith.mulf %85, %89 : vector<2x16x16x128xf32>
      %91 = arith.addf %84, %90 : vector<2x16x16x128xf32>
      %c0_21 = arith.constant 0 : index
      %c0_22 = arith.constant 0 : index
      %92 = vector.load %arg7[%c0_21, %c0_22] : memref<1x128xf32, #tpu.memory_space<vmem>>, vector<1x128xf32>
      %93 = vector.shape_cast %92 : vector<1x128xf32> to vector<128xf32>
      %94 = vector.shape_cast %93 : vector<128xf32> to vector<1x1x1x128xf32>
      %95 = vector.broadcast %94 : vector<1x1x1x128xf32> to vector<2x16x16x128xf32>
      %96 = arith.addf %91, %95 : vector<2x16x16x128xf32>
      %cst_23 = arith.constant 0.000000e+00 : f32
      %97 = vector.broadcast %cst_23 : f32 to vector<2x16x16x128xf32>
      %98 = arith.maximumf %96, %97 : vector<2x16x16x128xf32>
      %c0_24 = arith.constant 0 : index
      %c0_25 = arith.constant 0 : index
      %c0_26 = arith.constant 0 : index
      %c0_27 = arith.constant 0 : index
      %99 = vector.load %arg8[%c0_24, %c0_25, %c0_26, %c0_27] : memref<2x16x16x128xf32, #tpu.memory_space<vmem>>, vector<2x16x16x128xf32>
      tpu.vector_store %arg8[%c0_24, %c0_25, %c0_26, %c0_27], %98 {strides = array<i32>} : memref<2x16x16x128xf32, #tpu.memory_space<vmem>>, vector<2x16x16x128xf32>,
    } else {
    }
    return
  }
  func.func @transform_0(%arg0: i32, %arg1: i32, %arg2: i32) -> (i32, i32, i32, i32) {
    %c0_i32 = arith.constant 0 : i32
    %c0_i32_0 = arith.constant 0 : i32
    %c0_i32_1 = arith.constant 0 : i32
    return %arg0, %c0_i32, %c0_i32_0, %arg2 : i32, i32, i32, i32
  }
  func.func @transform_1(%arg0: i32, %arg1: i32, %arg2: i32) -> (i32, i32) {
    %c0_i32 = arith.constant 0 : i32
    return %arg2, %arg1 : i32, i32
  }
  func.func @transform_2(%arg0: i32, %arg1: i32, %arg2: i32) -> (i32, i32) {
    %c0_i32 = arith.constant 0 : i32
    %c0_i32_0 = arith.constant 0 : i32
    return %c0_i32, %arg1 : i32, i32
  }
  func.func @transform_3(%arg0: i32, %arg1: i32, %arg2: i32) -> (i32, i32) {
    %c0_i32 = arith.constant 0 : i32
    %c0_i32_0 = arith.constant 0 : i32
    return %c0_i32, %arg1 : i32, i32
  }
  func.func @transform_4(%arg0: i32, %arg1: i32, %arg2: i32) -> (i32, i32) {
    %c0_i32 = arith.constant 0 : i32
    %c0_i32_0 = arith.constant 0 : i32
    return %c0_i32, %arg1 : i32, i32
  }
  func.func @transform_5(%arg0: i32, %arg1: i32, %arg2: i32) -> (i32, i32, i32, i32) {
    %c0_i32 = arith.constant 0 : i32
    %c0_i32_0 = arith.constant 0 : i32
    %c0_i32_1 = arith.constant 0 : i32
    return %arg0, %c0_i32, %c0_i32_0, %arg1 : i32, i32, i32, i32
  }
}

</mosaic_0001>

<llo_original>
// kernel: tpu_custom_call.1
$region0: #{tpu_custom_call.1}
  #allocation0 [shape = 'u32[]', space=smem, size = 0x4, offset = 0x4, fixed_abs, tag = 'smem constant byte address 0x4 - core index']
  #allocation1 [shape = 'u32[144,128]{1,0:T(1,128)}', space=vmem, size = 0x12000, scoped, tag = 'internal scratch']
  #allocation2 [shape = 'f32[512,128]{1,0:T(8,128)}', space=vmem, size = 0x40000, scoped, tag = 'scratch operand']
  %s0 = inlined_call_operand.hbm [shape: bf16[2,16,16,256], index: 0, kind: input, shape index: {}]
  %s1 = inlined_call_operand.hbm [shape: bf16[256,384], index: 1, kind: input, shape index: {}]
  %s2 = inlined_call_operand.vmem [shape: f32[1,384], index: 2, kind: input, shape index: {}]
  %s3 = inlined_call_operand.hbm [shape: f32[9,384], index: 3, kind: input, shape index: {}]
  %s4 = inlined_call_operand.vmem [shape: f32[1,384], index: 4, kind: input, shape index: {}]
  %s5 = inlined_call_operand.hbm [shape: f32[2,16,16,384], index: 5, kind: output, shape index: {}]
  %s6 = sld [smem:[#allocation0]]
  $region73: #{tpu_custom_call.1} parent=0
    _
  %s8 = ssub.s32 1, %s6
  %s9 = scalar_select 0, %s8, %s6
  $region1: #{tpu_custom_call.1} parent=0
    #allocation3 [shape = 'u8[262144]{0}', space=vmem, size = 0x40000, scoped, tag = 'input window, operand 0']
    #allocation4 [shape = 's32[2]{0}', space=sflag, size = 0x8, scoped, tag = 'scoped memory for tpu_custom_call.1']
    #allocation5 [shape = 's32[2]{0}', space=sflag, size = 0x8, scoped, tag = 'scoped memory for tpu_custom_call.1']
    #allocation6 [shape = 'u8[65536]{0}', space=vmem, size = 0x10000, scoped, tag = 'input window, operand 1']
    #allocation7 [shape = 's32[2]{0}', space=sflag, size = 0x8, scoped, tag = 'scoped memory for tpu_custom_call.1']
    #allocation8 [shape = 'u8[16384]{0}', space=vmem, size = 0x4000, scoped, tag = 'input window, operand 3']
    #allocation9 [shape = 'u8[524288]{0}', space=vmem, size = 0x80000, scoped, tag = 'output window, operand 0']
    %10 = vsyncpa [#allocation4], 0
    %s11 = scalar_lea.sflag [#allocation4], 1
    %12 = vsyncpa %s11, 0
    %13 = vsyncpa [#allocation7], 0
    %s14 = scalar_lea.sflag [#allocation7], 1
    %15 = vsyncpa %s14, 0
    %16 = vsyncpa [#allocation5], 0
    %s17 = scalar_lea.sflag [#allocation5], 1
    %18 = vsyncpa %s17, 0
    loop: start=0, step=1, limit=8
    $region2: #{tpu_custom_call.1} parent=1 // loop_pre_header
      _
    $region3: #{tpu_custom_call.1} parent=1 // loop_header
      %s20 = sphi 0, %s24
      %p21 = scmp.ge.s32.totalorder %s20, 8
      %s27 = sphi 0, %s46
      %s28 = sphi 0, %s42
      %s29 = sphi 0, %s38
      %s30 = sphi 0, %s27
      %s31 = sphi 0, %s28
      %s32 = sphi 0, %s29
      %s33 = sphi 0, %s30
      %s34 = sphi 0, %s31
      %s35 = sphi 0, %s32
      %s51 = sphi 0, %s53
      %s54 = sphi 0, %s51
      %s55 = sphi 0, %s54
      %s71 = sphi 0, %s55
      %s79 = sphi 0, %s81
      %s82 = sphi 0, %s79
      %s83 = sphi 0, %s82
      %s99 = sphi 0, %s83
      %s105 = sphi 0, %s107
      %s108 = sphi 0, %s105
      %s109 = sphi 0, %s108
      %s125 = sphi 0, %s109
      %s131 = sphi 0, %s133
      %s134 = sphi 0, %s131
      %s135 = sphi 0, %s134
      %s151 = sphi 0, %s135
      %s157 = sphi 0, %s159
      %s160 = sphi 0, %s157
      %s161 = sphi 0, %s160
      %s177 = sphi 0, %s161
      %s185 = sphi 0, %s187
      %s188 = sphi 0, %s185
      %s189 = sphi 0, %s188
      %s205 = sphi 0, %s189
    $region4: #{tpu_custom_call.1} parent=1 // loop_header_branch
      %23 = sbr.rel (%p21) target = $region8
    $region5: #{tpu_custom_call.1} parent=1 // loop_body
      %s25 = ssub.s32 %s20, 1
      %s26 = ssub.s32 %s20, 2
      %s36 = sadd.s32 1, %s29
      %p37 = scmp.ge.s32.totalorder %s36, 2
      %s38 = scalar_select %p37, 0, %s36
      %s39 = sadd.s32 1, %s28
      %s40 = scalar_select %p37, %s39, %s28
      %p41 = scmp.ge.s32.totalorder %s40, 3
      %s42 = scalar_select %p41, 0, %s40
      %s43 = sadd.s32 1, %s27
      %s44 = scalar_select %p41, %s43, %s27
      %p45 = scmp.ge.s32.totalorder %s44, 1
      %s46 = scalar_select %p45, 0, %s44
      %s47 = ssub.s32 %s27, %s46
      %s48 = ssub.s32 %s29, %s38
      %s49 = sor.u32 %s47, %s48
      %p50 = scmp.eq.s32.totalorder %s49, 0
      %s52 = sadd.s32 %s51, 1
      %s53 = scalar_select %p50, %s51, %s52
      %p56 = pneg %p50
      %p57 = scmp.eq.s32.totalorder %s20, 5
      %p58 = por %p56, %p57
      %p59 = scmp.ne.s32.totalorder %s51, %s54
      %p60 = scmp.eq.s32.totalorder %s20, 0
      %p61 = por %p59, %p60
      %p62 = scmp.ne.s32.totalorder %s51, %s54
      %p63 = scmp.eq.s32.totalorder %s25, 5
      %p64 = por %p62, %p63
      %p65 = scmp.ne.s32.totalorder %s54, %s55
      %p66 = scmp.eq.s32.totalorder %s25, 0
      %p67 = por %p65, %p66
      %p68 = scmp.ne.s32.totalorder %s54, %s55
      %p69 = scmp.eq.s32.totalorder %s26, 5
      %p70 = por %p68, %p69
      %p72 = scmp.ne.s32.totalorder %s55, %s71
      %p73 = scmp.eq.s32.totalorder %s26, 0
      %p74 = por %p72, %p73
      %s75 = ssub.s32 %s29, %s38
      %s76 = ssub.s32 %s28, %s42
      %s77 = sor.u32 %s75, %s76
      %p78 = scmp.eq.s32.totalorder %s77, 0
      %s80 = sadd.s32 %s79, 1
      %s81 = scalar_select %p78, %s79, %s80
      %p84 = pneg %p78
      %p85 = scmp.eq.s32.totalorder %s20, 5
      %p86 = por %p84, %p85
      %p87 = scmp.ne.s32.totalorder %s79, %s82
      %p88 = scmp.eq.s32.totalorder %s20, 0
      %p89 = por %p87, %p88
      %p90 = scmp.ne.s32.totalorder %s79, %s82
      %p91 = scmp.eq.s32.totalorder %s25, 5
      %p92 = por %p90, %p91
      %p93 = scmp.ne.s32.totalorder %s82, %s83
      %p94 = scmp.eq.s32.totalorder %s25, 0
      %p95 = por %p93, %p94
      %p96 = scmp.ne.s32.totalorder %s82, %s83
      %p97 = scmp.eq.s32.totalorder %s26, 5
      %p98 = por %p96, %p97
      %p100 = scmp.ne.s32.totalorder %s83, %s99
      %p101 = scmp.eq.s32.totalorder %s26, 0
      %p102 = por %p100, %p101
      %s103 = ssub.s32 %s28, %s42
      %p104 = scmp.eq.s32.totalorder %s103, 0
      %s106 = sadd.s32 %s105, 1
      %s107 = scalar_select %p104, %s105, %s106
      %p110 = pneg %p104
      %p111 = scmp.eq.s32.totalorder %s20, 5
      %p112 = por %p110, %p111
      %p113 = scmp.ne.s32.totalorder %s105, %s108
      %p114 = scmp.eq.s32.totalorder %s20, 0
      %p115 = por %p113, %p114
      %p116 = scmp.ne.s32.totalorder %s105, %s108
      %p117 = scmp.eq.s32.totalorder %s25, 5
      %p118 = por %p116, %p117
      %p119 = scmp.ne.s32.totalorder %s108, %s109
      %p120 = scmp.eq.s32.totalorder %s25, 0
      %p121 = por %p119, %p120
      %p122 = scmp.ne.s32.totalorder %s108, %s109
      %p123 = scmp.eq.s32.totalorder %s26, 5
      %p124 = por %p122, %p123
      %p126 = scmp.ne.s32.totalorder %s109, %s125
      %p127 = scmp.eq.s32.totalorder %s26, 0
      %p128 = por %p126, %p127
      %s129 = ssub.s32 %s28, %s42
      %p130 = scmp.eq.s32.totalorder %s129, 0
      %s132 = sadd.s32 %s131, 1
      %s133 = scalar_select %p130, %s131, %s132
      %p136 = pneg %p130
      %p137 = scmp.eq.s32.totalorder %s20, 5
      %p138 = por %p136, %p137
      %p139 = scmp.ne.s32.totalorder %s131, %s134
      %p140 = scmp.eq.s32.totalorder %s20, 0
      %p141 = por %p139, %p140
      %p142 = scmp.ne.s32.totalorder %s131, %s134
      %p143 = scmp.eq.s32.totalorder %s25, 5
      %p144 = por %p142, %p143
      %p145 = scmp.ne.s32.totalorder %s134, %s135
      %p146 = scmp.eq.s32.totalorder %s25, 0
      %p147 = por %p145, %p146
      %p148 = scmp.ne.s32.totalorder %s134, %s135
      %p149 = scmp.eq.s32.totalorder %s26, 5
      %p150 = por %p148, %p149
      %p152 = scmp.ne.s32.totalorder %s135, %s151
      %p153 = scmp.eq.s32.totalorder %s26, 0
      %p154 = por %p152, %p153
      %s155 = ssub.s32 %s28, %s42
      %p156 = scmp.eq.s32.totalorder %s155, 0
      %s158 = sadd.s32 %s157, 1
      %s159 = scalar_select %p156, %s157, %s158
      %p162 = pneg %p156
      %p163 = scmp.eq.s32.totalorder %s20, 5
      %p164 = por %p162, %p163
      %p165 = scmp.ne.s32.totalorder %s157, %s160
      %p166 = scmp.eq.s32.totalorder %s20, 0
      %p167 = por %p165, %p166
      %p168 = scmp.ne.s32.totalorder %s157, %s160
      %p169 = scmp.eq.s32.totalorder %s25, 5
      %p170 = por %p168, %p169
      %p171 = scmp.ne.s32.totalorder %s160, %s161
      %p172 = scmp.eq.s32.totalorder %s25, 0
      %p173 = por %p171, %p172
      %p174 = scmp.ne.s32.totalorder %s160, %s161
      %p175 = scmp.eq.s32.totalorder %s26, 5
      %p176 = por %p174, %p175
      %p178 = scmp.ne.s32.totalorder %s161, %s177
      %p179 = scmp.eq.s32.totalorder %s26, 0
      %p180 = por %p178, %p179
      %s181 = ssub.s32 %s27, %s46
      %s182 = ssub.s32 %s28, %s42
      %s183 = sor.u32 %s181, %s182
      %p184 = scmp.eq.s32.totalorder %s183, 0
      %s186 = sadd.s32 %s185, 1
      %s187 = scalar_select %p184, %s185, %s186
      %p190 = pneg %p184
      %p191 = scmp.eq.s32.totalorder %s20, 5
      %p192 = por %p190, %p191
      %p193 = scmp.ne.s32.totalorder %s185, %s188
      %p194 = scmp.eq.s32.totalorder %s20, 0
      %p195 = por %p193, %p194
      %p196 = scmp.ne.s32.totalorder %s185, %s188
      %p197 = scmp.eq.s32.totalorder %s25, 5
      %p198 = por %p196, %p197
      %p199 = scmp.ne.s32.totalorder %s188, %s189
      %p200 = scmp.eq.s32.totalorder %s25, 0
      %p201 = por %p199, %p200
      %p202 = scmp.ne.s32.totalorder %s188, %s189
      %p203 = scmp.eq.s32.totalorder %s26, 5
      %p204 = por %p202, %p203
      %p206 = scmp.ne.s32.totalorder %s189, %s205
      %p207 = scmp.eq.s32.totalorder %s26, 0
      %p208 = por %p206, %p207
      %p209 = scmp.le.s32.totalorder 1, %s20
      %p210 = scmp.lt.s32.totalorder %s20, 7
      %p211 = pnand %p209, %p210
      %p212 = pneg %p211
      // Predicated region
      $region9: #{tpu_custom_call.1} parent=5 // pred_check
        _
      $region10: #{tpu_custom_call.1} parent=5 // pred_check_branch
        %214 = sbr.rel (%p211) target = $region12
      $region11: #{tpu_custom_call.1} parent=5 // pred_region
        %s215 = ssub.s32 %s20, 1
      $region12: #{tpu_custom_call.1} parent=5 // pred_fallthru
        _
      %p216 = scmp.lt.s32.totalorder %s20, 6
      // Predicated region
      $region13: #{tpu_custom_call.1} parent=5 // pred_check
        %p217 = pneg %p216
      $region14: #{tpu_custom_call.1} parent=5 // pred_check_branch
        %219 = sbr.rel (%p217) target = $region16
      $region15: #{tpu_custom_call.1} parent=5 // pred_region
        // Predicated region
        $region17: #{tpu_custom_call.1} parent=15 // pred_check
          %p220 = pneg %p61
        $region18: #{tpu_custom_call.1} parent=15 // pred_check_branch
          %222 = sbr.rel (%p220) target = $region20
        $region19: #{tpu_custom_call.1} parent=15 // pred_region
          %s223 = sand.u32 %s51, 1
          %s224 = scalar_lea.sflag [#allocation4], %s223
          %s225 = sand.u32 %s51, 1
          %s226 = smul.addr %s225, 256
          %s227 = scalar_lea.vmem [#allocation3], %s226
          %s228 = smul.u32 2, %s27
          %s230 = ssub.s32 4096, 4096
          %231 = vsyncadd %s224, %s230
          %s232 = smul.addr %s228, 64
          %s233 = sadd.s32 %s29, %s232
          %s234 = smul.addr %s233, 64
          %s235 = scalar_lea.hbm %s0, %s234
          %s236 = sshll.u32 %s227, 4
          %s237 = int_to_ptr.vmem [resolvable:$true] %s236
          %242 = dma.hbm_to_vmem [thread:$0]  %s235, 4096, %s237, %s224, 128, 64, 4
        $region20: #{tpu_custom_call.1} parent=15 // pred_fallthru
          _
        // Predicated region
        $region21: #{tpu_custom_call.1} parent=15 // pred_check
          %p243 = pneg %p89
        $region22: #{tpu_custom_call.1} parent=15 // pred_check_branch
          %245 = sbr.rel (%p243) target = $region24
        $region23: #{tpu_custom_call.1} parent=15 // pred_region
          %s246 = sand.u32 %s20, 1
          %s247 = scalar_lea.sflag [#allocation7], %s246
          %s248 = sand.u32 %s79, 1
          %s249 = smul.addr %s248, 64
          %s250 = scalar_lea.vmem [#allocation6], %s249
          %s251 = smul.u32 16, %s29
          %s253 = ssub.s32 1024, 1024
          %254 = vsyncadd %s247, %s253
          %s255 = smul.addr %s251, 3
          %s256 = sadd.s32 %s28, %s255
          %s257 = smul.addr %s256, 64
          %s258 = scalar_lea.hbm %s1, %s257
          %s259 = sshll.u32 %s250, 4
          %s260 = int_to_ptr.vmem [resolvable:$true] %s259
          %265 = dma.hbm_to_vmem [thread:$0]  %s258, 1024, %s260, %s247, 192, 64, 4
        $region24: #{tpu_custom_call.1} parent=15 // pred_fallthru
          _
        // Predicated region
        $region25: #{tpu_custom_call.1} parent=15 // pred_check
          %p266 = pneg %p115
        $region26: #{tpu_custom_call.1} parent=15 // pred_check_branch
          %268 = sbr.rel (%p266) target = $region28
        $region27: #{tpu_custom_call.1} parent=15 // pred_region
          %p269 = scmp.lt.s32.totalorder %s28, 2
          %s270 = scalar_select %p269, %s28, 2
          %s271 = scalar_lea.vmem %s2, %s270
        $region28: #{tpu_custom_call.1} parent=15 // pred_fallthru
          _
        // Predicated region
        $region29: #{tpu_custom_call.1} parent=15 // pred_check
          %p272 = pneg %p141
        $region30: #{tpu_custom_call.1} parent=15 // pred_check_branch
          %274 = sbr.rel (%p272) target = $region32
        $region31: #{tpu_custom_call.1} parent=15 // pred_region
          %s275 = sand.u32 %s20, 1
          %s276 = scalar_lea.sflag [#allocation7], %s275
          %s277 = sand.u32 %s131, 1
          %s278 = smul.addr %s277, 16
          %s279 = scalar_lea.vmem [#allocation8], %s278
          %s281 = ssub.s32 256, 256
          %282 = vsyncadd %s276, %s281
          %s283 = smul.addr %s28, 128
          %s284 = scalar_lea.hbm %s3, %s283
          %s285 = sshll.u32 %s279, 4
          %s286 = int_to_ptr.vmem [resolvable:$true] %s285
          %291 = dma.hbm_to_vmem [thread:$0]  %s284, 256, %s286, %s276, 384, 128, 8
        $region32: #{tpu_custom_call.1} parent=15 // pred_fallthru
          _
        // Predicated region
        $region33: #{tpu_custom_call.1} parent=15 // pred_check
          %p292 = pneg %p167
        $region34: #{tpu_custom_call.1} parent=15 // pred_check_branch
          %294 = sbr.rel (%p292) target = $region36
        $region35: #{tpu_custom_call.1} parent=15 // pred_region
          %p295 = scmp.lt.s32.totalorder %s28, 2
          %s296 = scalar_select %p295, %s28, 2
          %s297 = scalar_lea.vmem %s4, %s296
        $region36: #{tpu_custom_call.1} parent=15 // pred_fallthru
          _
      $region16: #{tpu_custom_call.1} parent=5 // pred_fallthru
        _
      %p298 = scmp.le.s32.totalorder 1, %s20
      %p299 = scmp.lt.s32.totalorder %s20, 7
      %p300 = pnand %p298, %p299
      %p301 = pneg %p300
      // Predicated region
      $region37: #{tpu_custom_call.1} parent=5 // pred_check
        _
      $region38: #{tpu_custom_call.1} parent=5 // pred_check_branch
        %303 = sbr.rel (%p300) target = $region40
      $region39: #{tpu_custom_call.1} parent=5 // pred_region
        %s304 = ssub.s32 %s20, 1
        %s305 = sand.u32 %s54, 1
        %s306 = scalar_lea.sflag [#allocation4], %s305
        %s307 = sand.u32 %s54, 1
        %s308 = smul.addr %s307, 256
        %s309 = scalar_lea.vmem [#allocation3], %s308
        // Predicated region
        $region41: #{tpu_custom_call.1} parent=39 // pred_check
          %p310 = pneg %p67
        $region42: #{tpu_custom_call.1} parent=39 // pred_check_branch
          %312 = sbr.rel (%p310) target = $region44
        $region43: #{tpu_custom_call.1} parent=39 // pred_region
          %313 = dma.done %s306, 4096
        $region44: #{tpu_custom_call.1} parent=39 // pred_fallthru
          _
        %s314 = sand.u32 %s25, 1
        %s315 = scalar_lea.sflag [#allocation7], %s314
        %s316 = sand.u32 %s82, 1
        %s317 = smul.addr %s316, 64
        %s318 = scalar_lea.vmem [#allocation6], %s317
        // Predicated region
        $region45: #{tpu_custom_call.1} parent=39 // pred_check
          %p319 = pneg %p95
        $region46: #{tpu_custom_call.1} parent=39 // pred_check_branch
          %321 = sbr.rel (%p319) target = $region48
        $region47: #{tpu_custom_call.1} parent=39 // pred_region
          %322 = dma.done %s315, 1024
        $region48: #{tpu_custom_call.1} parent=39 // pred_fallthru
          _
        %s323 = sand.u32 %s25, 1
        %s324 = scalar_lea.sflag [#allocation7], %s323
        %s325 = sand.u32 %s134, 1
        %s326 = smul.addr %s325, 16
        %s327 = scalar_lea.vmem [#allocation8], %s326
        // Predicated region
        $region49: #{tpu_custom_call.1} parent=39 // pred_check
          %p328 = pneg %p147
        $region50: #{tpu_custom_call.1} parent=39 // pred_check_branch
          %330 = sbr.rel (%p328) target = $region52
        $region51: #{tpu_custom_call.1} parent=39 // pred_region
          %331 = dma.done %s324, 256
        $region52: #{tpu_custom_call.1} parent=39 // pred_fallthru
          _
        %s332 = sand.u32 %s54, 1
        %s333 = scalar_lea.sflag [#allocation4], %s332
        %s334 = sand.u32 %s54, 1
        %s335 = smul.addr %s334, 256
        %s336 = scalar_lea.vmem [#allocation3], %s335
        %p337 = pneg %p67
        %p338 = pneg %p64
        %s339 = sand.u32 %s25, 1
        %s340 = scalar_lea.sflag [#allocation7], %s339
        %s341 = sand.u32 %s82, 1
        %s342 = smul.addr %s341, 64
        %s343 = scalar_lea.vmem [#allocation6], %s342
        %p344 = pneg %p95
        %p345 = pneg %p92
        %p346 = scmp.lt.s32.totalorder %s31, 2
        %s347 = scalar_select %p346, %s31, 2
        %s348 = scalar_lea.vmem %s2, %s347
        %p349 = pneg %p121
        %p350 = pneg %p118
        %s351 = sand.u32 %s25, 1
        %s352 = scalar_lea.sflag [#allocation7], %s351
        %s353 = sand.u32 %s134, 1
        %s354 = smul.addr %s353, 16
        %s355 = scalar_lea.vmem [#allocation8], %s354
        %p356 = pneg %p147
        %p357 = pneg %p144
        %p358 = scmp.lt.s32.totalorder %s31, 2
        %s359 = scalar_select %p358, %s31, 2
        %s360 = scalar_lea.vmem %s4, %s359
        %p361 = pneg %p173
        %p362 = pneg %p170
        %p363 = pneg %p201
        %p364 = pneg %p198
        %s365 = sand.u32 %s188, 1
        %s366 = scalar_lea.sflag [#allocation5], %s365
        %s367 = sand.u32 %s188, 1
        %s368 = smul.addr %s367, 512
        %s369 = scalar_lea.vmem [#allocation9], %s368
        %s370 = smul.u32 2, %s30
        %s371 = smul.u32 16, %s32
        %p372 = scmp.lt.s32.totalorder %s31, 2
        %s373 = scalar_select %p372, %s31, 2
        %s374 = scalar_lea.vmem %s2, %s373
        %p375 = scmp.lt.s32.totalorder %s31, 2
        %s376 = scalar_select %p375, %s31, 2
        %s377 = scalar_lea.vmem %s4, %s376
        %s378 = smul.u32 2, %s30
        %p380 = scmp.eq.s32.totalorder %s32, 0
        // Predicated region
        $region53: #{tpu_custom_call.1} parent=39 // pred_check
          %p381 = pneg %p380
        $region54: #{tpu_custom_call.1} parent=39 // pred_check_branch
          %383 = sbr.rel (%p381) target = $region56
        $region55: #{tpu_custom_call.1} parent=39 // pred_region
          %384 = vst [vmem:[#allocation2] sm:$0xff] 0.0
          %385 = vst [vmem:[#allocation2 + $0x8] sm:$0xff] 0.0
          %386 = vst [vmem:[#allocation2 + $0x10] sm:$0xff] 0.0
          %387 = vst [vmem:[#allocation2 + $0x18] sm:$0xff] 0.0
          %388 = vst [vmem:[#allocation2 + $0x20] sm:$0xff] 0.0
          %389 = vst [vmem:[#allocation2 + $0x28] sm:$0xff] 0.0
          %390 = vst [vmem:[#allocation2 + $0x30] sm:$0xff] 0.0
          %391 = vst [vmem:[#allocation2 + $0x38] sm:$0xff] 0.0
          %392 = vst [vmem:[#allocation2 + $0x40] sm:$0xff] 0.0
          %393 = vst [vmem:[#allocation2 + $0x48] sm:$0xff] 0.0
          %394 = vst [vmem:[#allocation2 + $0x50] sm:$0xff] 0.0
          %395 = vst [vmem:[#allocation2 + $0x58] sm:$0xff] 0.0
          %396 = vst [vmem:[#allocation2 + $0x60] sm:$0xff] 0.0
          %397 = vst [vmem:[#allocation2 + $0x68] sm:$0xff] 0.0
          %398 = vst [vmem:[#allocation2 + $0x70] sm:$0xff] 0.0
          %399 = vst [vmem:[#allocation2 + $0x78] sm:$0xff] 0.0
          %400 = vst [vmem:[#allocation2 + $0x80] sm:$0xff] 0.0
          %401 = vst [vmem:[#allocation2 + $0x88] sm:$0xff] 0.0
          %402 = vst [vmem:[#allocation2 + $0x90] sm:$0xff] 0.0
          %403 = vst [vmem:[#allocation2 + $0x98] sm:$0xff] 0.0
          %404 = vst [vmem:[#allocation2 + $0xa0] sm:$0xff] 0.0
          %405 = vst [vmem:[#allocation2 + $0xa8] sm:$0xff] 0.0
          %406 = vst [vmem:[#allocation2 + $0xb0] sm:$0xff] 0.0
          %407 = vst [vmem:[#allocation2 + $0xb8] sm:$0xff] 0.0
          %408 = vst [vmem:[#allocation2 + $0xc0] sm:$0xff] 0.0
          %409 = vst [vmem:[#allocation2 + $0xc8] sm:$0xff] 0.0
          %410 = vst [vmem:[#allocation2 + $0xd0] sm:$0xff] 0.0
          %411 = vst [vmem:[#allocation2 + $0xd8] sm:$0xff] 0.0
          %412 = vst [vmem:[#allocation2 + $0xe0] sm:$0xff] 0.0
          %413 = vst [vmem:[#allocation2 + $0xe8] sm:$0xff] 0.0
          %414 = vst [vmem:[#allocation2 + $0xf0] sm:$0xff] 0.0
          %415 = vst [vmem:[#allocation2 + $0xf8] sm:$0xff] 0.0
          %416 = vst [vmem:[#allocation2 + $0x100] sm:$0xff] 0.0
          %417 = vst [vmem:[#allocation2 + $0x108] sm:$0xff] 0.0
          %418 = vst [vmem:[#allocation2 + $0x110] sm:$0xff] 0.0
          %419 = vst [vmem:[#allocation2 + $0x118] sm:$0xff] 0.0
          %420 = vst [vmem:[#allocation2 + $0x120] sm:$0xff] 0.0
          %421 = vst [vmem:[#allocation2 + $0x128] sm:$0xff] 0.0
          %422 = vst [vmem:[#allocation2 + $0x130] sm:$0xff] 0.0
          %423 = vst [vmem:[#allocation2 + $0x138] sm:$0xff] 0.0
          %424 = vst [vmem:[#allocation2 + $0x140] sm:$0xff] 0.0
          %425 = vst [vmem:[#allocation2 + $0x148] sm:$0xff] 0.0
          %426 = vst [vmem:[#allocation2 + $0x150] sm:$0xff] 0.0
          %427 = vst [vmem:[#allocation2 + $0x158] sm:$0xff] 0.0
          %428 = vst [vmem:[#allocation2 + $0x160] sm:$0xff] 0.0
          %429 = vst [vmem:[#allocation2 + $0x168] sm:$0xff] 0.0
          %430 = vst [vmem:[#allocation2 + $0x170] sm:$0xff] 0.0
          %431 = vst [vmem:[#allocation2 + $0x178] sm:$0xff] 0.0
          %432 = vst [vmem:[#allocation2 + $0x180] sm:$0xff] 0.0
          %433 = vst [vmem:[#allocation2 + $0x188] sm:$0xff] 0.0
          %434 = vst [vmem:[#allocation2 + $0x190] sm:$0xff] 0.0
          %435 = vst [vmem:[#allocation2 + $0x198] sm:$0xff] 0.0
          %436 = vst [vmem:[#allocation2 + $0x1a0] sm:$0xff] 0.0
          %437 = vst [vmem:[#allocation2 + $0x1a8] sm:$0xff] 0.0
          %438 = vst [vmem:[#allocation2 + $0x1b0] sm:$0xff] 0.0
          %439 = vst [vmem:[#allocation2 + $0x1b8] sm:$0xff] 0.0
          %440 = vst [vmem:[#allocation2 + $0x1c0] sm:$0xff] 0.0
          %441 = vst [vmem:[#allocation2 + $0x1c8] sm:$0xff] 0.0
          %442 = vst [vmem:[#allocation2 + $0x1d0] sm:$0xff] 0.0
          %443 = vst [vmem:[#allocation2 + $0x1d8] sm:$0xff] 0.0
          %444 = vst [vmem:[#allocation2 + $0x1e0] sm:$0xff] 0.0
          %445 = vst [vmem:[#allocation2 + $0x1e8] sm:$0xff] 0.0
          %446 = vst [vmem:[#allocation2 + $0x1f0] sm:$0xff] 0.0
          %447 = vst [vmem:[#allocation2 + $0x1f8] sm:$0xff] 0.0
        $region56: #{tpu_custom_call.1} parent=39 // pred_fallthru
          _
        %v448 = vld [vmem:[%s309] sm:$0xf]
        %v449 = vld [vmem:[%s309 + $0x4] sm:$0xf]
        %v450 = vld [vmem:[%s309 + $0x8] sm:$0xf]
        %v451 = vld [vmem:[%s309 + $0xc] sm:$0xf]
        %v452 = vld [vmem:[%s309 + $0x10] sm:$0xf]
        %v453 = vld [vmem:[%s309 + $0x14] sm:$0xf]
        %v454 = vld [vmem:[%s309 + $0x18] sm:$0xf]
        %v455 = vld [vmem:[%s309 + $0x1c] sm:$0xf]
        %v456 = vld [vmem:[%s309 + $0x20] sm:$0xf]
        %v457 = vld [vmem:[%s309 + $0x24] sm:$0xf]
        %v458 = vld [vmem:[%s309 + $0x28] sm:$0xf]
        %v459 = vld [vmem:[%s309 + $0x2c] sm:$0xf]
        %v460 = vld [vmem:[%s309 + $0x30] sm:$0xf]
        %v461 = vld [vmem:[%s309 + $0x34] sm:$0xf]
        %v462 = vld [vmem:[%s309 + $0x38] sm:$0xf]
        %v463 = vld [vmem:[%s309 + $0x3c] sm:$0xf]
        %v464 = vld [vmem:[%s309 + $0x40] sm:$0xf]
        %v465 = vld [vmem:[%s309 + $0x44] sm:$0xf]
        %v466 = vld [vmem:[%s309 + $0x48] sm:$0xf]
        %v467 = vld [vmem:[%s309 + $0x4c] sm:$0xf]
        %v468 = vld [vmem:[%s309 + $0x50] sm:$0xf]
        %v469 = vld [vmem:[%s309 + $0x54] sm:$0xf]
        %v470 = vld [vmem:[%s309 + $0x58] sm:$0xf]
        %v471 = vld [vmem:[%s309 + $0x5c] sm:$0xf]
        %v472 = vld [vmem:[%s309 + $0x60] sm:$0xf]
        %v473 = vld [vmem:[%s309 + $0x64] sm:$0xf]
        %v474 = vld [vmem:[%s309 + $0x68] sm:$0xf]
        %v475 = vld [vmem:[%s309 + $0x6c] sm:$0xf]
        %v476 = vld [vmem:[%s309 + $0x70] sm:$0xf]
        %v477 = vld [vmem:[%s309 + $0x74] sm:$0xf]
        %v478 = vld [vmem:[%s309 + $0x78] sm:$0xf]
        %v479 = vld [vmem:[%s309 + $0x7c] sm:$0xf]
        %v480 = vld [vmem:[%s309 + $0x80] sm:$0xf]
        %v481 = vld [vmem:[%s309 + $0x84] sm:$0xf]
        %v482 = vld [vmem:[%s309 + $0x88] sm:$0xf]
        %v483 = vld [vmem:[%s309 + $0x8c] sm:$0xf]
        %v484 = vld [vmem:[%s309 + $0x90] sm:$0xf]
        %v485 = vld [vmem:[%s309 + $0x94] sm:$0xf]
        %v486 = vld [vmem:[%s309 + $0x98] sm:$0xf]
        %v487 = vld [vmem:[%s309 + $0x9c] sm:$0xf]
        %v488 = vld [vmem:[%s309 + $0xa0] sm:$0xf]
        %v489 = vld [vmem:[%s309 + $0xa4] sm:$0xf]
        %v490 = vld [vmem:[%s309 + $0xa8] sm:$0xf]
        %v491 = vld [vmem:[%s309 + $0xac] sm:$0xf]
        %v492 = vld [vmem:[%s309 + $0xb0] sm:$0xf]
        %v493 = vld [vmem:[%s309 + $0xb4] sm:$0xf]
        %v494 = vld [vmem:[%s309 + $0xb8] sm:$0xf]
        %v495 = vld [vmem:[%s309 + $0xbc] sm:$0xf]
        %v496 = vld [vmem:[%s309 + $0xc0] sm:$0xf]
        %v497 = vld [vmem:[%s309 + $0xc4] sm:$0xf]
        %v498 = vld [vmem:[%s309 + $0xc8] sm:$0xf]
        %v499 = vld [vmem:[%s309 + $0xcc] sm:$0xf]
        %v500 = vld [vmem:[%s309 + $0xd0] sm:$0xf]
        %v501 = vld [vmem:[%s309 + $0xd4] sm:$0xf]
        %v502 = vld [vmem:[%s309 + $0xd8] sm:$0xf]
        %v503 = vld [vmem:[%s309 + $0xdc] sm:$0xf]
        %v504 = vld [vmem:[%s309 + $0xe0] sm:$0xf]
        %v505 = vld [vmem:[%s309 + $0xe4] sm:$0xf]
        %v506 = vld [vmem:[%s309 + $0xe8] sm:$0xf]
        %v507 = vld [vmem:[%s309 + $0xec] sm:$0xf]
        %v508 = vld [vmem:[%s309 + $0xf0] sm:$0xf]
        %v509 = vld [vmem:[%s309 + $0xf4] sm:$0xf]
        %v510 = vld [vmem:[%s309 + $0xf8] sm:$0xf]
        %v511 = vld [vmem:[%s309 + $0xfc] sm:$0xf]
        %v512 = vld [vmem:[#allocation2] sm:$0xff]
        %v513 = vld [vmem:[#allocation2 + $0x8] sm:$0xff]
        %v514 = vld [vmem:[#allocation2 + $0x10] sm:$0xff]
        %v515 = vld [vmem:[#allocation2 + $0x18] sm:$0xff]
        %v516 = vld [vmem:[#allocation2 + $0x20] sm:$0xff]
        %v517 = vld [vmem:[#allocation2 + $0x28] sm:$0xff]
        %v518 = vld [vmem:[#allocation2 + $0x30] sm:$0xff]
        %v519 = vld [vmem:[#allocation2 + $0x38] sm:$0xff]
        %v520 = vld [vmem:[#allocation2 + $0x40] sm:$0xff]
        %v521 = vld [vmem:[#allocation2 + $0x48] sm:$0xff]
        %v522 = vld [vmem:[#allocation2 + $0x50] sm:$0xff]
        %v523 = vld [vmem:[#allocation2 + $0x58] sm:$0xff]
        %v524 = vld [vmem:[#allocation2 + $0x60] sm:$0xff]
        %v525 = vld [vmem:[#allocation2 + $0x68] sm:$0xff]
        %v526 = vld [vmem:[#allocation2 + $0x70] sm:$0xff]
        %v527 = vld [vmem:[#allocation2 + $0x78] sm:$0xff]
        %v528 = vld [vmem:[#allocation2 + $0x80] sm:$0xff]
        %v529 = vld [vmem:[#allocation2 + $0x88] sm:$0xff]
        %v530 = vld [vmem:[#allocation2 + $0x90] sm:$0xff]
        %v531 = vld [vmem:[#allocation2 + $0x98] sm:$0xff]
        %v532 = vld [vmem:[#allocation2 + $0xa0] sm:$0xff]
        %v533 = vld [vmem:[#allocation2 + $0xa8] sm:$0xff]
        %v534 = vld [vmem:[#allocation2 + $0xb0] sm:$0xff]
        %v535 = vld [vmem:[#allocation2 + $0xb8] sm:$0xff]
        %v536 = vld [vmem:[#allocation2 + $0xc0] sm:$0xff]
        %v537 = vld [vmem:[#allocation2 + $0xc8] sm:$0xff]
        %v538 = vld [vmem:[#allocation2 + $0xd0] sm:$0xff]
        %v539 = vld [vmem:[#allocation2 + $0xd8] sm:$0xff]
        %v540 = vld [vmem:[#allocation2 + $0xe0] sm:$0xff]
        %v541 = vld [vmem:[#allocation2 + $0xe8] sm:$0xff]
        %v542 = vld [vmem:[#allocation2 + $0xf0] sm:$0xff]
        %v543 = vld [vmem:[#allocation2 + $0xf8] sm:$0xff]
        %v544 = vld [vmem:[#allocation2 + $0x100] sm:$0xff]
        %v545 = vld [vmem:[#allocation2 + $0x108] sm:$0xff]
        %v546 = vld [vmem:[#allocation2 + $0x110] sm:$0xff]
        %v547 = vld [vmem:[#allocation2 + $0x118] sm:$0xff]
        %v548 = vld [vmem:[#allocation2 + $0x120] sm:$0xff]
        %v549 = vld [vmem:[#allocation2 + $0x128] sm:$0xff]
        %v550 = vld [vmem:[#allocation2 + $0x130] sm:$0xff]
        %v551 = vld [vmem:[#allocation2 + $0x138] sm:$0xff]
        %v552 = vld [vmem:[#allocation2 + $0x140] sm:$0xff]
        %v553 = vld [vmem:[#allocation2 + $0x148] sm:$0xff]
        %v554 = vld [vmem:[#allocation2 + $0x150] sm:$0xff]
        %v555 = vld [vmem:[#allocation2 + $0x158] sm:$0xff]
        %v556 = vld [vmem:[#allocation2 + $0x160] sm:$0xff]
        %v557 = vld [vmem:[#allocation2 + $0x168] sm:$0xff]
        %v558 = vld [vmem:[#allocation2 + $0x170] sm:$0xff]
        %v559 = vld [vmem:[#allocation2 + $0x178] sm:$0xff]
        %v560 = vld [vmem:[#allocation2 + $0x180] sm:$0xff]
        %v561 = vld [vmem:[#allocation2 + $0x188] sm:$0xff]
        %v562 = vld [vmem:[#allocation2 + $0x190] sm:$0xff]
        %v563 = vld [vmem:[#allocation2 + $0x198] sm:$0xff]
        %v564 = vld [vmem:[#allocation2 + $0x1a0] sm:$0xff]
        %v565 = vld [vmem:[#allocation2 + $0x1a8] sm:$0xff]
        %v566 = vld [vmem:[#allocation2 + $0x1b0] sm:$0xff]
        %v567 = vld [vmem:[#allocation2 + $0x1b8] sm:$0xff]
        %v568 = vld [vmem:[#allocation2 + $0x1c0] sm:$0xff]
        %v569 = vld [vmem:[#allocation2 + $0x1c8] sm:$0xff]
        %v570 = vld [vmem:[#allocation2 + $0x1d0] sm:$0xff]
        %v571 = vld [vmem:[#allocation2 + $0x1d8] sm:$0xff]
        %v572 = vld [vmem:[#allocation2 + $0x1e0] sm:$0xff]
        %v573 = vld [vmem:[#allocation2 + $0x1e8] sm:$0xff]
        %v574 = vld [vmem:[#allocation2 + $0x1f0] sm:$0xff]
        %v575 = vld [vmem:[#allocation2 + $0x1f8] sm:$0xff]
        %v576 = vld [vmem:[%s318] sm:$0xf]
        %v577 = vld [vmem:[%s318 + $0x4] sm:$0xf]
        %v578 = vld [vmem:[%s318 + $0x8] sm:$0xf]
        %v579 = vld [vmem:[%s318 + $0xc] sm:$0xf]
        %v580 = vld [vmem:[%s318 + $0x10] sm:$0xf]
        %v581 = vld [vmem:[%s318 + $0x14] sm:$0xf]
        %v582 = vld [vmem:[%s318 + $0x18] sm:$0xf]
        %v583 = vld [vmem:[%s318 + $0x1c] sm:$0xf]
        %v584 = vld [vmem:[%s318 + $0x20] sm:$0xf]
        %v585 = vld [vmem:[%s318 + $0x24] sm:$0xf]
        %v586 = vld [vmem:[%s318 + $0x28] sm:$0xf]
        %v587 = vld [vmem:[%s318 + $0x2c] sm:$0xf]
        %v588 = vld [vmem:[%s318 + $0x30] sm:$0xf]
        %v589 = vld [vmem:[%s318 + $0x34] sm:$0xf]
        %v590 = vld [vmem:[%s318 + $0x38] sm:$0xf]
        %v591 = vld [vmem:[%s318 + $0x3c] sm:$0xf]
        %v656 = vunpack.c.l.b16 %v448
        %v657 = vunpack.c.l.b16 %v449
        %v658 = vunpack.c.l.b16 %v450
        %v659 = vunpack.c.l.b16 %v451
        %v660 = vunpack.c.l.b16 %v452
        %v661 = vunpack.c.l.b16 %v453
        %v662 = vunpack.c.l.b16 %v454
        %v663 = vunpack.c.l.b16 %v455
        %v664 = vunpack.c.l.b16 %v456
        %v665 = vunpack.c.l.b16 %v457
        %v666 = vunpack.c.l.b16 %v458
        %v667 = vunpack.c.l.b16 %v459
        %v668 = vunpack.c.l.b16 %v460
        %v669 = vunpack.c.l.b16 %v461
        %v670 = vunpack.c.l.b16 %v462
        %v671 = vunpack.c.l.b16 %v463
        %v672 = vunpack.c.l.b16 %v464
        %v673 = vunpack.c.l.b16 %v465
        %v674 = vunpack.c.l.b16 %v466
        %v675 = vunpack.c.l.b16 %v467
        %v676 = vunpack.c.l.b16 %v468
        %v677 = vunpack.c.l.b16 %v469
        %v678 = vunpack.c.l.b16 %v470
        %v679 = vunpack.c.l.b16 %v471
        %v680 = vunpack.c.l.b16 %v472
        %v681 = vunpack.c.l.b16 %v473
        %v682 = vunpack.c.l.b16 %v474
        %v683 = vunpack.c.l.b16 %v475
        %v684 = vunpack.c.l.b16 %v476
        %v685 = vunpack.c.l.b16 %v477
        %v686 = vunpack.c.l.b16 %v478
        %v687 = vunpack.c.l.b16 %v479
        %v688 = vunpack.c.l.b16 %v480
        %v689 = vunpack.c.l.b16 %v481
        %v690 = vunpack.c.l.b16 %v482
        %v691 = vunpack.c.l.b16 %v483
        %v692 = vunpack.c.l.b16 %v484
        %v693 = vunpack.c.l.b16 %v485
        %v694 = vunpack.c.l.b16 %v486
        %v695 = vunpack.c.l.b16 %v487
        %v696 = vunpack.c.l.b16 %v488
        %v697 = vunpack.c.l.b16 %v489
        %v698 = vunpack.c.l.b16 %v490
        %v699 = vunpack.c.l.b16 %v491
        %v700 = vunpack.c.l.b16 %v492
        %v701 = vunpack.c.l.b16 %v493
        %v702 = vunpack.c.l.b16 %v494
        %v703 = vunpack.c.l.b16 %v495
        %v704 = vunpack.c.l.b16 %v496
        %v705 = vunpack.c.l.b16 %v497
        %v706 = vunpack.c.l.b16 %v498
        %v707 = vunpack.c.l.b16 %v499
        %v708 = vunpack.c.l.b16 %v500
        %v709 = vunpack.c.l.b16 %v501
        %v710 = vunpack.c.l.b16 %v502
        %v711 = vunpack.c.l.b16 %v503
        %v712 = vunpack.c.l.b16 %v504
        %v713 = vunpack.c.l.b16 %v505
        %v714 = vunpack.c.l.b16 %v506
        %v715 = vunpack.c.l.b16 %v507
        %v716 = vunpack.c.l.b16 %v508
        %v717 = vunpack.c.l.b16 %v509
        %v718 = vunpack.c.l.b16 %v510
        %v719 = vunpack.c.l.b16 %v511
        %v720 = vpack.c.b16 %v657, %v656
        %v721 = vpack.c.b16 %v659, %v658
        %v722 = vpack.c.b16 %v661, %v660
        %v723 = vpack.c.b16 %v663, %v662
        %v724 = vpack.c.b16 %v665, %v664
        %v725 = vpack.c.b16 %v667, %v666
        %v726 = vpack.c.b16 %v669, %v668
        %v727 = vpack.c.b16 %v671, %v670
        %v728 = vpack.c.b16 %v673, %v672
        %v729 = vpack.c.b16 %v675, %v674
        %v730 = vpack.c.b16 %v677, %v676
        %v731 = vpack.c.b16 %v679, %v678
        %v732 = vpack.c.b16 %v681, %v680
        %v733 = vpack.c.b16 %v683, %v682
        %v734 = vpack.c.b16 %v685, %v684
        %v735 = vpack.c.b16 %v687, %v686
        %v736 = vpack.c.b16 %v689, %v688
        %v737 = vpack.c.b16 %v691, %v690
        %v738 = vpack.c.b16 %v693, %v692
        %v739 = vpack.c.b16 %v695, %v694
        %v740 = vpack.c.b16 %v697, %v696
        %v741 = vpack.c.b16 %v699, %v698
        %v742 = vpack.c.b16 %v701, %v700
        %v743 = vpack.c.b16 %v703, %v702
        %v744 = vpack.c.b16 %v705, %v704
        %v745 = vpack.c.b16 %v707, %v706
        %v746 = vpack.c.b16 %v709, %v708
        %v747 = vpack.c.b16 %v711, %v710
        %v748 = vpack.c.b16 %v713, %v712
        %v749 = vpack.c.b16 %v715, %v714
        %v750 = vpack.c.b16 %v717, %v716
        %v751 = vpack.c.b16 %v719, %v718
        %v800 = vunpack.c.l.b16 %v576
        %v801 = vunpack.c.l.b16 %v577
        %v802 = vunpack.c.l.b16 %v578
        %v803 = vunpack.c.l.b16 %v579
        %v804 = vunpack.c.l.b16 %v580
        %v805 = vunpack.c.l.b16 %v581
        %v806 = vunpack.c.l.b16 %v582
        %v807 = vunpack.c.l.b16 %v583
        %v808 = vunpack.c.l.b16 %v584
        %v809 = vunpack.c.l.b16 %v585
        %v810 = vunpack.c.l.b16 %v586
        %v811 = vunpack.c.l.b16 %v587
        %v812 = vunpack.c.l.b16 %v588
        %v813 = vunpack.c.l.b16 %v589
        %v814 = vunpack.c.l.b16 %v590
        %v815 = vunpack.c.l.b16 %v591
        %v816 = vpack.c.b16 %v801, %v800
        %v817 = vpack.c.b16 %v803, %v802
        %v818 = vpack.c.b16 %v805, %v804
        %v819 = vpack.c.b16 %v807, %v806
        %v820 = vpack.c.b16 %v809, %v808
        %v821 = vpack.c.b16 %v811, %v810
        %v822 = vpack.c.b16 %v813, %v812
        %v823 = vpack.c.b16 %v815, %v814
        %832 = vmatprep.subr.bf16.mxu0 0
        %833 = vmatpush1.bf16.msra.mxu0 %v823
        %834 = vmatprep.subr.bf16.mxu0 0
        %835 = vmatpush1.bf16.msra.mxu0 %v822
        %836 = vmatprep.subr.bf16.mxu0 0
        %837 = vmatpush1.bf16.msra.mxu0 %v821
        %838 = vmatprep.subr.bf16.mxu0 0
        %839 = vmatpush1.bf16.msra.mxu0 %v820
        %840 = vmatprep.subr.bf16.mxu0 0
        %841 = vmatpush1.bf16.msra.mxu0 %v819
        %842 = vmatprep.subr.bf16.mxu0 0
        %843 = vmatpush1.bf16.msra.mxu0 %v818
        %844 = vmatprep.subr.bf16.mxu0 0
        %845 = vmatpush1.bf16.msra.mxu0 %v817
        %846 = vmatprep.subr.bf16.mxu0 0
        %847 = vmatpush1.bf16.msra.mxu0 %v816
        %848 = vmatprep.subr.bf16.mxu0 0
        %849 = vmatpush2.bf16.msra.mxu0 0
        %850 = vmatprep.subr.bf16.mxu0 0
        %851 = vmatpush2.bf16.msra.mxu0 0
        %852 = vmatprep.subr.bf16.mxu0 0
        %853 = vmatpush2.bf16.msra.mxu0 0
        %854 = vmatprep.subr.bf16.mxu0 0
        %855 = vmatpush2.bf16.msra.mxu0 0
        %856 = vmatprep.subr.bf16.mxu0 0
        %857 = vmatpush2.bf16.msra.mxu0 0
        %858 = vmatprep.subr.bf16.mxu0 0
        %859 = vmatpush2.bf16.msra.mxu0 0
        %860 = vmatprep.subr.bf16.mxu0 0
        %861 = vmatpush2.bf16.msra.mxu0 0
        %862 = vmatprep.subr.bf16.mxu0 0
        %863 = vmatpush2.bf16.msra.mxu0 0
        %864 = vmatprep.mubr.bf16.mxu0 0
        %865 = vmatmul.mubr.bf16.gmra.mxu0 %v720
        %v866 = vpop.f32.mrf.mxu0
        %v867 = vadd.f32 0.0, %v866
        %v868 = vpop.f32.mrf.mxu0
        %v869 = vpop.f32.mrf.mxu0
        %v870 = vadd.f32 0.0, %v869
        %v871 = vpop.f32.mrf.mxu0
        %872 = vmatprep.mubr.bf16.mxu0 0
        %873 = vmatmul.mubr.bf16.gmra.mxu0 %v721
        %v874 = vpop.f32.mrf.mxu0
        %v875 = vadd.f32 0.0, %v874
        %v876 = vpop.f32.mrf.mxu0
        %v877 = vpop.f32.mrf.mxu0
        %v878 = vadd.f32 0.0, %v877
        %v879 = vpop.f32.mrf.mxu0
        %880 = vmatprep.mubr.bf16.mxu0 0
        %881 = vmatmul.mubr.bf16.gmra.mxu0 %v722
        %v882 = vpop.f32.mrf.mxu0
        %v883 = vadd.f32 0.0, %v882
        %v884 = vpop.f32.mrf.mxu0
        %v885 = vpop.f32.mrf.mxu0
        %v886 = vadd.f32 0.0, %v885
        %v887 = vpop.f32.mrf.mxu0
        %888 = vmatprep.mubr.bf16.mxu0 0
        %889 = vmatmul.mubr.bf16.gmra.mxu0 %v723
        %v890 = vpop.f32.mrf.mxu0
        %v891 = vadd.f32 0.0, %v890
        %v892 = vpop.f32.mrf.mxu0
        %v893 = vpop.f32.mrf.mxu0
        %v894 = vadd.f32 0.0, %v893
        %v895 = vpop.f32.mrf.mxu0
        %896 = vmatprep.mubr.bf16.mxu0 0
        %897 = vmatmul.mubr.bf16.gmra.mxu0 %v724
        %v898 = vpop.f32.mrf.mxu0
        %v899 = vadd.f32 0.0, %v898
        %v900 = vpop.f32.mrf.mxu0
        %v901 = vpop.f32.mrf.mxu0
        %v902 = vadd.f32 0.0, %v901
        %v903 = vpop.f32.mrf.mxu0
        %904 = vmatprep.mubr.bf16.mxu0 0
        %905 = vmatmul.mubr.bf16.gmra.mxu0 %v725
        %v906 = vpop.f32.mrf.mxu0
        %v907 = vadd.f32 0.0, %v906
        %v908 = vpop.f32.mrf.mxu0
        %v909 = vpop.f32.mrf.mxu0
        %v910 = vadd.f32 0.0, %v909
        %v911 = vpop.f32.mrf.mxu0
        %912 = vmatprep.mubr.bf16.mxu0 0
        %913 = vmatmul.mubr.bf16.gmra.mxu0 %v726
        %v914 = vpop.f32.mrf.mxu0
        %v915 = vadd.f32 0.0, %v914
        %v916 = vpop.f32.mrf.mxu0
        %v917 = vpop.f32.mrf.mxu0
        %v918 = vadd.f32 0.0, %v917
        %v919 = vpop.f32.mrf.mxu0
        %920 = vmatprep.mubr.bf16.mxu0 0
        %921 = vmatmul.mubr.bf16.gmra.mxu0 %v727
        %v922 = vpop.f32.mrf.mxu0
        %v923 = vadd.f32 0.0, %v922
        %v924 = vpop.f32.mrf.mxu0
        %v925 = vpop.f32.mrf.mxu0
        %v926 = vadd.f32 0.0, %v925
        %v927 = vpop.f32.mrf.mxu0
        %928 = vmatprep.mubr.bf16.mxu0 0
        %929 = vmatmul.mubr.bf16.gmra.mxu0 %v728
        %v930 = vpop.f32.mrf.mxu0
        %v931 = vadd.f32 0.0, %v930
        %v932 = vpop.f32.mrf.mxu0
        %v933 = vpop.f32.mrf.mxu0
        %v934 = vadd.f32 0.0, %v933
        %v935 = vpop.f32.mrf.mxu0
        %936 = vmatprep.mubr.bf16.mxu0 0
        %937 = vmatmul.mubr.bf16.gmra.mxu0 %v729
        %v938 = vpop.f32.mrf.mxu0
        %v939 = vadd.f32 0.0, %v938
        %v940 = vpop.f32.mrf.mxu0
        %v941 = vpop.f32.mrf.mxu0
        %v942 = vadd.f32 0.0, %v941
        %v943 = vpop.f32.mrf.mxu0
        %944 = vmatprep.mubr.bf16.mxu0 0
        %945 = vmatmul.mubr.bf16.gmra.mxu0 %v730
        %v946 = vpop.f32.mrf.mxu0
        %v947 = vadd.f32 0.0, %v946
        %v948 = vpop.f32.mrf.mxu0
        %v949 = vpop.f32.mrf.mxu0
        %v950 = vadd.f32 0.0, %v949
        %v951 = vpop.f32.mrf.mxu0
        %952 = vmatprep.mubr.bf16.mxu0 0
        %953 = vmatmul.mubr.bf16.gmra.mxu0 %v731
        %v954 = vpop.f32.mrf.mxu0
        %v955 = vadd.f32 0.0, %v954
        %v956 = vpop.f32.mrf.mxu0
        %v957 = vpop.f32.mrf.mxu0
        %v958 = vadd.f32 0.0, %v957
        %v959 = vpop.f32.mrf.mxu0
        %960 = vmatprep.mubr.bf16.mxu0 0
        %961 = vmatmul.mubr.bf16.gmra.mxu0 %v732
        %v962 = vpop.f32.mrf.mxu0
        %v963 = vadd.f32 0.0, %v962
        %v964 = vpop.f32.mrf.mxu0
        %v965 = vpop.f32.mrf.mxu0
        %v966 = vadd.f32 0.0, %v965
        %v967 = vpop.f32.mrf.mxu0
        %968 = vmatprep.mubr.bf16.mxu0 0
        %969 = vmatmul.mubr.bf16.gmra.mxu0 %v733
        %v970 = vpop.f32.mrf.mxu0
        %v971 = vadd.f32 0.0, %v970
        %v972 = vpop.f32.mrf.mxu0
        %v973 = vpop.f32.mrf.mxu0
        %v974 = vadd.f32 0.0, %v973
        %v975 = vpop.f32.mrf.mxu0
        %976 = vmatprep.mubr.bf16.mxu0 0
        %977 = vmatmul.mubr.bf16.gmra.mxu0 %v734
        %v978 = vpop.f32.mrf.mxu0
        %v979 = vadd.f32 0.0, %v978
        %v980 = vpop.f32.mrf.mxu0
        %v981 = vpop.f32.mrf.mxu0
        %v982 = vadd.f32 0.0, %v981
        %v983 = vpop.f32.mrf.mxu0
        %984 = vmatprep.mubr.bf16.mxu0 0
        %985 = vmatmul.mubr.bf16.gmra.mxu0 %v735
        %v986 = vpop.f32.mrf.mxu0
        %v987 = vadd.f32 0.0, %v986
        %v988 = vpop.f32.mrf.mxu0
        %v989 = vpop.f32.mrf.mxu0
        %v990 = vadd.f32 0.0, %v989
        %v991 = vpop.f32.mrf.mxu0
        %992 = vmatprep.mubr.bf16.mxu0 0
        %993 = vmatmul.mubr.bf16.gmra.mxu0 %v736
        %v994 = vpop.f32.mrf.mxu0
        %v995 = vadd.f32 0.0, %v994
        %v996 = vpop.f32.mrf.mxu0
        %v997 = vpop.f32.mrf.mxu0
        %v998 = vadd.f32 0.0, %v997
        %v999 = vpop.f32.mrf.mxu0
        %1000 = vmatprep.mubr.bf16.mxu0 0
        %1001 = vmatmul.mubr.bf16.gmra.mxu0 %v737
        %v1002 = vpop.f32.mrf.mxu0
        %v1003 = vadd.f32 0.0, %v1002
        %v1004 = vpop.f32.mrf.mxu0
        %v1005 = vpop.f32.mrf.mxu0
        %v1006 = vadd.f32 0.0, %v1005
        %v1007 = vpop.f32.mrf.mxu0
        %1008 = vmatprep.mubr.bf16.mxu0 0
        %1009 = vmatmul.mubr.bf16.gmra.mxu0 %v738
        %v1010 = vpop.f32.mrf.mxu0
        %v1011 = vadd.f32 0.0, %v1010
        %v1012 = vpop.f32.mrf.mxu0
        %v1013 = vpop.f32.mrf.mxu0
        %v1014 = vadd.f32 0.0, %v1013
        %v1015 = vpop.f32.mrf.mxu0
        %1016 = vmatprep.mubr.bf16.mxu0 0
        %1017 = vmatmul.mubr.bf16.gmra.mxu0 %v739
        %v1018 = vpop.f32.mrf.mxu0
        %v1019 = vadd.f32 0.0, %v1018
        %v1020 = vpop.f32.mrf.mxu0
        %v1021 = vpop.f32.mrf.mxu0
        %v1022 = vadd.f32 0.0, %v1021
        %v1023 = vpop.f32.mrf.mxu0
        %1024 = vmatprep.mubr.bf16.mxu0 0
        %1025 = vmatmul.mubr.bf16.gmra.mxu0 %v740
        %v1026 = vpop.f32.mrf.mxu0
        %v1027 = vadd.f32 0.0, %v1026
        %v1028 = vpop.f32.mrf.mxu0
        %v1029 = vpop.f32.mrf.mxu0
        %v1030 = vadd.f32 0.0, %v1029
        %v1031 = vpop.f32.mrf.mxu0
        %1032 = vmatprep.mubr.bf16.mxu0 0
        %1033 = vmatmul.mubr.bf16.gmra.mxu0 %v741
        %v1034 = vpop.f32.mrf.mxu0
        %v1035 = vadd.f32 0.0, %v1034
        %v1036 = vpop.f32.mrf.mxu0
        %v1037 = vpop.f32.mrf.mxu0
        %v1038 = vadd.f32 0.0, %v1037
        %v1039 = vpop.f32.mrf.mxu0
        %1040 = vmatprep.mubr.bf16.mxu0 0
        %1041 = vmatmul.mubr.bf16.gmra.mxu0 %v742
        %v1042 = vpop.f32.mrf.mxu0
        %v1043 = vadd.f32 0.0, %v1042
        %v1044 = vpop.f32.mrf.mxu0
        %v1045 = vpop.f32.mrf.mxu0
        %v1046 = vadd.f32 0.0, %v1045
        %v1047 = vpop.f32.mrf.mxu0
        %1048 = vmatprep.mubr.bf16.mxu0 0
        %1049 = vmatmul.mubr.bf16.gmra.mxu0 %v743
        %v1050 = vpop.f32.mrf.mxu0
        %v1051 = vadd.f32 0.0, %v1050
        %v1052 = vpop.f32.mrf.mxu0
        %v1053 = vpop.f32.mrf.mxu0
        %v1054 = vadd.f32 0.0, %v1053
        %v1055 = vpop.f32.mrf.mxu0
        %1056 = vmatprep.mubr.bf16.mxu0 0
        %1057 = vmatmul.mubr.bf16.gmra.mxu0 %v744
        %v1058 = vpop.f32.mrf.mxu0
        %v1059 = vadd.f32 0.0, %v1058
        %v1060 = vpop.f32.mrf.mxu0
        %v1061 = vpop.f32.mrf.mxu0
        %v1062 = vadd.f32 0.0, %v1061
        %v1063 = vpop.f32.mrf.mxu0
        %1064 = vmatprep.mubr.bf16.mxu0 0
        %1065 = vmatmul.mubr.bf16.gmra.mxu0 %v745
        %v1066 = vpop.f32.mrf.mxu0
        %v1067 = vadd.f32 0.0, %v1066
        %v1068 = vpop.f32.mrf.mxu0
        %v1069 = vpop.f32.mrf.mxu0
        %v1070 = vadd.f32 0.0, %v1069
        %v1071 = vpop.f32.mrf.mxu0
        %1072 = vmatprep.mubr.bf16.mxu0 0
        %1073 = vmatmul.mubr.bf16.gmra.mxu0 %v746
        %v1074 = vpop.f32.mrf.mxu0
        %v1075 = vadd.f32 0.0, %v1074
        %v1076 = vpop.f32.mrf.mxu0
        %v1077 = vpop.f32.mrf.mxu0
        %v1078 = vadd.f32 0.0, %v1077
        %v1079 = vpop.f32.mrf.mxu0
        %1080 = vmatprep.mubr.bf16.mxu0 0
        %1081 = vmatmul.mubr.bf16.gmra.mxu0 %v747
        %v1082 = vpop.f32.mrf.mxu0
        %v1083 = vadd.f32 0.0, %v1082
        %v1084 = vpop.f32.mrf.mxu0
        %v1085 = vpop.f32.mrf.mxu0
        %v1086 = vadd.f32 0.0, %v1085
        %v1087 = vpop.f32.mrf.mxu0
        %1088 = vmatprep.mubr.bf16.mxu0 0
        %1089 = vmatmul.mubr.bf16.gmra.mxu0 %v748
        %v1090 = vpop.f32.mrf.mxu0
        %v1091 = vadd.f32 0.0, %v1090
        %v1092 = vpop.f32.mrf.mxu0
        %v1093 = vpop.f32.mrf.mxu0
        %v1094 = vadd.f32 0.0, %v1093
        %v1095 = vpop.f32.mrf.mxu0
        %1096 = vmatprep.mubr.bf16.mxu0 0
        %1097 = vmatmul.mubr.bf16.gmra.mxu0 %v749
        %v1098 = vpop.f32.mrf.mxu0
        %v1099 = vadd.f32 0.0, %v1098
        %v1100 = vpop.f32.mrf.mxu0
        %v1101 = vpop.f32.mrf.mxu0
        %v1102 = vadd.f32 0.0, %v1101
        %v1103 = vpop.f32.mrf.mxu0
        %1104 = vmatprep.mubr.bf16.mxu0 0
        %1105 = vmatmul.mubr.bf16.gmra.mxu0 %v750
        %v1106 = vpop.f32.mrf.mxu0
        %v1107 = vadd.f32 0.0, %v1106
        %v1108 = vpop.f32.mrf.mxu0
        %v1109 = vpop.f32.mrf.mxu0
        %v1110 = vadd.f32 0.0, %v1109
        %v1111 = vpop.f32.mrf.mxu0
        %1112 = vmatprep.mubr.bf16.mxu0 0
        %1113 = vmatmul.mubr.bf16.gmra.mxu0 %v751
        %v1114 = vpop.f32.mrf.mxu0
        %v1115 = vadd.f32 0.0, %v1114
        %v1116 = vpop.f32.mrf.mxu0
        %v1117 = vpop.f32.mrf.mxu0
        %v1118 = vadd.f32 0.0, %v1117
        %v1119 = vpop.f32.mrf.mxu0
        %1120 = vdwg.mxu0
        %v1121 = vadd.f32 %v512, %v867
        %v1122 = vadd.f32 %v513, %v870
        %v1123 = vadd.f32 %v514, %v875
        %v1124 = vadd.f32 %v515, %v878
        %v1125 = vadd.f32 %v516, %v883
        %v1126 = vadd.f32 %v517, %v886
        %v1127 = vadd.f32 %v518, %v891
        %v1128 = vadd.f32 %v519, %v894
        %v1129 = vadd.f32 %v520, %v899
        %v1130 = vadd.f32 %v521, %v902
        %v1131 = vadd.f32 %v522, %v907
        %v1132 = vadd.f32 %v523, %v910
        %v1133 = vadd.f32 %v524, %v915
        %v1134 = vadd.f32 %v525, %v918
        %v1135 = vadd.f32 %v526, %v923
        %v1136 = vadd.f32 %v527, %v926
        %v1137 = vadd.f32 %v528, %v931
        %v1138 = vadd.f32 %v529, %v934
        %v1139 = vadd.f32 %v530, %v939
        %v1140 = vadd.f32 %v531, %v942
        %v1141 = vadd.f32 %v532, %v947
        %v1142 = vadd.f32 %v533, %v950
        %v1143 = vadd.f32 %v534, %v955
        %v1144 = vadd.f32 %v535, %v958
        %v1145 = vadd.f32 %v536, %v963
        %v1146 = vadd.f32 %v537, %v966
        %v1147 = vadd.f32 %v538, %v971
        %v1148 = vadd.f32 %v539, %v974
        %v1149 = vadd.f32 %v540, %v979
        %v1150 = vadd.f32 %v541, %v982
        %v1151 = vadd.f32 %v542, %v987
        %v1152 = vadd.f32 %v543, %v990
        %v1153 = vadd.f32 %v544, %v995
        %v1154 = vadd.f32 %v545, %v998
        %v1155 = vadd.f32 %v546, %v1003
        %v1156 = vadd.f32 %v547, %v1006
        %v1157 = vadd.f32 %v548, %v1011
        %v1158 = vadd.f32 %v549, %v1014
        %v1159 = vadd.f32 %v550, %v1019
        %v1160 = vadd.f32 %v551, %v1022
        %v1161 = vadd.f32 %v552, %v1027
        %v1162 = vadd.f32 %v553, %v1030
        %v1163 = vadd.f32 %v554, %v1035
        %v1164 = vadd.f32 %v555, %v1038
        %v1165 = vadd.f32 %v556, %v1043
        %v1166 = vadd.f32 %v557, %v1046
        %v1167 = vadd.f32 %v558, %v1051
        %v1168 = vadd.f32 %v559, %v1054
        %v1169 = vadd.f32 %v560, %v1059
        %v1170 = vadd.f32 %v561, %v1062
        %v1171 = vadd.f32 %v562, %v1067
        %v1172 = vadd.f32 %v563, %v1070
        %v1173 = vadd.f32 %v564, %v1075
        %v1174 = vadd.f32 %v565, %v1078
        %v1175 = vadd.f32 %v566, %v1083
        %v1176 = vadd.f32 %v567, %v1086
        %v1177 = vadd.f32 %v568, %v1091
        %v1178 = vadd.f32 %v569, %v1094
        %v1179 = vadd.f32 %v570, %v1099
        %v1180 = vadd.f32 %v571, %v1102
        %v1181 = vadd.f32 %v572, %v1107
        %v1182 = vadd.f32 %v573, %v1110
        %v1183 = vadd.f32 %v574, %v1115
        %v1184 = vadd.f32 %v575, %v1118
        %1185 = vst [vmem:[#allocation2] sm:$0xff] %v1121
        %1186 = vst [vmem:[#allocation2 + $0x8] sm:$0xff] %v1122
        %1187 = vst [vmem:[#allocation2 + $0x10] sm:$0xff] %v1123
        %1188 = vst [vmem:[#allocation2 + $0x18] sm:$0xff] %v1124
        %1189 = vst [vmem:[#allocation2 + $0x20] sm:$0xff] %v1125
        %1190 = vst [vmem:[#allocation2 + $0x28] sm:$0xff] %v1126
        %1191 = vst [vmem:[#allocation2 + $0x30] sm:$0xff] %v1127
        %1192 = vst [vmem:[#allocation2 + $0x38] sm:$0xff] %v1128
        %1193 = vst [vmem:[#allocation2 + $0x40] sm:$0xff] %v1129
        %1194 = vst [vmem:[#allocation2 + $0x48] sm:$0xff] %v1130
        %1195 = vst [vmem:[#allocation2 + $0x50] sm:$0xff] %v1131
        %1196 = vst [vmem:[#allocation2 + $0x58] sm:$0xff] %v1132
        %1197 = vst [vmem:[#allocation2 + $0x60] sm:$0xff] %v1133
        %1198 = vst [vmem:[#allocation2 + $0x68] sm:$0xff] %v1134
        %1199 = vst [vmem:[#allocation2 + $0x70] sm:$0xff] %v1135
        %1200 = vst [vmem:[#allocation2 + $0x78] sm:$0xff] %v1136
        %1201 = vst [vmem:[#allocation2 + $0x80] sm:$0xff] %v1137
        %1202 = vst [vmem:[#allocation2 + $0x88] sm:$0xff] %v1138
        %1203 = vst [vmem:[#allocation2 + $0x90] sm:$0xff] %v1139
        %1204 = vst [vmem:[#allocation2 + $0x98] sm:$0xff] %v1140
        %1205 = vst [vmem:[#allocation2 + $0xa0] sm:$0xff] %v1141
        %1206 = vst [vmem:[#allocation2 + $0xa8] sm:$0xff] %v1142
        %1207 = vst [vmem:[#allocation2 + $0xb0] sm:$0xff] %v1143
        %1208 = vst [vmem:[#allocation2 + $0xb8] sm:$0xff] %v1144
        %1209 = vst [vmem:[#allocation2 + $0xc0] sm:$0xff] %v1145
        %1210 = vst [vmem:[#allocation2 + $0xc8] sm:$0xff] %v1146
        %1211 = vst [vmem:[#allocation2 + $0xd0] sm:$0xff] %v1147
        %1212 = vst [vmem:[#allocation2 + $0xd8] sm:$0xff] %v1148
        %1213 = vst [vmem:[#allocation2 + $0xe0] sm:$0xff] %v1149
        %1214 = vst [vmem:[#allocation2 + $0xe8] sm:$0xff] %v1150
        %1215 = vst [vmem:[#allocation2 + $0xf0] sm:$0xff] %v1151
        %1216 = vst [vmem:[#allocation2 + $0xf8] sm:$0xff] %v1152
        %1217 = vst [vmem:[#allocation2 + $0x100] sm:$0xff] %v1153
        %1218 = vst [vmem:[#allocation2 + $0x108] sm:$0xff] %v1154
        %1219 = vst [vmem:[#allocation2 + $0x110] sm:$0xff] %v1155
        %1220 = vst [vmem:[#allocation2 + $0x118] sm:$0xff] %v1156
        %1221 = vst [vmem:[#allocation2 + $0x120] sm:$0xff] %v1157
        %1222 = vst [vmem:[#allocation2 + $0x128] sm:$0xff] %v1158
        %1223 = vst [vmem:[#allocation2 + $0x130] sm:$0xff] %v1159
        %1224 = vst [vmem:[#allocation2 + $0x138] sm:$0xff] %v1160
        %1225 = vst [vmem:[#allocation2 + $0x140] sm:$0xff] %v1161
        %1226 = vst [vmem:[#allocation2 + $0x148] sm:$0xff] %v1162
        %1227 = vst [vmem:[#allocation2 + $0x150] sm:$0xff] %v1163
        %1228 = vst [vmem:[#allocation2 + $0x158] sm:$0xff] %v1164
        %1229 = vst [vmem:[#allocation2 + $0x160] sm:$0xff] %v1165
        %1230 = vst [vmem:[#allocation2 + $0x168] sm:$0xff] %v1166
        %1231 = vst [vmem:[#allocation2 + $0x170] sm:$0xff] %v1167
        %1232 = vst [vmem:[#allocation2 + $0x178] sm:$0xff] %v1168
        %1233 = vst [vmem:[#allocation2 + $0x180] sm:$0xff] %v1169
        %1234 = vst [vmem:[#allocation2 + $0x188] sm:$0xff] %v1170
        %1235 = vst [vmem:[#allocation2 + $0x190] sm:$0xff] %v1171
        %1236 = vst [vmem:[#allocation2 + $0x198] sm:$0xff] %v1172
        %1237 = vst [vmem:[#allocation2 + $0x1a0] sm:$0xff] %v1173
        %1238 = vst [vmem:[#allocation2 + $0x1a8] sm:$0xff] %v1174
        %1239 = vst [vmem:[#allocation2 + $0x1b0] sm:$0xff] %v1175
        %1240 = vst [vmem:[#allocation2 + $0x1b8] sm:$0xff] %v1176
        %1241 = vst [vmem:[#allocation2 + $0x1c0] sm:$0xff] %v1177
        %1242 = vst [vmem:[#allocation2 + $0x1c8] sm:$0xff] %v1178
        %1243 = vst [vmem:[#allocation2 + $0x1d0] sm:$0xff] %v1179
        %1244 = vst [vmem:[#allocation2 + $0x1d8] sm:$0xff] %v1180
        %1245 = vst [vmem:[#allocation2 + $0x1e0] sm:$0xff] %v1181
        %1246 = vst [vmem:[#allocation2 + $0x1e8] sm:$0xff] %v1182
        %1247 = vst [vmem:[#allocation2 + $0x1f0] sm:$0xff] %v1183
        %1248 = vst [vmem:[#allocation2 + $0x1f8] sm:$0xff] %v1184
        %p1249 = scmp.eq.s32.totalorder %s32, 1
        // Predicated region
        $region57: #{tpu_custom_call.1} parent=39 // pred_check
          %p1250 = pneg %p1249
        $region58: #{tpu_custom_call.1} parent=39 // pred_check_branch
          %1252 = sbr.rel (%p1250) target = $region60
        $region59: #{tpu_custom_call.1} parent=39 // pred_region
          %v1253 = vld [vmem:[#allocation2] sm:$0xff]
          %v1254 = vld [vmem:[#allocation2 + $0x8] sm:$0xff]
          %v1255 = vld [vmem:[#allocation2 + $0x10] sm:$0xff]
          %v1256 = vld [vmem:[#allocation2 + $0x18] sm:$0xff]
          %v1257 = vld [vmem:[#allocation2 + $0x20] sm:$0xff]
          %v1258 = vld [vmem:[#allocation2 + $0x28] sm:$0xff]
          %v1259 = vld [vmem:[#allocation2 + $0x30] sm:$0xff]
          %v1260 = vld [vmem:[#allocation2 + $0x38] sm:$0xff]
          %v1261 = vld [vmem:[#allocation2 + $0x40] sm:$0xff]
          %v1262 = vld [vmem:[#allocation2 + $0x48] sm:$0xff]
          %v1263 = vld [vmem:[#allocation2 + $0x50] sm:$0xff]
          %v1264 = vld [vmem:[#allocation2 + $0x58] sm:$0xff]
          %v1265 = vld [vmem:[#allocation2 + $0x60] sm:$0xff]
          %v1266 = vld [vmem:[#allocation2 + $0x68] sm:$0xff]
          %v1267 = vld [vmem:[#allocation2 + $0x70] sm:$0xff]
          %v1268 = vld [vmem:[#allocation2 + $0x78] sm:$0xff]
          %v1269 = vld [vmem:[#allocation2 + $0x80] sm:$0xff]
          %v1270 = vld [vmem:[#allocation2 + $0x88] sm:$0xff]
          %v1271 = vld [vmem:[#allocation2 + $0x90] sm:$0xff]
          %v1272 = vld [vmem:[#allocation2 + $0x98] sm:$0xff]
          %v1273 = vld [vmem:[#allocation2 + $0xa0] sm:$0xff]
          %v1274 = vld [vmem:[#allocation2 + $0xa8] sm:$0xff]
          %v1275 = vld [vmem:[#allocation2 + $0xb0] sm:$0xff]
          %v1276 = vld [vmem:[#allocation2 + $0xb8] sm:$0xff]
          %v1277 = vld [vmem:[#allocation2 + $0xc0] sm:$0xff]
          %v1278 = vld [vmem:[#allocation2 + $0xc8] sm:$0xff]
          %v1279 = vld [vmem:[#allocation2 + $0xd0] sm:$0xff]
          %v1280 = vld [vmem:[#allocation2 + $0xd8] sm:$0xff]
          %v1281 = vld [vmem:[#allocation2 + $0xe0] sm:$0xff]
          %v1282 = vld [vmem:[#allocation2 + $0xe8] sm:$0xff]
          %v1283 = vld [vmem:[#allocation2 + $0xf0] sm:$0xff]
          %v1284 = vld [vmem:[#allocation2 + $0xf8] sm:$0xff]
          %v1285 = vld [vmem:[#allocation2 + $0x100] sm:$0xff]
          %v1286 = vld [vmem:[#allocation2 + $0x108] sm:$0xff]
          %v1287 = vld [vmem:[#allocation2 + $0x110] sm:$0xff]
          %v1288 = vld [vmem:[#allocation2 + $0x118] sm:$0xff]
          %v1289 = vld [vmem:[#allocation2 + $0x120] sm:$0xff]
          %v1290 = vld [vmem:[#allocation2 + $0x128] sm:$0xff]
          %v1291 = vld [vmem:[#allocation2 + $0x130] sm:$0xff]
          %v1292 = vld [vmem:[#allocation2 + $0x138] sm:$0xff]
          %v1293 = vld [vmem:[#allocation2 + $0x140] sm:$0xff]
          %v1294 = vld [vmem:[#allocation2 + $0x148] sm:$0xff]
          %v1295 = vld [vmem:[#allocation2 + $0x150] sm:$0xff]
          %v1296 = vld [vmem:[#allocation2 + $0x158] sm:$0xff]
          %v1297 = vld [vmem:[#allocation2 + $0x160] sm:$0xff]
          %v1298 = vld [vmem:[#allocation2 + $0x168] sm:$0xff]
          %v1299 = vld [vmem:[#allocation2 + $0x170] sm:$0xff]
          %v1300 = vld [vmem:[#allocation2 + $0x178] sm:$0xff]
          %v1301 = vld [vmem:[#allocation2 + $0x180] sm:$0xff]
          %v1302 = vld [vmem:[#allocation2 + $0x188] sm:$0xff]
          %v1303 = vld [vmem:[#allocation2 + $0x190] sm:$0xff]
          %v1304 = vld [vmem:[#allocation2 + $0x198] sm:$0xff]
          %v1305 = vld [vmem:[#allocation2 + $0x1a0] sm:$0xff]
          %v1306 = vld [vmem:[#allocation2 + $0x1a8] sm:$0xff]
          %v1307 = vld [vmem:[#allocation2 + $0x1b0] sm:$0xff]
          %v1308 = vld [vmem:[#allocation2 + $0x1b8] sm:$0xff]
          %v1309 = vld [vmem:[#allocation2 + $0x1c0] sm:$0xff]
          %v1310 = vld [vmem:[#allocation2 + $0x1c8] sm:$0xff]
          %v1311 = vld [vmem:[#allocation2 + $0x1d0] sm:$0xff]
          %v1312 = vld [vmem:[#allocation2 + $0x1d8] sm:$0xff]
          %v1313 = vld [vmem:[#allocation2 + $0x1e0] sm:$0xff]
          %v1314 = vld [vmem:[#allocation2 + $0x1e8] sm:$0xff]
          %v1315 = vld [vmem:[#allocation2 + $0x1f0] sm:$0xff]
          %v1316 = vld [vmem:[#allocation2 + $0x1f8] sm:$0xff]
          %v1317 = vld [vmem:[%s374] sm:$0x1]
          %v1319 = vlaneseq
          %v1320 = vshrl.u32 %v1319, 7
          %v1321 = vsub.s32 0, %v1320
          %v1322 = vrot.slane %v1317, %v1321
          %v1324 = vadd.f32 %v1253, %v1322
          %v1325 = vadd.f32 %v1254, %v1322
          %v1326 = vadd.f32 %v1255, %v1322
          %v1327 = vadd.f32 %v1256, %v1322
          %v1328 = vadd.f32 %v1257, %v1322
          %v1329 = vadd.f32 %v1258, %v1322
          %v1330 = vadd.f32 %v1259, %v1322
          %v1331 = vadd.f32 %v1260, %v1322
          %v1332 = vadd.f32 %v1261, %v1322
          %v1333 = vadd.f32 %v1262, %v1322
          %v1334 = vadd.f32 %v1263, %v1322
          %v1335 = vadd.f32 %v1264, %v1322
          %v1336 = vadd.f32 %v1265, %v1322
          %v1337 = vadd.f32 %v1266, %v1322
          %v1338 = vadd.f32 %v1267, %v1322
          %v1339 = vadd.f32 %v1268, %v1322
          %v1340 = vadd.f32 %v1269, %v1322
          %v1341 = vadd.f32 %v1270, %v1322
          %v1342 = vadd.f32 %v1271, %v1322
          %v1343 = vadd.f32 %v1272, %v1322
          %v1344 = vadd.f32 %v1273, %v1322
          %v1345 = vadd.f32 %v1274, %v1322
          %v1346 = vadd.f32 %v1275, %v1322
          %v1347 = vadd.f32 %v1276, %v1322
          %v1348 = vadd.f32 %v1277, %v1322
          %v1349 = vadd.f32 %v1278, %v1322
          %v1350 = vadd.f32 %v1279, %v1322
          %v1351 = vadd.f32 %v1280, %v1322
          %v1352 = vadd.f32 %v1281, %v1322
          %v1353 = vadd.f32 %v1282, %v1322
          %v1354 = vadd.f32 %v1283, %v1322
          %v1355 = vadd.f32 %v1284, %v1322
          %v1356 = vadd.f32 %v1285, %v1322
          %v1357 = vadd.f32 %v1286, %v1322
          %v1358 = vadd.f32 %v1287, %v1322
          %v1359 = vadd.f32 %v1288, %v1322
          %v1360 = vadd.f32 %v1289, %v1322
          %v1361 = vadd.f32 %v1290, %v1322
          %v1362 = vadd.f32 %v1291, %v1322
          %v1363 = vadd.f32 %v1292, %v1322
          %v1364 = vadd.f32 %v1293, %v1322
          %v1365 = vadd.f32 %v1294, %v1322
          %v1366 = vadd.f32 %v1295, %v1322
          %v1367 = vadd.f32 %v1296, %v1322
          %v1368 = vadd.f32 %v1297, %v1322
          %v1369 = vadd.f32 %v1298, %v1322
          %v1370 = vadd.f32 %v1299, %v1322
          %v1371 = vadd.f32 %v1300, %v1322
          %v1372 = vadd.f32 %v1301, %v1322
          %v1373 = vadd.f32 %v1302, %v1322
          %v1374 = vadd.f32 %v1303, %v1322
          %v1375 = vadd.f32 %v1304, %v1322
          %v1376 = vadd.f32 %v1305, %v1322
          %v1377 = vadd.f32 %v1306, %v1322
          %v1378 = vadd.f32 %v1307, %v1322
          %v1379 = vadd.f32 %v1308, %v1322
          %v1380 = vadd.f32 %v1309, %v1322
          %v1381 = vadd.f32 %v1310, %v1322
          %v1382 = vadd.f32 %v1311, %v1322
          %v1383 = vadd.f32 %v1312, %v1322
          %v1384 = vadd.f32 %v1313, %v1322
          %v1385 = vadd.f32 %v1314, %v1322
          %v1386 = vadd.f32 %v1315, %v1322
          %v1387 = vadd.f32 %v1316, %v1322
          %v1388 = vmax.f32 %v1324, 0.0
          %v1389 = vmax.f32 %v1325, 0.0
          %v1390 = vmax.f32 %v1326, 0.0
          %v1391 = vmax.f32 %v1327, 0.0
          %v1392 = vmax.f32 %v1328, 0.0
          %v1393 = vmax.f32 %v1329, 0.0
          %v1394 = vmax.f32 %v1330, 0.0
          %v1395 = vmax.f32 %v1331, 0.0
          %v1396 = vmax.f32 %v1332, 0.0
          %v1397 = vmax.f32 %v1333, 0.0
          %v1398 = vmax.f32 %v1334, 0.0
          %v1399 = vmax.f32 %v1335, 0.0
          %v1400 = vmax.f32 %v1336, 0.0
          %v1401 = vmax.f32 %v1337, 0.0
          %v1402 = vmax.f32 %v1338, 0.0
          %v1403 = vmax.f32 %v1339, 0.0
          %v1404 = vmax.f32 %v1340, 0.0
          %v1405 = vmax.f32 %v1341, 0.0
          %v1406 = vmax.f32 %v1342, 0.0
          %v1407 = vmax.f32 %v1343, 0.0
          %v1408 = vmax.f32 %v1344, 0.0
          %v1409 = vmax.f32 %v1345, 0.0
          %v1410 = vmax.f32 %v1346, 0.0
          %v1411 = vmax.f32 %v1347, 0.0
          %v1412 = vmax.f32 %v1348, 0.0
          %v1413 = vmax.f32 %v1349, 0.0
          %v1414 = vmax.f32 %v1350, 0.0
          %v1415 = vmax.f32 %v1351, 0.0
          %v1416 = vmax.f32 %v1352, 0.0
          %v1417 = vmax.f32 %v1353, 0.0
          %v1418 = vmax.f32 %v1354, 0.0
          %v1419 = vmax.f32 %v1355, 0.0
          %v1420 = vmax.f32 %v1356, 0.0
          %v1421 = vmax.f32 %v1357, 0.0
          %v1422 = vmax.f32 %v1358, 0.0
          %v1423 = vmax.f32 %v1359, 0.0
          %v1424 = vmax.f32 %v1360, 0.0
          %v1425 = vmax.f32 %v1361, 0.0
          %v1426 = vmax.f32 %v1362, 0.0
          %v1427 = vmax.f32 %v1363, 0.0
          %v1428 = vmax.f32 %v1364, 0.0
          %v1429 = vmax.f32 %v1365, 0.0
          %v1430 = vmax.f32 %v1366, 0.0
          %v1431 = vmax.f32 %v1367, 0.0
          %v1432 = vmax.f32 %v1368, 0.0
          %v1433 = vmax.f32 %v1369, 0.0
          %v1434 = vmax.f32 %v1370, 0.0
          %v1435 = vmax.f32 %v1371, 0.0
          %v1436 = vmax.f32 %v1372, 0.0
          %v1437 = vmax.f32 %v1373, 0.0
          %v1438 = vmax.f32 %v1374, 0.0
          %v1439 = vmax.f32 %v1375, 0.0
          %v1440 = vmax.f32 %v1376, 0.0
          %v1441 = vmax.f32 %v1377, 0.0
          %v1442 = vmax.f32 %v1378, 0.0
          %v1443 = vmax.f32 %v1379, 0.0
          %v1444 = vmax.f32 %v1380, 0.0
          %v1445 = vmax.f32 %v1381, 0.0
          %v1446 = vmax.f32 %v1382, 0.0
          %v1447 = vmax.f32 %v1383, 0.0
          %v1448 = vmax.f32 %v1384, 0.0
          %v1449 = vmax.f32 %v1385, 0.0
          %v1450 = vmax.f32 %v1386, 0.0
          %v1451 = vmax.f32 %v1387, 0.0
          %vm1517 = vcmask 1040384
          %v1518 = vrot.slane 0.0, 7
          %v1519 = vsel %vm1517, %v1518, %v1518
          %v1520 = vrot.slane %v1388, 7
          %v1521 = vrot.slane %v1389, 7
          %v1522 = vsel %vm1517, %v1520, %v1521
          %v1523 = vrot.slane %v1390, 7
          %v1524 = vrot.slane %v1391, 7
          %v1525 = vsel %vm1517, %v1523, %v1524
          %v1526 = vrot.slane %v1392, 7
          %v1527 = vrot.slane %v1393, 7
          %v1528 = vsel %vm1517, %v1526, %v1527
          %v1529 = vrot.slane %v1394, 7
          %v1530 = vrot.slane %v1395, 7
          %v1531 = vsel %vm1517, %v1529, %v1530
          %v1532 = vrot.slane %v1396, 7
          %v1533 = vrot.slane %v1397, 7
          %v1534 = vsel %vm1517, %v1532, %v1533
          %v1535 = vrot.slane %v1398, 7
          %v1536 = vrot.slane %v1399, 7
          %v1537 = vsel %vm1517, %v1535, %v1536
          %v1538 = vrot.slane %v1400, 7
          %v1539 = vrot.slane %v1401, 7
          %v1540 = vsel %vm1517, %v1538, %v1539
          %v1541 = vrot.slane %v1402, 7
          %v1542 = vrot.slane %v1403, 7
          %v1543 = vsel %vm1517, %v1541, %v1542
          %v1544 = vrot.slane %v1404, 7
          %v1545 = vrot.slane %v1405, 7
          %v1546 = vsel %vm1517, %v1544, %v1545
          %v1547 = vrot.slane %v1406, 7
          %v1548 = vrot.slane %v1407, 7
          %v1549 = vsel %vm1517, %v1547, %v1548
          %v1550 = vrot.slane %v1408, 7
          %v1551 = vrot.slane %v1409, 7
          %v1552 = vsel %vm1517, %v1550, %v1551
          %v1553 = vrot.slane %v1410, 7
          %v1554 = vrot.slane %v1411, 7
          %v1555 = vsel %vm1517, %v1553, %v1554
          %v1556 = vrot.slane %v1412, 7
          %v1557 = vrot.slane %v1413, 7
          %v1558 = vsel %vm1517, %v1556, %v1557
          %v1559 = vrot.slane %v1414, 7
          %v1560 = vrot.slane %v1415, 7
          %v1561 = vsel %vm1517, %v1559, %v1560
          %v1562 = vrot.slane %v1416, 7
          %v1563 = vrot.slane %v1417, 7
          %v1564 = vsel %vm1517, %v1562, %v1563
          %v1565 = vrot.slane %v1418, 7
          %v1566 = vrot.slane %v1419, 7
          %v1567 = vsel %vm1517, %v1565, %v1566
          %v1568 = vrot.slane %v1420, 7
          %v1569 = vrot.slane %v1421, 7
          %v1570 = vsel %vm1517, %v1568, %v1569
          %v1571 = vrot.slane %v1422, 7
          %v1572 = vrot.slane %v1423, 7
          %v1573 = vsel %vm1517, %v1571, %v1572
          %v1574 = vrot.slane %v1424, 7
          %v1575 = vrot.slane %v1425, 7
          %v1576 = vsel %vm1517, %v1574, %v1575
          %v1577 = vrot.slane %v1426, 7
          %v1578 = vrot.slane %v1427, 7
          %v1579 = vsel %vm1517, %v1577, %v1578
          %v1580 = vrot.slane %v1428, 7
          %v1581 = vrot.slane %v1429, 7
          %v1582 = vsel %vm1517, %v1580, %v1581
          %v1583 = vrot.slane %v1430, 7
          %v1584 = vrot.slane %v1431, 7
          %v1585 = vsel %vm1517, %v1583, %v1584
          %v1586 = vrot.slane %v1432, 7
          %v1587 = vrot.slane %v1433, 7
          %v1588 = vsel %vm1517, %v1586, %v1587
          %v1589 = vrot.slane %v1434, 7
          %v1590 = vrot.slane %v1435, 7
          %v1591 = vsel %vm1517, %v1589, %v1590
          %v1592 = vrot.slane %v1436, 7
          %v1593 = vrot.slane %v1437, 7
          %v1594 = vsel %vm1517, %v1592, %v1593
          %v1595 = vrot.slane %v1438, 7
          %v1596 = vrot.slane %v1439, 7
          %v1597 = vsel %vm1517, %v1595, %v1596
          %v1598 = vrot.slane %v1440, 7
          %v1599 = vrot.slane %v1441, 7
          %v1600 = vsel %vm1517, %v1598, %v1599
          %v1601 = vrot.slane %v1442, 7
          %v1602 = vrot.slane %v1443, 7
          %v1603 = vsel %vm1517, %v1601, %v1602
          %v1604 = vrot.slane %v1444, 7
          %v1605 = vrot.slane %v1445, 7
          %v1606 = vsel %vm1517, %v1604, %v1605
          %v1607 = vrot.slane %v1446, 7
          %v1608 = vrot.slane %v1447, 7
          %v1609 = vsel %vm1517, %v1607, %v1608
          %v1610 = vrot.slane %v1448, 7
          %v1611 = vrot.slane %v1449, 7
          %v1612 = vsel %vm1517, %v1610, %v1611
          %v1613 = vrot.slane %v1450, 7
          %v1614 = vrot.slane %v1451, 7
          %v1615 = vsel %vm1517, %v1613, %v1614
          %v1682 = vsel %vm1517, 0.0, %v1518
          %v1683 = vsel %vm1517, 0.0, %v1520
          %v1684 = vsel %vm1517, 0.0, %v1523
          %v1685 = vsel %vm1517, 0.0, %v1526
          %v1686 = vsel %vm1517, 0.0, %v1529
          %v1687 = vsel %vm1517, 0.0, %v1532
          %v1688 = vsel %vm1517, 0.0, %v1535
          %v1689 = vsel %vm1517, 0.0, %v1538
          %v1690 = vsel %vm1517, 0.0, %v1541
          %v1691 = vsel %vm1517, 0.0, %v1544
          %v1692 = vsel %vm1517, 0.0, %v1547
          %v1693 = vsel %vm1517, 0.0, %v1550
          %v1694 = vsel %vm1517, 0.0, %v1553
          %v1695 = vsel %vm1517, 0.0, %v1556
          %v1696 = vsel %vm1517, 0.0, %v1559
          %v1697 = vsel %vm1517, 0.0, %v1562
          %v1698 = vsel %vm1517, 0.0, %v1565
          %v1699 = vsel %vm1517, 0.0, %v1568
          %v1700 = vsel %vm1517, 0.0, %v1571
          %v1701 = vsel %vm1517, 0.0, %v1574
          %v1702 = vsel %vm1517, 0.0, %v1577
          %v1703 = vsel %vm1517, 0.0, %v1580
          %v1704 = vsel %vm1517, 0.0, %v1583
          %v1705 = vsel %vm1517, 0.0, %v1586
          %v1706 = vsel %vm1517, 0.0, %v1589
          %v1707 = vsel %vm1517, 0.0, %v1592
          %v1708 = vsel %vm1517, 0.0, %v1595
          %v1709 = vsel %vm1517, 0.0, %v1598
          %v1710 = vsel %vm1517, 0.0, %v1601
          %v1711 = vsel %vm1517, 0.0, %v1604
          %v1712 = vsel %vm1517, 0.0, %v1607
          %v1713 = vsel %vm1517, 0.0, %v1610
          %v1714 = vsel %vm1517, 0.0, %v1613
          %vm1715 = vcmask 1046528
          %v1716 = vrot.slane 0.0, 1
          %v1717 = vsel %vm1715, %v1716, %v1716
          %v1718 = vrot.slane %v1388, 1
          %v1719 = vrot.slane %v1389, 1
          %v1720 = vsel %vm1715, %v1718, %v1719
          %v1721 = vrot.slane %v1390, 1
          %v1722 = vrot.slane %v1391, 1
          %v1723 = vsel %vm1715, %v1721, %v1722
          %v1724 = vrot.slane %v1392, 1
          %v1725 = vrot.slane %v1393, 1
          %v1726 = vsel %vm1715, %v1724, %v1725
          %v1727 = vrot.slane %v1394, 1
          %v1728 = vrot.slane %v1395, 1
          %v1729 = vsel %vm1715, %v1727, %v1728
          %v1730 = vrot.slane %v1396, 1
          %v1731 = vrot.slane %v1397, 1
          %v1732 = vsel %vm1715, %v1730, %v1731
          %v1733 = vrot.slane %v1398, 1
          %v1734 = vrot.slane %v1399, 1
          %v1735 = vsel %vm1715, %v1733, %v1734
          %v1736 = vrot.slane %v1400, 1
          %v1737 = vrot.slane %v1401, 1
          %v1738 = vsel %vm1715, %v1736, %v1737
          %v1739 = vrot.slane %v1402, 1
          %v1740 = vrot.slane %v1403, 1
          %v1741 = vsel %vm1715, %v1739, %v1740
          %v1742 = vrot.slane %v1404, 1
          %v1743 = vrot.slane %v1405, 1
          %v1744 = vsel %vm1715, %v1742, %v1743
          %v1745 = vrot.slane %v1406, 1
          %v1746 = vrot.slane %v1407, 1
          %v1747 = vsel %vm1715, %v1745, %v1746
          %v1748 = vrot.slane %v1408, 1
          %v1749 = vrot.slane %v1409, 1
          %v1750 = vsel %vm1715, %v1748, %v1749
          %v1751 = vrot.slane %v1410, 1
          %v1752 = vrot.slane %v1411, 1
          %v1753 = vsel %vm1715, %v1751, %v1752
          %v1754 = vrot.slane %v1412, 1
          %v1755 = vrot.slane %v1413, 1
          %v1756 = vsel %vm1715, %v1754, %v1755
          %v1757 = vrot.slane %v1414, 1
          %v1758 = vrot.slane %v1415, 1
          %v1759 = vsel %vm1715, %v1757, %v1758
          %v1760 = vrot.slane %v1416, 1
          %v1761 = vrot.slane %v1417, 1
          %v1762 = vsel %vm1715, %v1760, %v1761
          %v1763 = vrot.slane %v1418, 1
          %v1764 = vrot.slane %v1419, 1
          %v1765 = vsel %vm1715, %v1763, %v1764
          %v1766 = vrot.slane %v1420, 1
          %v1767 = vrot.slane %v1421, 1
          %v1768 = vsel %vm1715, %v1766, %v1767
          %v1769 = vrot.slane %v1422, 1
          %v1770 = vrot.slane %v1423, 1
          %v1771 = vsel %vm1715, %v1769, %v1770
          %v1772 = vrot.slane %v1424, 1
          %v1773 = vrot.slane %v1425, 1
          %v1774 = vsel %vm1715, %v1772, %v1773
          %v1775 = vrot.slane %v1426, 1
          %v1776 = vrot.slane %v1427, 1
          %v1777 = vsel %vm1715, %v1775, %v1776
          %v1778 = vrot.slane %v1428, 1
          %v1779 = vrot.slane %v1429, 1
          %v1780 = vsel %vm1715, %v1778, %v1779
          %v1781 = vrot.slane %v1430, 1
          %v1782 = vrot.slane %v1431, 1
          %v1783 = vsel %vm1715, %v1781, %v1782
          %v1784 = vrot.slane %v1432, 1
          %v1785 = vrot.slane %v1433, 1
          %v1786 = vsel %vm1715, %v1784, %v1785
          %v1787 = vrot.slane %v1434, 1
          %v1788 = vrot.slane %v1435, 1
          %v1789 = vsel %vm1715, %v1787, %v1788
          %v1790 = vrot.slane %v1436, 1
          %v1791 = vrot.slane %v1437, 1
          %v1792 = vsel %vm1715, %v1790, %v1791
          %v1793 = vrot.slane %v1438, 1
          %v1794 = vrot.slane %v1439, 1
          %v1795 = vsel %vm1715, %v1793, %v1794
          %v1796 = vrot.slane %v1440, 1
          %v1797 = vrot.slane %v1441, 1
          %v1798 = vsel %vm1715, %v1796, %v1797
          %v1799 = vrot.slane %v1442, 1
          %v1800 = vrot.slane %v1443, 1
          %v1801 = vsel %vm1715, %v1799, %v1800
          %v1802 = vrot.slane %v1444, 1
          %v1803 = vrot.slane %v1445, 1
          %v1804 = vsel %vm1715, %v1802, %v1803
          %v1805 = vrot.slane %v1446, 1
          %v1806 = vrot.slane %v1447, 1
          %v1807 = vsel %vm1715, %v1805, %v1806
          %v1808 = vrot.slane %v1448, 1
          %v1809 = vrot.slane %v1449, 1
          %v1810 = vsel %vm1715, %v1808, %v1809
          %v1811 = vrot.slane %v1450, 1
          %v1812 = vrot.slane %v1451, 1
          %v1813 = vsel %vm1715, %v1811, %v1812
          %v1880 = vsel %vm1715, %v1716, 0.0
          %v1881 = vsel %vm1715, %v1719, 0.0
          %v1882 = vsel %vm1715, %v1722, 0.0
          %v1883 = vsel %vm1715, %v1725, 0.0
          %v1884 = vsel %vm1715, %v1728, 0.0
          %v1885 = vsel %vm1715, %v1731, 0.0
          %v1886 = vsel %vm1715, %v1734, 0.0
          %v1887 = vsel %vm1715, %v1737, 0.0
          %v1888 = vsel %vm1715, %v1740, 0.0
          %v1889 = vsel %vm1715, %v1743, 0.0
          %v1890 = vsel %vm1715, %v1746, 0.0
          %v1891 = vsel %vm1715, %v1749, 0.0
          %v1892 = vsel %vm1715, %v1752, 0.0
          %v1893 = vsel %vm1715, %v1755, 0.0
          %v1894 = vsel %vm1715, %v1758, 0.0
          %v1895 = vsel %vm1715, %v1761, 0.0
          %v1896 = vsel %vm1715, %v1764, 0.0
          %v1897 = vsel %vm1715, %v1767, 0.0
          %v1898 = vsel %vm1715, %v1770, 0.0
          %v1899 = vsel %vm1715, %v1773, 0.0
          %v1900 = vsel %vm1715, %v1776, 0.0
          %v1901 = vsel %vm1715, %v1779, 0.0
          %v1902 = vsel %vm1715, %v1782, 0.0
          %v1903 = vsel %vm1715, %v1785, 0.0
          %v1904 = vsel %vm1715, %v1788, 0.0
          %v1905 = vsel %vm1715, %v1791, 0.0
          %v1906 = vsel %vm1715, %v1794, 0.0
          %v1907 = vsel %vm1715, %v1797, 0.0
          %v1908 = vsel %vm1715, %v1800, 0.0
          %v1909 = vsel %vm1715, %v1803, 0.0
          %v1910 = vsel %vm1715, %v1806, 0.0
          %v1911 = vsel %vm1715, %v1809, 0.0
          %v1912 = vsel %vm1715, %v1812, 0.0
          %v1913 = vld [vmem:[%s327] sm:$0xff]
          %v1914 = vld [vmem:[%s327 + $0x8] sm:$0x1]
          %v1915 = vlaneseq
          %v1916 = vshrl.u32 %v1915, 7
          %v1917 = vsub.s32 0, %v1916
          %v1918 = vrot.slane %v1913, %v1917
          %v1919 = vmul.f32 %v1682, %v1918
          %v1920 = vmul.f32 %v1519, %v1918
          %v1921 = vmul.f32 %v1683, %v1918
          %v1922 = vmul.f32 %v1522, %v1918
          %v1923 = vmul.f32 %v1684, %v1918
          %v1924 = vmul.f32 %v1525, %v1918
          %v1925 = vmul.f32 %v1685, %v1918
          %v1926 = vmul.f32 %v1528, %v1918
          %v1927 = vmul.f32 %v1686, %v1918
          %v1928 = vmul.f32 %v1531, %v1918
          %v1929 = vmul.f32 %v1687, %v1918
          %v1930 = vmul.f32 %v1534, %v1918
          %v1931 = vmul.f32 %v1688, %v1918
          %v1932 = vmul.f32 %v1537, %v1918
          %v1933 = vmul.f32 %v1689, %v1918
          %v1934 = vmul.f32 %v1540, %v1918
          %v1935 = vmul.f32 %v1690, %v1918
          %v1936 = vmul.f32 %v1543, %v1918
          %v1937 = vmul.f32 %v1691, %v1918
          %v1938 = vmul.f32 %v1546, %v1918
          %v1939 = vmul.f32 %v1692, %v1918
          %v1940 = vmul.f32 %v1549, %v1918
          %v1941 = vmul.f32 %v1693, %v1918
          %v1942 = vmul.f32 %v1552, %v1918
          %v1943 = vmul.f32 %v1694, %v1918
          %v1944 = vmul.f32 %v1555, %v1918
          %v1945 = vmul.f32 %v1695, %v1918
          %v1946 = vmul.f32 %v1558, %v1918
          %v1947 = vmul.f32 %v1696, %v1918
          %v1948 = vmul.f32 %v1561, %v1918
          %v1949 = vmul.f32 %v1697, %v1918
          %v1950 = vmul.f32 %v1564, %v1918
          %v1951 = vmul.f32 %v1699, %v1918
          %v1952 = vmul.f32 %v1570, %v1918
          %v1953 = vmul.f32 %v1700, %v1918
          %v1954 = vmul.f32 %v1573, %v1918
          %v1955 = vmul.f32 %v1701, %v1918
          %v1956 = vmul.f32 %v1576, %v1918
          %v1957 = vmul.f32 %v1702, %v1918
          %v1958 = vmul.f32 %v1579, %v1918
          %v1959 = vmul.f32 %v1703, %v1918
          %v1960 = vmul.f32 %v1582, %v1918
          %v1961 = vmul.f32 %v1704, %v1918
          %v1962 = vmul.f32 %v1585, %v1918
          %v1963 = vmul.f32 %v1705, %v1918
          %v1964 = vmul.f32 %v1588, %v1918
          %v1965 = vmul.f32 %v1706, %v1918
          %v1966 = vmul.f32 %v1591, %v1918
          %v1967 = vmul.f32 %v1707, %v1918
          %v1968 = vmul.f32 %v1594, %v1918
          %v1969 = vmul.f32 %v1708, %v1918
          %v1970 = vmul.f32 %v1597, %v1918
          %v1971 = vmul.f32 %v1709, %v1918
          %v1972 = vmul.f32 %v1600, %v1918
          %v1973 = vmul.f32 %v1710, %v1918
          %v1974 = vmul.f32 %v1603, %v1918
          %v1975 = vmul.f32 %v1711, %v1918
          %v1976 = vmul.f32 %v1606, %v1918
          %v1977 = vmul.f32 %v1712, %v1918
          %v1978 = vmul.f32 %v1609, %v1918
          %v1979 = vmul.f32 %v1713, %v1918
          %v1980 = vmul.f32 %v1612, %v1918
          %v1981 = vadd.f32 %v1919, 0.0
          %v1982 = vadd.f32 %v1920, 0.0
          %v1983 = vadd.f32 %v1921, 0.0
          %v1984 = vadd.f32 %v1922, 0.0
          %v1985 = vadd.f32 %v1923, 0.0
          %v1986 = vadd.f32 %v1924, 0.0
          %v1987 = vadd.f32 %v1925, 0.0
          %v1988 = vadd.f32 %v1926, 0.0
          %v1989 = vadd.f32 %v1927, 0.0
          %v1990 = vadd.f32 %v1928, 0.0
          %v1991 = vadd.f32 %v1929, 0.0
          %v1992 = vadd.f32 %v1930, 0.0
          %v1993 = vadd.f32 %v1931, 0.0
          %v1994 = vadd.f32 %v1932, 0.0
          %v1995 = vadd.f32 %v1933, 0.0
          %v1996 = vadd.f32 %v1934, 0.0
          %v1997 = vadd.f32 %v1935, 0.0
          %v1998 = vadd.f32 %v1936, 0.0
          %v1999 = vadd.f32 %v1937, 0.0
          %v2000 = vadd.f32 %v1938, 0.0
          %v2001 = vadd.f32 %v1939, 0.0
          %v2002 = vadd.f32 %v1940, 0.0
          %v2003 = vadd.f32 %v1941, 0.0
          %v2004 = vadd.f32 %v1942, 0.0
          %v2005 = vadd.f32 %v1943, 0.0
          %v2006 = vadd.f32 %v1944, 0.0
          %v2007 = vadd.f32 %v1945, 0.0
          %v2008 = vadd.f32 %v1946, 0.0
          %v2009 = vadd.f32 %v1947, 0.0
          %v2010 = vadd.f32 %v1948, 0.0
          %v2011 = vadd.f32 %v1949, 0.0
          %v2012 = vadd.f32 %v1950, 0.0
          %v2013 = vadd.f32 %v1951, 0.0
          %v2014 = vadd.f32 %v1952, 0.0
          %v2015 = vadd.f32 %v1953, 0.0
          %v2016 = vadd.f32 %v1954, 0.0
          %v2017 = vadd.f32 %v1955, 0.0
          %v2018 = vadd.f32 %v1956, 0.0
          %v2019 = vadd.f32 %v1957, 0.0
          %v2020 = vadd.f32 %v1958, 0.0
          %v2021 = vadd.f32 %v1959, 0.0
          %v2022 = vadd.f32 %v1960, 0.0
          %v2023 = vadd.f32 %v1961, 0.0
          %v2024 = vadd.f32 %v1962, 0.0
          %v2025 = vadd.f32 %v1963, 0.0
          %v2026 = vadd.f32 %v1964, 0.0
          %v2027 = vadd.f32 %v1965, 0.0
          %v2028 = vadd.f32 %v1966, 0.0
          %v2029 = vadd.f32 %v1967, 0.0
          %v2030 = vadd.f32 %v1968, 0.0
          %v2031 = vadd.f32 %v1969, 0.0
          %v2032 = vadd.f32 %v1970, 0.0
          %v2033 = vadd.f32 %v1971, 0.0
          %v2034 = vadd.f32 %v1972, 0.0
          %v2035 = vadd.f32 %v1973, 0.0
          %v2036 = vadd.f32 %v1974, 0.0
          %v2037 = vadd.f32 %v1975, 0.0
          %v2038 = vadd.f32 %v1976, 0.0
          %v2039 = vadd.f32 %v1977, 0.0
          %v2040 = vadd.f32 %v1978, 0.0
          %v2041 = vadd.f32 %v1979, 0.0
          %v2042 = vadd.f32 %v1980, 0.0
          %v2043 = vlaneseq
          %v2044 = vshrl.u32 %v2043, 7
          %v2045 = vsub.s32 1, %v2044
          %v2046 = vrot.slane %v1913, %v2045
          %v2047 = vmul.f32 %v2046, 0.0
          %v2048 = vmul.f32 %v1388, %v2046
          %v2049 = vmul.f32 %v1389, %v2046
          %v2050 = vmul.f32 %v1390, %v2046
          %v2051 = vmul.f32 %v1391, %v2046
          %v2052 = vmul.f32 %v1392, %v2046
          %v2053 = vmul.f32 %v1393, %v2046
          %v2054 = vmul.f32 %v1394, %v2046
          %v2055 = vmul.f32 %v1395, %v2046
          %v2056 = vmul.f32 %v1396, %v2046
          %v2057 = vmul.f32 %v1397, %v2046
          %v2058 = vmul.f32 %v1398, %v2046
          %v2059 = vmul.f32 %v1399, %v2046
          %v2060 = vmul.f32 %v1400, %v2046
          %v2061 = vmul.f32 %v1401, %v2046
          %v2062 = vmul.f32 %v1402, %v2046
          %v2063 = vmul.f32 %v1403, %v2046
          %v2064 = vmul.f32 %v1404, %v2046
          %v2065 = vmul.f32 %v1405, %v2046
          %v2066 = vmul.f32 %v1406, %v2046
          %v2067 = vmul.f32 %v1407, %v2046
          %v2068 = vmul.f32 %v1408, %v2046
          %v2069 = vmul.f32 %v1409, %v2046
          %v2070 = vmul.f32 %v1410, %v2046
          %v2071 = vmul.f32 %v1411, %v2046
          %v2072 = vmul.f32 %v1412, %v2046
          %v2073 = vmul.f32 %v1413, %v2046
          %v2074 = vmul.f32 %v1414, %v2046
          %v2075 = vmul.f32 %v1415, %v2046
          %v2076 = vmul.f32 %v1416, %v2046
          %v2077 = vmul.f32 %v1417, %v2046
          %v2078 = vmul.f32 %v1420, %v2046
          %v2079 = vmul.f32 %v1421, %v2046
          %v2080 = vmul.f32 %v1422, %v2046
          %v2081 = vmul.f32 %v1423, %v2046
          %v2082 = vmul.f32 %v1424, %v2046
          %v2083 = vmul.f32 %v1425, %v2046
          %v2084 = vmul.f32 %v1426, %v2046
          %v2085 = vmul.f32 %v1427, %v2046
          %v2086 = vmul.f32 %v1428, %v2046
          %v2087 = vmul.f32 %v1429, %v2046
          %v2088 = vmul.f32 %v1430, %v2046
          %v2089 = vmul.f32 %v1431, %v2046
          %v2090 = vmul.f32 %v1432, %v2046
          %v2091 = vmul.f32 %v1433, %v2046
          %v2092 = vmul.f32 %v1434, %v2046
          %v2093 = vmul.f32 %v1435, %v2046
          %v2094 = vmul.f32 %v1436, %v2046
          %v2095 = vmul.f32 %v1437, %v2046
          %v2096 = vmul.f32 %v1438, %v2046
          %v2097 = vmul.f32 %v1439, %v2046
          %v2098 = vmul.f32 %v1440, %v2046
          %v2099 = vmul.f32 %v1441, %v2046
          %v2100 = vmul.f32 %v1442, %v2046
          %v2101 = vmul.f32 %v1443, %v2046
          %v2102 = vmul.f32 %v1444, %v2046
          %v2103 = vmul.f32 %v1445, %v2046
          %v2104 = vmul.f32 %v1446, %v2046
          %v2105 = vmul.f32 %v1447, %v2046
          %v2106 = vmul.f32 %v1448, %v2046
          %v2107 = vmul.f32 %v1449, %v2046
          %v2108 = vadd.f32 %v1981, %v2047
          %v2109 = vadd.f32 %v1982, %v2047
          %v2110 = vadd.f32 %v1983, %v2048
          %v2111 = vadd.f32 %v1984, %v2049
          %v2112 = vadd.f32 %v1985, %v2050
          %v2113 = vadd.f32 %v1986, %v2051
          %v2114 = vadd.f32 %v1987, %v2052
          %v2115 = vadd.f32 %v1988, %v2053
          %v2116 = vadd.f32 %v1989, %v2054
          %v2117 = vadd.f32 %v1990, %v2055
          %v2118 = vadd.f32 %v1991, %v2056
          %v2119 = vadd.f32 %v1992, %v2057
          %v2120 = vadd.f32 %v1993, %v2058
          %v2121 = vadd.f32 %v1994, %v2059
          %v2122 = vadd.f32 %v1995, %v2060
          %v2123 = vadd.f32 %v1996, %v2061
          %v2124 = vadd.f32 %v1997, %v2062
          %v2125 = vadd.f32 %v1998, %v2063
          %v2126 = vadd.f32 %v1999, %v2064
          %v2127 = vadd.f32 %v2000, %v2065
          %v2128 = vadd.f32 %v2001, %v2066
          %v2129 = vadd.f32 %v2002, %v2067
          %v2130 = vadd.f32 %v2003, %v2068
          %v2131 = vadd.f32 %v2004, %v2069
          %v2132 = vadd.f32 %v2005, %v2070
          %v2133 = vadd.f32 %v2006, %v2071
          %v2134 = vadd.f32 %v2007, %v2072
          %v2135 = vadd.f32 %v2008, %v2073
          %v2136 = vadd.f32 %v2009, %v2074
          %v2137 = vadd.f32 %v2010, %v2075
          %v2138 = vadd.f32 %v2011, %v2076
          %v2139 = vadd.f32 %v2012, %v2077
          %v2140 = vadd.f32 %v2013, %v2078
          %v2141 = vadd.f32 %v2014, %v2079
          %v2142 = vadd.f32 %v2015, %v2080
          %v2143 = vadd.f32 %v2016, %v2081
          %v2144 = vadd.f32 %v2017, %v2082
          %v2145 = vadd.f32 %v2018, %v2083
          %v2146 = vadd.f32 %v2019, %v2084
          %v2147 = vadd.f32 %v2020, %v2085
          %v2148 = vadd.f32 %v2021, %v2086
          %v2149 = vadd.f32 %v2022, %v2087
          %v2150 = vadd.f32 %v2023, %v2088
          %v2151 = vadd.f32 %v2024, %v2089
          %v2152 = vadd.f32 %v2025, %v2090
          %v2153 = vadd.f32 %v2026, %v2091
          %v2154 = vadd.f32 %v2027, %v2092
          %v2155 = vadd.f32 %v2028, %v2093
          %v2156 = vadd.f32 %v2029, %v2094
          %v2157 = vadd.f32 %v2030, %v2095
          %v2158 = vadd.f32 %v2031, %v2096
          %v2159 = vadd.f32 %v2032, %v2097
          %v2160 = vadd.f32 %v2033, %v2098
          %v2161 = vadd.f32 %v2034, %v2099
          %v2162 = vadd.f32 %v2035, %v2100
          %v2163 = vadd.f32 %v2036, %v2101
          %v2164 = vadd.f32 %v2037, %v2102
          %v2165 = vadd.f32 %v2038, %v2103
          %v2166 = vadd.f32 %v2039, %v2104
          %v2167 = vadd.f32 %v2040, %v2105
          %v2168 = vadd.f32 %v2041, %v2106
          %v2169 = vadd.f32 %v2042, %v2107
          %v2170 = vlaneseq
          %v2171 = vshrl.u32 %v2170, 7
          %v2172 = vsub.s32 2, %v2171
          %v2173 = vrot.slane %v1913, %v2172
          %v2174 = vmul.f32 %v1717, %v2173
          %v2175 = vmul.f32 %v1880, %v2173
          %v2176 = vmul.f32 %v1720, %v2173
          %v2177 = vmul.f32 %v1881, %v2173
          %v2178 = vmul.f32 %v1723, %v2173
          %v2179 = vmul.f32 %v1882, %v2173
          %v2180 = vmul.f32 %v1726, %v2173
          %v2181 = vmul.f32 %v1883, %v2173
          %v2182 = vmul.f32 %v1729, %v2173
          %v2183 = vmul.f32 %v1884, %v2173
          %v2184 = vmul.f32 %v1732, %v2173
          %v2185 = vmul.f32 %v1885, %v2173
          %v2186 = vmul.f32 %v1735, %v2173
          %v2187 = vmul.f32 %v1886, %v2173
          %v2188 = vmul.f32 %v1738, %v2173
          %v2189 = vmul.f32 %v1887, %v2173
          %v2190 = vmul.f32 %v1741, %v2173
          %v2191 = vmul.f32 %v1888, %v2173
          %v2192 = vmul.f32 %v1744, %v2173
          %v2193 = vmul.f32 %v1889, %v2173
          %v2194 = vmul.f32 %v1747, %v2173
          %v2195 = vmul.f32 %v1890, %v2173
          %v2196 = vmul.f32 %v1750, %v2173
          %v2197 = vmul.f32 %v1891, %v2173
          %v2198 = vmul.f32 %v1753, %v2173
          %v2199 = vmul.f32 %v1892, %v2173
          %v2200 = vmul.f32 %v1756, %v2173
          %v2201 = vmul.f32 %v1893, %v2173
          %v2202 = vmul.f32 %v1759, %v2173
          %v2203 = vmul.f32 %v1894, %v2173
          %v2204 = vmul.f32 %v1762, %v2173
          %v2205 = vmul.f32 %v1895, %v2173
          %v2206 = vmul.f32 %v1768, %v2173
          %v2207 = vmul.f32 %v1897, %v2173
          %v2208 = vmul.f32 %v1771, %v2173
          %v2209 = vmul.f32 %v1898, %v2173
          %v2210 = vmul.f32 %v1774, %v2173
          %v2211 = vmul.f32 %v1899, %v2173
          %v2212 = vmul.f32 %v1777, %v2173
          %v2213 = vmul.f32 %v1900, %v2173
          %v2214 = vmul.f32 %v1780, %v2173
          %v2215 = vmul.f32 %v1901, %v2173
          %v2216 = vmul.f32 %v1783, %v2173
          %v2217 = vmul.f32 %v1902, %v2173
          %v2218 = vmul.f32 %v1786, %v2173
          %v2219 = vmul.f32 %v1903, %v2173
          %v2220 = vmul.f32 %v1789, %v2173
          %v2221 = vmul.f32 %v1904, %v2173
          %v2222 = vmul.f32 %v1792, %v2173
          %v2223 = vmul.f32 %v1905, %v2173
          %v2224 = vmul.f32 %v1795, %v2173
          %v2225 = vmul.f32 %v1906, %v2173
          %v2226 = vmul.f32 %v1798, %v2173
          %v2227 = vmul.f32 %v1907, %v2173
          %v2228 = vmul.f32 %v1801, %v2173
          %v2229 = vmul.f32 %v1908, %v2173
          %v2230 = vmul.f32 %v1804, %v2173
          %v2231 = vmul.f32 %v1909, %v2173
          %v2232 = vmul.f32 %v1807, %v2173
          %v2233 = vmul.f32 %v1910, %v2173
          %v2234 = vmul.f32 %v1810, %v2173
          %v2235 = vmul.f32 %v1911, %v2173
          %v2236 = vadd.f32 %v2108, %v2174
          %v2237 = vadd.f32 %v2109, %v2175
          %v2238 = vadd.f32 %v2110, %v2176
          %v2239 = vadd.f32 %v2111, %v2177
          %v2240 = vadd.f32 %v2112, %v2178
          %v2241 = vadd.f32 %v2113, %v2179
          %v2242 = vadd.f32 %v2114, %v2180
          %v2243 = vadd.f32 %v2115, %v2181
          %v2244 = vadd.f32 %v2116, %v2182
          %v2245 = vadd.f32 %v2117, %v2183
          %v2246 = vadd.f32 %v2118, %v2184
          %v2247 = vadd.f32 %v2119, %v2185
          %v2248 = vadd.f32 %v2120, %v2186
          %v2249 = vadd.f32 %v2121, %v2187
          %v2250 = vadd.f32 %v2122, %v2188
          %v2251 = vadd.f32 %v2123, %v2189
          %v2252 = vadd.f32 %v2124, %v2190
          %v2253 = vadd.f32 %v2125, %v2191
          %v2254 = vadd.f32 %v2126, %v2192
          %v2255 = vadd.f32 %v2127, %v2193
          %v2256 = vadd.f32 %v2128, %v2194
          %v2257 = vadd.f32 %v2129, %v2195
          %v2258 = vadd.f32 %v2130, %v2196
          %v2259 = vadd.f32 %v2131, %v2197
          %v2260 = vadd.f32 %v2132, %v2198
          %v2261 = vadd.f32 %v2133, %v2199
          %v2262 = vadd.f32 %v2134, %v2200
          %v2263 = vadd.f32 %v2135, %v2201
          %v2264 = vadd.f32 %v2136, %v2202
          %v2265 = vadd.f32 %v2137, %v2203
          %v2266 = vadd.f32 %v2138, %v2204
          %v2267 = vadd.f32 %v2139, %v2205
          %v2268 = vadd.f32 %v2140, %v2206
          %v2269 = vadd.f32 %v2141, %v2207
          %v2270 = vadd.f32 %v2142, %v2208
          %v2271 = vadd.f32 %v2143, %v2209
          %v2272 = vadd.f32 %v2144, %v2210
          %v2273 = vadd.f32 %v2145, %v2211
          %v2274 = vadd.f32 %v2146, %v2212
          %v2275 = vadd.f32 %v2147, %v2213
          %v2276 = vadd.f32 %v2148, %v2214
          %v2277 = vadd.f32 %v2149, %v2215
          %v2278 = vadd.f32 %v2150, %v2216
          %v2279 = vadd.f32 %v2151, %v2217
          %v2280 = vadd.f32 %v2152, %v2218
          %v2281 = vadd.f32 %v2153, %v2219
          %v2282 = vadd.f32 %v2154, %v2220
          %v2283 = vadd.f32 %v2155, %v2221
          %v2284 = vadd.f32 %v2156, %v2222
          %v2285 = vadd.f32 %v2157, %v2223
          %v2286 = vadd.f32 %v2158, %v2224
          %v2287 = vadd.f32 %v2159, %v2225
          %v2288 = vadd.f32 %v2160, %v2226
          %v2289 = vadd.f32 %v2161, %v2227
          %v2290 = vadd.f32 %v2162, %v2228
          %v2291 = vadd.f32 %v2163, %v2229
          %v2292 = vadd.f32 %v2164, %v2230
          %v2293 = vadd.f32 %v2165, %v2231
          %v2294 = vadd.f32 %v2166, %v2232
          %v2295 = vadd.f32 %v2167, %v2233
          %v2296 = vadd.f32 %v2168, %v2234
          %v2297 = vadd.f32 %v2169, %v2235
          %v2298 = vlaneseq
          %v2299 = vshrl.u32 %v2298, 7
          %v2300 = vsub.s32 3, %v2299
          %v2301 = vrot.slane %v1913, %v2300
          %v2302 = vmul.f32 %v1683, %v2301
          %v2303 = vmul.f32 %v1522, %v2301
          %v2304 = vmul.f32 %v1684, %v2301
          %v2305 = vmul.f32 %v1525, %v2301
          %v2306 = vmul.f32 %v1685, %v2301
          %v2307 = vmul.f32 %v1528, %v2301
          %v2308 = vmul.f32 %v1686, %v2301
          %v2309 = vmul.f32 %v1531, %v2301
          %v2310 = vmul.f32 %v1687, %v2301
          %v2311 = vmul.f32 %v1534, %v2301
          %v2312 = vmul.f32 %v1688, %v2301
          %v2313 = vmul.f32 %v1537, %v2301
          %v2314 = vmul.f32 %v1689, %v2301
          %v2315 = vmul.f32 %v1540, %v2301
          %v2316 = vmul.f32 %v1690, %v2301
          %v2317 = vmul.f32 %v1543, %v2301
          %v2318 = vmul.f32 %v1691, %v2301
          %v2319 = vmul.f32 %v1546, %v2301
          %v2320 = vmul.f32 %v1692, %v2301
          %v2321 = vmul.f32 %v1549, %v2301
          %v2322 = vmul.f32 %v1693, %v2301
          %v2323 = vmul.f32 %v1552, %v2301
          %v2324 = vmul.f32 %v1694, %v2301
          %v2325 = vmul.f32 %v1555, %v2301
          %v2326 = vmul.f32 %v1695, %v2301
          %v2327 = vmul.f32 %v1558, %v2301
          %v2328 = vmul.f32 %v1696, %v2301
          %v2329 = vmul.f32 %v1561, %v2301
          %v2330 = vmul.f32 %v1697, %v2301
          %v2331 = vmul.f32 %v1564, %v2301
          %v2332 = vmul.f32 %v1698, %v2301
          %v2333 = vmul.f32 %v1567, %v2301
          %v2334 = vmul.f32 %v1699, %v2301
          %v2335 = vmul.f32 %v1570, %v2301
          %v2336 = vmul.f32 %v1700, %v2301
          %v2337 = vmul.f32 %v1573, %v2301
          %v2338 = vmul.f32 %v1701, %v2301
          %v2339 = vmul.f32 %v1576, %v2301
          %v2340 = vmul.f32 %v1702, %v2301
          %v2341 = vmul.f32 %v1579, %v2301
          %v2342 = vmul.f32 %v1703, %v2301
          %v2343 = vmul.f32 %v1582, %v2301
          %v2344 = vmul.f32 %v1704, %v2301
          %v2345 = vmul.f32 %v1585, %v2301
          %v2346 = vmul.f32 %v1705, %v2301
          %v2347 = vmul.f32 %v1588, %v2301
          %v2348 = vmul.f32 %v1706, %v2301
          %v2349 = vmul.f32 %v1591, %v2301
          %v2350 = vmul.f32 %v1707, %v2301
          %v2351 = vmul.f32 %v1594, %v2301
          %v2352 = vmul.f32 %v1708, %v2301
          %v2353 = vmul.f32 %v1597, %v2301
          %v2354 = vmul.f32 %v1709, %v2301
          %v2355 = vmul.f32 %v1600, %v2301
          %v2356 = vmul.f32 %v1710, %v2301
          %v2357 = vmul.f32 %v1603, %v2301
          %v2358 = vmul.f32 %v1711, %v2301
          %v2359 = vmul.f32 %v1606, %v2301
          %v2360 = vmul.f32 %v1712, %v2301
          %v2361 = vmul.f32 %v1609, %v2301
          %v2362 = vmul.f32 %v1713, %v2301
          %v2363 = vmul.f32 %v1612, %v2301
          %v2364 = vmul.f32 %v1714, %v2301
          %v2365 = vmul.f32 %v1615, %v2301
          %v2366 = vadd.f32 %v2236, %v2302
          %v2367 = vadd.f32 %v2237, %v2303
          %v2368 = vadd.f32 %v2238, %v2304
          %v2369 = vadd.f32 %v2239, %v2305
          %v2370 = vadd.f32 %v2240, %v2306
          %v2371 = vadd.f32 %v2241, %v2307
          %v2372 = vadd.f32 %v2242, %v2308
          %v2373 = vadd.f32 %v2243, %v2309
          %v2374 = vadd.f32 %v2244, %v2310
          %v2375 = vadd.f32 %v2245, %v2311
          %v2376 = vadd.f32 %v2246, %v2312
          %v2377 = vadd.f32 %v2247, %v2313
          %v2378 = vadd.f32 %v2248, %v2314
          %v2379 = vadd.f32 %v2249, %v2315
          %v2380 = vadd.f32 %v2250, %v2316
          %v2381 = vadd.f32 %v2251, %v2317
          %v2382 = vadd.f32 %v2252, %v2318
          %v2383 = vadd.f32 %v2253, %v2319
          %v2384 = vadd.f32 %v2254, %v2320
          %v2385 = vadd.f32 %v2255, %v2321
          %v2386 = vadd.f32 %v2256, %v2322
          %v2387 = vadd.f32 %v2257, %v2323
          %v2388 = vadd.f32 %v2258, %v2324
          %v2389 = vadd.f32 %v2259, %v2325
          %v2390 = vadd.f32 %v2260, %v2326
          %v2391 = vadd.f32 %v2261, %v2327
          %v2392 = vadd.f32 %v2262, %v2328
          %v2393 = vadd.f32 %v2263, %v2329
          %v2394 = vadd.f32 %v2264, %v2330
          %v2395 = vadd.f32 %v2265, %v2331
          %v2396 = vadd.f32 %v2266, %v2332
          %v2397 = vadd.f32 %v2267, %v2333
          %v2398 = vadd.f32 %v2236, %v2334
          %v2399 = vadd.f32 %v2237, %v2335
          %v2400 = vadd.f32 %v2268, %v2336
          %v2401 = vadd.f32 %v2269, %v2337
          %v2402 = vadd.f32 %v2270, %v2338
          %v2403 = vadd.f32 %v2271, %v2339
          %v2404 = vadd.f32 %v2272, %v2340
          %v2405 = vadd.f32 %v2273, %v2341
          %v2406 = vadd.f32 %v2274, %v2342
          %v2407 = vadd.f32 %v2275, %v2343
          %v2408 = vadd.f32 %v2276, %v2344
          %v2409 = vadd.f32 %v2277, %v2345
          %v2410 = vadd.f32 %v2278, %v2346
          %v2411 = vadd.f32 %v2279, %v2347
          %v2412 = vadd.f32 %v2280, %v2348
          %v2413 = vadd.f32 %v2281, %v2349
          %v2414 = vadd.f32 %v2282, %v2350
          %v2415 = vadd.f32 %v2283, %v2351
          %v2416 = vadd.f32 %v2284, %v2352
          %v2417 = vadd.f32 %v2285, %v2353
          %v2418 = vadd.f32 %v2286, %v2354
          %v2419 = vadd.f32 %v2287, %v2355
          %v2420 = vadd.f32 %v2288, %v2356
          %v2421 = vadd.f32 %v2289, %v2357
          %v2422 = vadd.f32 %v2290, %v2358
          %v2423 = vadd.f32 %v2291, %v2359
          %v2424 = vadd.f32 %v2292, %v2360
          %v2425 = vadd.f32 %v2293, %v2361
          %v2426 = vadd.f32 %v2294, %v2362
          %v2427 = vadd.f32 %v2295, %v2363
          %v2428 = vadd.f32 %v2296, %v2364
          %v2429 = vadd.f32 %v2297, %v2365
          %v2430 = vlaneseq
          %v2431 = vshrl.u32 %v2430, 7
          %v2432 = vsub.s32 4, %v2431
          %v2433 = vrot.slane %v1913, %v2432
          %v2434 = vmul.f32 %v1388, %v2433
          %v2435 = vmul.f32 %v1389, %v2433
          %v2436 = vmul.f32 %v1390, %v2433
          %v2437 = vmul.f32 %v1391, %v2433
          %v2438 = vmul.f32 %v1392, %v2433
          %v2439 = vmul.f32 %v1393, %v2433
          %v2440 = vmul.f32 %v1394, %v2433
          %v2441 = vmul.f32 %v1395, %v2433
          %v2442 = vmul.f32 %v1396, %v2433
          %v2443 = vmul.f32 %v1397, %v2433
          %v2444 = vmul.f32 %v1398, %v2433
          %v2445 = vmul.f32 %v1399, %v2433
          %v2446 = vmul.f32 %v1400, %v2433
          %v2447 = vmul.f32 %v1401, %v2433
          %v2448 = vmul.f32 %v1402, %v2433
          %v2449 = vmul.f32 %v1403, %v2433
          %v2450 = vmul.f32 %v1404, %v2433
          %v2451 = vmul.f32 %v1405, %v2433
          %v2452 = vmul.f32 %v1406, %v2433
          %v2453 = vmul.f32 %v1407, %v2433
          %v2454 = vmul.f32 %v1408, %v2433
          %v2455 = vmul.f32 %v1409, %v2433
          %v2456 = vmul.f32 %v1410, %v2433
          %v2457 = vmul.f32 %v1411, %v2433
          %v2458 = vmul.f32 %v1412, %v2433
          %v2459 = vmul.f32 %v1413, %v2433
          %v2460 = vmul.f32 %v1414, %v2433
          %v2461 = vmul.f32 %v1415, %v2433
          %v2462 = vmul.f32 %v1416, %v2433
          %v2463 = vmul.f32 %v1417, %v2433
          %v2464 = vmul.f32 %v1418, %v2433
          %v2465 = vmul.f32 %v1419, %v2433
          %v2466 = vmul.f32 %v1420, %v2433
          %v2467 = vmul.f32 %v1421, %v2433
          %v2468 = vmul.f32 %v1422, %v2433
          %v2469 = vmul.f32 %v1423, %v2433
          %v2470 = vmul.f32 %v1424, %v2433
          %v2471 = vmul.f32 %v1425, %v2433
          %v2472 = vmul.f32 %v1426, %v2433
          %v2473 = vmul.f32 %v1427, %v2433
          %v2474 = vmul.f32 %v1428, %v2433
          %v2475 = vmul.f32 %v1429, %v2433
          %v2476 = vmul.f32 %v1430, %v2433
          %v2477 = vmul.f32 %v1431, %v2433
          %v2478 = vmul.f32 %v1432, %v2433
          %v2479 = vmul.f32 %v1433, %v2433
          %v2480 = vmul.f32 %v1434, %v2433
          %v2481 = vmul.f32 %v1435, %v2433
          %v2482 = vmul.f32 %v1436, %v2433
          %v2483 = vmul.f32 %v1437, %v2433
          %v2484 = vmul.f32 %v1438, %v2433
          %v2485 = vmul.f32 %v1439, %v2433
          %v2486 = vmul.f32 %v1440, %v2433
          %v2487 = vmul.f32 %v1441, %v2433
          %v2488 = vmul.f32 %v1442, %v2433
          %v2489 = vmul.f32 %v1443, %v2433
          %v2490 = vmul.f32 %v1444, %v2433
          %v2491 = vmul.f32 %v1445, %v2433
          %v2492 = vmul.f32 %v1446, %v2433
          %v2493 = vmul.f32 %v1447, %v2433
          %v2494 = vmul.f32 %v1448, %v2433
          %v2495 = vmul.f32 %v1449, %v2433
          %v2496 = vmul.f32 %v1450, %v2433
          %v2497 = vmul.f32 %v1451, %v2433
          %v2498 = vadd.f32 %v2366, %v2434
          %v2499 = vadd.f32 %v2367, %v2435
          %v2500 = vadd.f32 %v2368, %v2436
          %v2501 = vadd.f32 %v2369, %v2437
          %v2502 = vadd.f32 %v2370, %v2438
          %v2503 = vadd.f32 %v2371, %v2439
          %v2504 = vadd.f32 %v2372, %v2440
          %v2505 = vadd.f32 %v2373, %v2441
          %v2506 = vadd.f32 %v2374, %v2442
          %v2507 = vadd.f32 %v2375, %v2443
          %v2508 = vadd.f32 %v2376, %v2444
          %v2509 = vadd.f32 %v2377, %v2445
          %v2510 = vadd.f32 %v2378, %v2446
          %v2511 = vadd.f32 %v2379, %v2447
          %v2512 = vadd.f32 %v2380, %v2448
          %v2513 = vadd.f32 %v2381, %v2449
          %v2514 = vadd.f32 %v2382, %v2450
          %v2515 = vadd.f32 %v2383, %v2451
          %v2516 = vadd.f32 %v2384, %v2452
          %v2517 = vadd.f32 %v2385, %v2453
          %v2518 = vadd.f32 %v2386, %v2454
          %v2519 = vadd.f32 %v2387, %v2455
          %v2520 = vadd.f32 %v2388, %v2456
          %v2521 = vadd.f32 %v2389, %v2457
          %v2522 = vadd.f32 %v2390, %v2458
          %v2523 = vadd.f32 %v2391, %v2459
          %v2524 = vadd.f32 %v2392, %v2460
          %v2525 = vadd.f32 %v2393, %v2461
          %v2526 = vadd.f32 %v2394, %v2462
          %v2527 = vadd.f32 %v2395, %v2463
          %v2528 = vadd.f32 %v2396, %v2464
          %v2529 = vadd.f32 %v2397, %v2465
          %v2530 = vadd.f32 %v2398, %v2466
          %v2531 = vadd.f32 %v2399, %v2467
          %v2532 = vadd.f32 %v2400, %v2468
          %v2533 = vadd.f32 %v2401, %v2469
          %v2534 = vadd.f32 %v2402, %v2470
          %v2535 = vadd.f32 %v2403, %v2471
          %v2536 = vadd.f32 %v2404, %v2472
          %v2537 = vadd.f32 %v2405, %v2473
          %v2538 = vadd.f32 %v2406, %v2474
          %v2539 = vadd.f32 %v2407, %v2475
          %v2540 = vadd.f32 %v2408, %v2476
          %v2541 = vadd.f32 %v2409, %v2477
          %v2542 = vadd.f32 %v2410, %v2478
          %v2543 = vadd.f32 %v2411, %v2479
          %v2544 = vadd.f32 %v2412, %v2480
          %v2545 = vadd.f32 %v2413, %v2481
          %v2546 = vadd.f32 %v2414, %v2482
          %v2547 = vadd.f32 %v2415, %v2483
          %v2548 = vadd.f32 %v2416, %v2484
          %v2549 = vadd.f32 %v2417, %v2485
          %v2550 = vadd.f32 %v2418, %v2486
          %v2551 = vadd.f32 %v2419, %v2487
          %v2552 = vadd.f32 %v2420, %v2488
          %v2553 = vadd.f32 %v2421, %v2489
          %v2554 = vadd.f32 %v2422, %v2490
          %v2555 = vadd.f32 %v2423, %v2491
          %v2556 = vadd.f32 %v2424, %v2492
          %v2557 = vadd.f32 %v2425, %v2493
          %v2558 = vadd.f32 %v2426, %v2494
          %v2559 = vadd.f32 %v2427, %v2495
          %v2560 = vadd.f32 %v2428, %v2496
          %v2561 = vadd.f32 %v2429, %v2497
          %v2562 = vlaneseq
          %v2563 = vshrl.u32 %v2562, 7
          %v2564 = vsub.s32 5, %v2563
          %v2565 = vrot.slane %v1913, %v2564
          %v2566 = vmul.f32 %v1720, %v2565
          %v2567 = vmul.f32 %v1881, %v2565
          %v2568 = vmul.f32 %v1723, %v2565
          %v2569 = vmul.f32 %v1882, %v2565
          %v2570 = vmul.f32 %v1726, %v2565
          %v2571 = vmul.f32 %v1883, %v2565
          %v2572 = vmul.f32 %v1729, %v2565
          %v2573 = vmul.f32 %v1884, %v2565
          %v2574 = vmul.f32 %v1732, %v2565
          %v2575 = vmul.f32 %v1885, %v2565
          %v2576 = vmul.f32 %v1735, %v2565
          %v2577 = vmul.f32 %v1886, %v2565
          %v2578 = vmul.f32 %v1738, %v2565
          %v2579 = vmul.f32 %v1887, %v2565
          %v2580 = vmul.f32 %v1741, %v2565
          %v2581 = vmul.f32 %v1888, %v2565
          %v2582 = vmul.f32 %v1744, %v2565
          %v2583 = vmul.f32 %v1889, %v2565
          %v2584 = vmul.f32 %v1747, %v2565
          %v2585 = vmul.f32 %v1890, %v2565
          %v2586 = vmul.f32 %v1750, %v2565
          %v2587 = vmul.f32 %v1891, %v2565
          %v2588 = vmul.f32 %v1753, %v2565
          %v2589 = vmul.f32 %v1892, %v2565
          %v2590 = vmul.f32 %v1756, %v2565
          %v2591 = vmul.f32 %v1893, %v2565
          %v2592 = vmul.f32 %v1759, %v2565
          %v2593 = vmul.f32 %v1894, %v2565
          %v2594 = vmul.f32 %v1762, %v2565
          %v2595 = vmul.f32 %v1895, %v2565
          %v2596 = vmul.f32 %v1765, %v2565
          %v2597 = vmul.f32 %v1896, %v2565
          %v2598 = vmul.f32 %v1768, %v2565
          %v2599 = vmul.f32 %v1897, %v2565
          %v2600 = vmul.f32 %v1771, %v2565
          %v2601 = vmul.f32 %v1898, %v2565
          %v2602 = vmul.f32 %v1774, %v2565
          %v2603 = vmul.f32 %v1899, %v2565
          %v2604 = vmul.f32 %v1777, %v2565
          %v2605 = vmul.f32 %v1900, %v2565
          %v2606 = vmul.f32 %v1780, %v2565
          %v2607 = vmul.f32 %v1901, %v2565
          %v2608 = vmul.f32 %v1783, %v2565
          %v2609 = vmul.f32 %v1902, %v2565
          %v2610 = vmul.f32 %v1786, %v2565
          %v2611 = vmul.f32 %v1903, %v2565
          %v2612 = vmul.f32 %v1789, %v2565
          %v2613 = vmul.f32 %v1904, %v2565
          %v2614 = vmul.f32 %v1792, %v2565
          %v2615 = vmul.f32 %v1905, %v2565
          %v2616 = vmul.f32 %v1795, %v2565
          %v2617 = vmul.f32 %v1906, %v2565
          %v2618 = vmul.f32 %v1798, %v2565
          %v2619 = vmul.f32 %v1907, %v2565
          %v2620 = vmul.f32 %v1801, %v2565
          %v2621 = vmul.f32 %v1908, %v2565
          %v2622 = vmul.f32 %v1804, %v2565
          %v2623 = vmul.f32 %v1909, %v2565
          %v2624 = vmul.f32 %v1807, %v2565
          %v2625 = vmul.f32 %v1910, %v2565
          %v2626 = vmul.f32 %v1810, %v2565
          %v2627 = vmul.f32 %v1911, %v2565
          %v2628 = vmul.f32 %v1813, %v2565
          %v2629 = vmul.f32 %v1912, %v2565
          %v2630 = vadd.f32 %v2498, %v2566
          %v2631 = vadd.f32 %v2499, %v2567
          %v2632 = vadd.f32 %v2500, %v2568
          %v2633 = vadd.f32 %v2501, %v2569
          %v2634 = vadd.f32 %v2502, %v2570
          %v2635 = vadd.f32 %v2503, %v2571
          %v2636 = vadd.f32 %v2504, %v2572
          %v2637 = vadd.f32 %v2505, %v2573
          %v2638 = vadd.f32 %v2506, %v2574
          %v2639 = vadd.f32 %v2507, %v2575
          %v2640 = vadd.f32 %v2508, %v2576
          %v2641 = vadd.f32 %v2509, %v2577
          %v2642 = vadd.f32 %v2510, %v2578
          %v2643 = vadd.f32 %v2511, %v2579
          %v2644 = vadd.f32 %v2512, %v2580
          %v2645 = vadd.f32 %v2513, %v2581
          %v2646 = vadd.f32 %v2514, %v2582
          %v2647 = vadd.f32 %v2515, %v2583
          %v2648 = vadd.f32 %v2516, %v2584
          %v2649 = vadd.f32 %v2517, %v2585
          %v2650 = vadd.f32 %v2518, %v2586
          %v2651 = vadd.f32 %v2519, %v2587
          %v2652 = vadd.f32 %v2520, %v2588
          %v2653 = vadd.f32 %v2521, %v2589
          %v2654 = vadd.f32 %v2522, %v2590
          %v2655 = vadd.f32 %v2523, %v2591
          %v2656 = vadd.f32 %v2524, %v2592
          %v2657 = vadd.f32 %v2525, %v2593
          %v2658 = vadd.f32 %v2526, %v2594
          %v2659 = vadd.f32 %v2527, %v2595
          %v2660 = vadd.f32 %v2528, %v2596
          %v2661 = vadd.f32 %v2529, %v2597
          %v2662 = vadd.f32 %v2530, %v2598
          %v2663 = vadd.f32 %v2531, %v2599
          %v2664 = vadd.f32 %v2532, %v2600
          %v2665 = vadd.f32 %v2533, %v2601
          %v2666 = vadd.f32 %v2534, %v2602
          %v2667 = vadd.f32 %v2535, %v2603
          %v2668 = vadd.f32 %v2536, %v2604
          %v2669 = vadd.f32 %v2537, %v2605
          %v2670 = vadd.f32 %v2538, %v2606
          %v2671 = vadd.f32 %v2539, %v2607
          %v2672 = vadd.f32 %v2540, %v2608
          %v2673 = vadd.f32 %v2541, %v2609
          %v2674 = vadd.f32 %v2542, %v2610
          %v2675 = vadd.f32 %v2543, %v2611
          %v2676 = vadd.f32 %v2544, %v2612
          %v2677 = vadd.f32 %v2545, %v2613
          %v2678 = vadd.f32 %v2546, %v2614
          %v2679 = vadd.f32 %v2547, %v2615
          %v2680 = vadd.f32 %v2548, %v2616
          %v2681 = vadd.f32 %v2549, %v2617
          %v2682 = vadd.f32 %v2550, %v2618
          %v2683 = vadd.f32 %v2551, %v2619
          %v2684 = vadd.f32 %v2552, %v2620
          %v2685 = vadd.f32 %v2553, %v2621
          %v2686 = vadd.f32 %v2554, %v2622
          %v2687 = vadd.f32 %v2555, %v2623
          %v2688 = vadd.f32 %v2556, %v2624
          %v2689 = vadd.f32 %v2557, %v2625
          %v2690 = vadd.f32 %v2558, %v2626
          %v2691 = vadd.f32 %v2559, %v2627
          %v2692 = vadd.f32 %v2560, %v2628
          %v2693 = vadd.f32 %v2561, %v2629
          %v2694 = vlaneseq
          %v2695 = vshrl.u32 %v2694, 7
          %v2696 = vsub.s32 6, %v2695
          %v2697 = vrot.slane %v1913, %v2696
          %v2698 = vmul.f32 %v1684, %v2697
          %v2699 = vmul.f32 %v1525, %v2697
          %v2700 = vmul.f32 %v1685, %v2697
          %v2701 = vmul.f32 %v1528, %v2697
          %v2702 = vmul.f32 %v1686, %v2697
          %v2703 = vmul.f32 %v1531, %v2697
          %v2704 = vmul.f32 %v1687, %v2697
          %v2705 = vmul.f32 %v1534, %v2697
          %v2706 = vmul.f32 %v1688, %v2697
          %v2707 = vmul.f32 %v1537, %v2697
          %v2708 = vmul.f32 %v1689, %v2697
          %v2709 = vmul.f32 %v1540, %v2697
          %v2710 = vmul.f32 %v1690, %v2697
          %v2711 = vmul.f32 %v1543, %v2697
          %v2712 = vmul.f32 %v1691, %v2697
          %v2713 = vmul.f32 %v1546, %v2697
          %v2714 = vmul.f32 %v1692, %v2697
          %v2715 = vmul.f32 %v1549, %v2697
          %v2716 = vmul.f32 %v1693, %v2697
          %v2717 = vmul.f32 %v1552, %v2697
          %v2718 = vmul.f32 %v1694, %v2697
          %v2719 = vmul.f32 %v1555, %v2697
          %v2720 = vmul.f32 %v1695, %v2697
          %v2721 = vmul.f32 %v1558, %v2697
          %v2722 = vmul.f32 %v1696, %v2697
          %v2723 = vmul.f32 %v1561, %v2697
          %v2724 = vmul.f32 %v1697, %v2697
          %v2725 = vmul.f32 %v1564, %v2697
          %v2726 = vmul.f32 %v1698, %v2697
          %v2727 = vmul.f32 %v1567, %v2697
          %v2728 = vmul.f32 %v1682, %v2697
          %v2729 = vmul.f32 %v1519, %v2697
          %v2730 = vmul.f32 %v1700, %v2697
          %v2731 = vmul.f32 %v1573, %v2697
          %v2732 = vmul.f32 %v1701, %v2697
          %v2733 = vmul.f32 %v1576, %v2697
          %v2734 = vmul.f32 %v1702, %v2697
          %v2735 = vmul.f32 %v1579, %v2697
          %v2736 = vmul.f32 %v1703, %v2697
          %v2737 = vmul.f32 %v1582, %v2697
          %v2738 = vmul.f32 %v1704, %v2697
          %v2739 = vmul.f32 %v1585, %v2697
          %v2740 = vmul.f32 %v1705, %v2697
          %v2741 = vmul.f32 %v1588, %v2697
          %v2742 = vmul.f32 %v1706, %v2697
          %v2743 = vmul.f32 %v1591, %v2697
          %v2744 = vmul.f32 %v1707, %v2697
          %v2745 = vmul.f32 %v1594, %v2697
          %v2746 = vmul.f32 %v1708, %v2697
          %v2747 = vmul.f32 %v1597, %v2697
          %v2748 = vmul.f32 %v1709, %v2697
          %v2749 = vmul.f32 %v1600, %v2697
          %v2750 = vmul.f32 %v1710, %v2697
          %v2751 = vmul.f32 %v1603, %v2697
          %v2752 = vmul.f32 %v1711, %v2697
          %v2753 = vmul.f32 %v1606, %v2697
          %v2754 = vmul.f32 %v1712, %v2697
          %v2755 = vmul.f32 %v1609, %v2697
          %v2756 = vmul.f32 %v1713, %v2697
          %v2757 = vmul.f32 %v1612, %v2697
          %v2758 = vmul.f32 %v1714, %v2697
          %v2759 = vmul.f32 %v1615, %v2697
          %v2760 = vadd.f32 %v2630, %v2698
          %v2761 = vadd.f32 %v2631, %v2699
          %v2762 = vadd.f32 %v2632, %v2700
          %v2763 = vadd.f32 %v2633, %v2701
          %v2764 = vadd.f32 %v2634, %v2702
          %v2765 = vadd.f32 %v2635, %v2703
          %v2766 = vadd.f32 %v2636, %v2704
          %v2767 = vadd.f32 %v2637, %v2705
          %v2768 = vadd.f32 %v2638, %v2706
          %v2769 = vadd.f32 %v2639, %v2707
          %v2770 = vadd.f32 %v2640, %v2708
          %v2771 = vadd.f32 %v2641, %v2709
          %v2772 = vadd.f32 %v2642, %v2710
          %v2773 = vadd.f32 %v2643, %v2711
          %v2774 = vadd.f32 %v2644, %v2712
          %v2775 = vadd.f32 %v2645, %v2713
          %v2776 = vadd.f32 %v2646, %v2714
          %v2777 = vadd.f32 %v2647, %v2715
          %v2778 = vadd.f32 %v2648, %v2716
          %v2779 = vadd.f32 %v2649, %v2717
          %v2780 = vadd.f32 %v2650, %v2718
          %v2781 = vadd.f32 %v2651, %v2719
          %v2782 = vadd.f32 %v2652, %v2720
          %v2783 = vadd.f32 %v2653, %v2721
          %v2784 = vadd.f32 %v2654, %v2722
          %v2785 = vadd.f32 %v2655, %v2723
          %v2786 = vadd.f32 %v2656, %v2724
          %v2787 = vadd.f32 %v2657, %v2725
          %v2788 = vadd.f32 %v2658, %v2726
          %v2789 = vadd.f32 %v2659, %v2727
          %v2790 = vadd.f32 %v2660, %v2728
          %v2791 = vadd.f32 %v2661, %v2729
          %v2792 = vadd.f32 %v2662, %v2730
          %v2793 = vadd.f32 %v2663, %v2731
          %v2794 = vadd.f32 %v2664, %v2732
          %v2795 = vadd.f32 %v2665, %v2733
          %v2796 = vadd.f32 %v2666, %v2734
          %v2797 = vadd.f32 %v2667, %v2735
          %v2798 = vadd.f32 %v2668, %v2736
          %v2799 = vadd.f32 %v2669, %v2737
          %v2800 = vadd.f32 %v2670, %v2738
          %v2801 = vadd.f32 %v2671, %v2739
          %v2802 = vadd.f32 %v2672, %v2740
          %v2803 = vadd.f32 %v2673, %v2741
          %v2804 = vadd.f32 %v2674, %v2742
          %v2805 = vadd.f32 %v2675, %v2743
          %v2806 = vadd.f32 %v2676, %v2744
          %v2807 = vadd.f32 %v2677, %v2745
          %v2808 = vadd.f32 %v2678, %v2746
          %v2809 = vadd.f32 %v2679, %v2747
          %v2810 = vadd.f32 %v2680, %v2748
          %v2811 = vadd.f32 %v2681, %v2749
          %v2812 = vadd.f32 %v2682, %v2750
          %v2813 = vadd.f32 %v2683, %v2751
          %v2814 = vadd.f32 %v2684, %v2752
          %v2815 = vadd.f32 %v2685, %v2753
          %v2816 = vadd.f32 %v2686, %v2754
          %v2817 = vadd.f32 %v2687, %v2755
          %v2818 = vadd.f32 %v2688, %v2756
          %v2819 = vadd.f32 %v2689, %v2757
          %v2820 = vadd.f32 %v2690, %v2758
          %v2821 = vadd.f32 %v2691, %v2759
          %v2822 = vadd.f32 %v2692, %v2728
          %v2823 = vadd.f32 %v2693, %v2729
          %v2824 = vlaneseq
          %v2825 = vshrl.u32 %v2824, 7
          %v2826 = vsub.s32 7, %v2825
          %v2827 = vrot.slane %v1913, %v2826
          %v2828 = vmul.f32 %v1390, %v2827
          %v2829 = vmul.f32 %v1391, %v2827
          %v2830 = vmul.f32 %v1392, %v2827
          %v2831 = vmul.f32 %v1393, %v2827
          %v2832 = vmul.f32 %v1394, %v2827
          %v2833 = vmul.f32 %v1395, %v2827
          %v2834 = vmul.f32 %v1396, %v2827
          %v2835 = vmul.f32 %v1397, %v2827
          %v2836 = vmul.f32 %v1398, %v2827
          %v2837 = vmul.f32 %v1399, %v2827
          %v2838 = vmul.f32 %v1400, %v2827
          %v2839 = vmul.f32 %v1401, %v2827
          %v2840 = vmul.f32 %v1402, %v2827
          %v2841 = vmul.f32 %v1403, %v2827
          %v2842 = vmul.f32 %v1404, %v2827
          %v2843 = vmul.f32 %v1405, %v2827
          %v2844 = vmul.f32 %v1406, %v2827
          %v2845 = vmul.f32 %v1407, %v2827
          %v2846 = vmul.f32 %v1408, %v2827
          %v2847 = vmul.f32 %v1409, %v2827
          %v2848 = vmul.f32 %v1410, %v2827
          %v2849 = vmul.f32 %v1411, %v2827
          %v2850 = vmul.f32 %v1412, %v2827
          %v2851 = vmul.f32 %v1413, %v2827
          %v2852 = vmul.f32 %v1414, %v2827
          %v2853 = vmul.f32 %v1415, %v2827
          %v2854 = vmul.f32 %v1416, %v2827
          %v2855 = vmul.f32 %v1417, %v2827
          %v2856 = vmul.f32 %v1418, %v2827
          %v2857 = vmul.f32 %v1419, %v2827
          %v2858 = vmul.f32 %v2827, 0.0
          %v2859 = vmul.f32 %v1422, %v2827
          %v2860 = vmul.f32 %v1423, %v2827
          %v2861 = vmul.f32 %v1424, %v2827
          %v2862 = vmul.f32 %v1425, %v2827
          %v2863 = vmul.f32 %v1426, %v2827
          %v2864 = vmul.f32 %v1427, %v2827
          %v2865 = vmul.f32 %v1428, %v2827
          %v2866 = vmul.f32 %v1429, %v2827
          %v2867 = vmul.f32 %v1430, %v2827
          %v2868 = vmul.f32 %v1431, %v2827
          %v2869 = vmul.f32 %v1432, %v2827
          %v2870 = vmul.f32 %v1433, %v2827
          %v2871 = vmul.f32 %v1434, %v2827
          %v2872 = vmul.f32 %v1435, %v2827
          %v2873 = vmul.f32 %v1436, %v2827
          %v2874 = vmul.f32 %v1437, %v2827
          %v2875 = vmul.f32 %v1438, %v2827
          %v2876 = vmul.f32 %v1439, %v2827
          %v2877 = vmul.f32 %v1440, %v2827
          %v2878 = vmul.f32 %v1441, %v2827
          %v2879 = vmul.f32 %v1442, %v2827
          %v2880 = vmul.f32 %v1443, %v2827
          %v2881 = vmul.f32 %v1444, %v2827
          %v2882 = vmul.f32 %v1445, %v2827
          %v2883 = vmul.f32 %v1446, %v2827
          %v2884 = vmul.f32 %v1447, %v2827
          %v2885 = vmul.f32 %v1448, %v2827
          %v2886 = vmul.f32 %v1449, %v2827
          %v2887 = vmul.f32 %v1450, %v2827
          %v2888 = vmul.f32 %v1451, %v2827
          %v2889 = vadd.f32 %v2760, %v2828
          %v2890 = vadd.f32 %v2761, %v2829
          %v2891 = vadd.f32 %v2762, %v2830
          %v2892 = vadd.f32 %v2763, %v2831
          %v2893 = vadd.f32 %v2764, %v2832
          %v2894 = vadd.f32 %v2765, %v2833
          %v2895 = vadd.f32 %v2766, %v2834
          %v2896 = vadd.f32 %v2767, %v2835
          %v2897 = vadd.f32 %v2768, %v2836
          %v2898 = vadd.f32 %v2769, %v2837
          %v2899 = vadd.f32 %v2770, %v2838
          %v2900 = vadd.f32 %v2771, %v2839
          %v2901 = vadd.f32 %v2772, %v2840
          %v2902 = vadd.f32 %v2773, %v2841
          %v2903 = vadd.f32 %v2774, %v2842
          %v2904 = vadd.f32 %v2775, %v2843
          %v2905 = vadd.f32 %v2776, %v2844
          %v2906 = vadd.f32 %v2777, %v2845
          %v2907 = vadd.f32 %v2778, %v2846
          %v2908 = vadd.f32 %v2779, %v2847
          %v2909 = vadd.f32 %v2780, %v2848
          %v2910 = vadd.f32 %v2781, %v2849
          %v2911 = vadd.f32 %v2782, %v2850
          %v2912 = vadd.f32 %v2783, %v2851
          %v2913 = vadd.f32 %v2784, %v2852
          %v2914 = vadd.f32 %v2785, %v2853
          %v2915 = vadd.f32 %v2786, %v2854
          %v2916 = vadd.f32 %v2787, %v2855
          %v2917 = vadd.f32 %v2788, %v2856
          %v2918 = vadd.f32 %v2789, %v2857
          %v2919 = vadd.f32 %v2790, %v2858
          %v2920 = vadd.f32 %v2791, %v2858
          %v2921 = vadd.f32 %v2792, %v2859
          %v2922 = vadd.f32 %v2793, %v2860
          %v2923 = vadd.f32 %v2794, %v2861
          %v2924 = vadd.f32 %v2795, %v2862
          %v2925 = vadd.f32 %v2796, %v2863
          %v2926 = vadd.f32 %v2797, %v2864
          %v2927 = vadd.f32 %v2798, %v2865
          %v2928 = vadd.f32 %v2799, %v2866
          %v2929 = vadd.f32 %v2800, %v2867
          %v2930 = vadd.f32 %v2801, %v2868
          %v2931 = vadd.f32 %v2802, %v2869
          %v2932 = vadd.f32 %v2803, %v2870
          %v2933 = vadd.f32 %v2804, %v2871
          %v2934 = vadd.f32 %v2805, %v2872
          %v2935 = vadd.f32 %v2806, %v2873
          %v2936 = vadd.f32 %v2807, %v2874
          %v2937 = vadd.f32 %v2808, %v2875
          %v2938 = vadd.f32 %v2809, %v2876
          %v2939 = vadd.f32 %v2810, %v2877
          %v2940 = vadd.f32 %v2811, %v2878
          %v2941 = vadd.f32 %v2812, %v2879
          %v2942 = vadd.f32 %v2813, %v2880
          %v2943 = vadd.f32 %v2814, %v2881
          %v2944 = vadd.f32 %v2815, %v2882
          %v2945 = vadd.f32 %v2816, %v2883
          %v2946 = vadd.f32 %v2817, %v2884
          %v2947 = vadd.f32 %v2818, %v2885
          %v2948 = vadd.f32 %v2819, %v2886
          %v2949 = vadd.f32 %v2820, %v2887
          %v2950 = vadd.f32 %v2821, %v2888
          %v2951 = vadd.f32 %v2822, %v2858
          %v2952 = vadd.f32 %v2823, %v2858
          %v2953 = vlaneseq
          %v2954 = vshrl.u32 %v2953, 7
          %v2955 = vsub.s32 0, %v2954
          %v2956 = vrot.slane %v1914, %v2955
          %v2957 = vmul.f32 %v1723, %v2956
          %v2958 = vmul.f32 %v1882, %v2956
          %v2959 = vmul.f32 %v1726, %v2956
          %v2960 = vmul.f32 %v1883, %v2956
          %v2961 = vmul.f32 %v1729, %v2956
          %v2962 = vmul.f32 %v1884, %v2956
          %v2963 = vmul.f32 %v1732, %v2956
          %v2964 = vmul.f32 %v1885, %v2956
          %v2965 = vmul.f32 %v1735, %v2956
          %v2966 = vmul.f32 %v1886, %v2956
          %v2967 = vmul.f32 %v1738, %v2956
          %v2968 = vmul.f32 %v1887, %v2956
          %v2969 = vmul.f32 %v1741, %v2956
          %v2970 = vmul.f32 %v1888, %v2956
          %v2971 = vmul.f32 %v1744, %v2956
          %v2972 = vmul.f32 %v1889, %v2956
          %v2973 = vmul.f32 %v1747, %v2956
          %v2974 = vmul.f32 %v1890, %v2956
          %v2975 = vmul.f32 %v1750, %v2956
          %v2976 = vmul.f32 %v1891, %v2956
          %v2977 = vmul.f32 %v1753, %v2956
          %v2978 = vmul.f32 %v1892, %v2956
          %v2979 = vmul.f32 %v1756, %v2956
          %v2980 = vmul.f32 %v1893, %v2956
          %v2981 = vmul.f32 %v1759, %v2956
          %v2982 = vmul.f32 %v1894, %v2956
          %v2983 = vmul.f32 %v1762, %v2956
          %v2984 = vmul.f32 %v1895, %v2956
          %v2985 = vmul.f32 %v1765, %v2956
          %v2986 = vmul.f32 %v1896, %v2956
          %v2987 = vmul.f32 %v1717, %v2956
          %v2988 = vmul.f32 %v1880, %v2956
          %v2989 = vmul.f32 %v1771, %v2956
          %v2990 = vmul.f32 %v1898, %v2956
          %v2991 = vmul.f32 %v1774, %v2956
          %v2992 = vmul.f32 %v1899, %v2956
          %v2993 = vmul.f32 %v1777, %v2956
          %v2994 = vmul.f32 %v1900, %v2956
          %v2995 = vmul.f32 %v1780, %v2956
          %v2996 = vmul.f32 %v1901, %v2956
          %v2997 = vmul.f32 %v1783, %v2956
          %v2998 = vmul.f32 %v1902, %v2956
          %v2999 = vmul.f32 %v1786, %v2956
          %v3000 = vmul.f32 %v1903, %v2956
          %v3001 = vmul.f32 %v1789, %v2956
          %v3002 = vmul.f32 %v1904, %v2956
          %v3003 = vmul.f32 %v1792, %v2956
          %v3004 = vmul.f32 %v1905, %v2956
          %v3005 = vmul.f32 %v1795, %v2956
          %v3006 = vmul.f32 %v1906, %v2956
          %v3007 = vmul.f32 %v1798, %v2956
          %v3008 = vmul.f32 %v1907, %v2956
          %v3009 = vmul.f32 %v1801, %v2956
          %v3010 = vmul.f32 %v1908, %v2956
          %v3011 = vmul.f32 %v1804, %v2956
          %v3012 = vmul.f32 %v1909, %v2956
          %v3013 = vmul.f32 %v1807, %v2956
          %v3014 = vmul.f32 %v1910, %v2956
          %v3015 = vmul.f32 %v1810, %v2956
          %v3016 = vmul.f32 %v1911, %v2956
          %v3017 = vmul.f32 %v1813, %v2956
          %v3018 = vmul.f32 %v1912, %v2956
          %v3019 = vadd.f32 %v2889, %v2957
          %v3020 = vadd.f32 %v2890, %v2958
          %v3021 = vadd.f32 %v2891, %v2959
          %v3022 = vadd.f32 %v2892, %v2960
          %v3023 = vadd.f32 %v2893, %v2961
          %v3024 = vadd.f32 %v2894, %v2962
          %v3025 = vadd.f32 %v2895, %v2963
          %v3026 = vadd.f32 %v2896, %v2964
          %v3027 = vadd.f32 %v2897, %v2965
          %v3028 = vadd.f32 %v2898, %v2966
          %v3029 = vadd.f32 %v2899, %v2967
          %v3030 = vadd.f32 %v2900, %v2968
          %v3031 = vadd.f32 %v2901, %v2969
          %v3032 = vadd.f32 %v2902, %v2970
          %v3033 = vadd.f32 %v2903, %v2971
          %v3034 = vadd.f32 %v2904, %v2972
          %v3035 = vadd.f32 %v2905, %v2973
          %v3036 = vadd.f32 %v2906, %v2974
          %v3037 = vadd.f32 %v2907, %v2975
          %v3038 = vadd.f32 %v2908, %v2976
          %v3039 = vadd.f32 %v2909, %v2977
          %v3040 = vadd.f32 %v2910, %v2978
          %v3041 = vadd.f32 %v2911, %v2979
          %v3042 = vadd.f32 %v2912, %v2980
          %v3043 = vadd.f32 %v2913, %v2981
          %v3044 = vadd.f32 %v2914, %v2982
          %v3045 = vadd.f32 %v2915, %v2983
          %v3046 = vadd.f32 %v2916, %v2984
          %v3047 = vadd.f32 %v2917, %v2985
          %v3048 = vadd.f32 %v2918, %v2986
          %v3049 = vadd.f32 %v2919, %v2987
          %v3050 = vadd.f32 %v2920, %v2988
          %v3051 = vadd.f32 %v2921, %v2989
          %v3052 = vadd.f32 %v2922, %v2990
          %v3053 = vadd.f32 %v2923, %v2991
          %v3054 = vadd.f32 %v2924, %v2992
          %v3055 = vadd.f32 %v2925, %v2993
          %v3056 = vadd.f32 %v2926, %v2994
          %v3057 = vadd.f32 %v2927, %v2995
          %v3058 = vadd.f32 %v2928, %v2996
          %v3059 = vadd.f32 %v2929, %v2997
          %v3060 = vadd.f32 %v2930, %v2998
          %v3061 = vadd.f32 %v2931, %v2999
          %v3062 = vadd.f32 %v2932, %v3000
          %v3063 = vadd.f32 %v2933, %v3001
          %v3064 = vadd.f32 %v2934, %v3002
          %v3065 = vadd.f32 %v2935, %v3003
          %v3066 = vadd.f32 %v2936, %v3004
          %v3067 = vadd.f32 %v2937, %v3005
          %v3068 = vadd.f32 %v2938, %v3006
          %v3069 = vadd.f32 %v2939, %v3007
          %v3070 = vadd.f32 %v2940, %v3008
          %v3071 = vadd.f32 %v2941, %v3009
          %v3072 = vadd.f32 %v2942, %v3010
          %v3073 = vadd.f32 %v2943, %v3011
          %v3074 = vadd.f32 %v2944, %v3012
          %v3075 = vadd.f32 %v2945, %v3013
          %v3076 = vadd.f32 %v2946, %v3014
          %v3077 = vadd.f32 %v2947, %v3015
          %v3078 = vadd.f32 %v2948, %v3016
          %v3079 = vadd.f32 %v2949, %v3017
          %v3080 = vadd.f32 %v2950, %v3018
          %v3081 = vadd.f32 %v2951, %v2987
          %v3082 = vadd.f32 %v2952, %v2988
          %v3083 = vld [vmem:[%s377] sm:$0x1]
          %v3085 = vlaneseq
          %v3086 = vshrl.u32 %v3085, 7
          %v3087 = vsub.s32 0, %v3086
          %v3088 = vrot.slane %v3083, %v3087
          %v3090 = vadd.f32 %v3019, %v3088
          %v3091 = vadd.f32 %v3020, %v3088
          %v3092 = vadd.f32 %v3021, %v3088
          %v3093 = vadd.f32 %v3022, %v3088
          %v3094 = vadd.f32 %v3023, %v3088
          %v3095 = vadd.f32 %v3024, %v3088
          %v3096 = vadd.f32 %v3025, %v3088
          %v3097 = vadd.f32 %v3026, %v3088
          %v3098 = vadd.f32 %v3027, %v3088
          %v3099 = vadd.f32 %v3028, %v3088
          %v3100 = vadd.f32 %v3029, %v3088
          %v3101 = vadd.f32 %v3030, %v3088
          %v3102 = vadd.f32 %v3031, %v3088
          %v3103 = vadd.f32 %v3032, %v3088
          %v3104 = vadd.f32 %v3033, %v3088
          %v3105 = vadd.f32 %v3034, %v3088
          %v3106 = vadd.f32 %v3035, %v3088
          %v3107 = vadd.f32 %v3036, %v3088
          %v3108 = vadd.f32 %v3037, %v3088
          %v3109 = vadd.f32 %v3038, %v3088
          %v3110 = vadd.f32 %v3039, %v3088
          %v3111 = vadd.f32 %v3040, %v3088
          %v3112 = vadd.f32 %v3041, %v3088
          %v3113 = vadd.f32 %v3042, %v3088
          %v3114 = vadd.f32 %v3043, %v3088
          %v3115 = vadd.f32 %v3044, %v3088
          %v3116 = vadd.f32 %v3045, %v3088
          %v3117 = vadd.f32 %v3046, %v3088
          %v3118 = vadd.f32 %v3047, %v3088
          %v3119 = vadd.f32 %v3048, %v3088
          %v3120 = vadd.f32 %v3049, %v3088
          %v3121 = vadd.f32 %v3050, %v3088
          %v3122 = vadd.f32 %v3051, %v3088
          %v3123 = vadd.f32 %v3052, %v3088
          %v3124 = vadd.f32 %v3053, %v3088
          %v3125 = vadd.f32 %v3054, %v3088
          %v3126 = vadd.f32 %v3055, %v3088
          %v3127 = vadd.f32 %v3056, %v3088
          %v3128 = vadd.f32 %v3057, %v3088
          %v3129 = vadd.f32 %v3058, %v3088
          %v3130 = vadd.f32 %v3059, %v3088
          %v3131 = vadd.f32 %v3060, %v3088
          %v3132 = vadd.f32 %v3061, %v3088
          %v3133 = vadd.f32 %v3062, %v3088
          %v3134 = vadd.f32 %v3063, %v3088
          %v3135 = vadd.f32 %v3064, %v3088
          %v3136 = vadd.f32 %v3065, %v3088
          %v3137 = vadd.f32 %v3066, %v3088
          %v3138 = vadd.f32 %v3067, %v3088
          %v3139 = vadd.f32 %v3068, %v3088
          %v3140 = vadd.f32 %v3069, %v3088
          %v3141 = vadd.f32 %v3070, %v3088
          %v3142 = vadd.f32 %v3071, %v3088
          %v3143 = vadd.f32 %v3072, %v3088
          %v3144 = vadd.f32 %v3073, %v3088
          %v3145 = vadd.f32 %v3074, %v3088
          %v3146 = vadd.f32 %v3075, %v3088
          %v3147 = vadd.f32 %v3076, %v3088
          %v3148 = vadd.f32 %v3077, %v3088
          %v3149 = vadd.f32 %v3078, %v3088
          %v3150 = vadd.f32 %v3079, %v3088
          %v3151 = vadd.f32 %v3080, %v3088
          %v3152 = vadd.f32 %v3081, %v3088
          %v3153 = vadd.f32 %v3082, %v3088
          %v3154 = vmax.f32 %v3090, 0.0
          %v3155 = vmax.f32 %v3091, 0.0
          %v3156 = vmax.f32 %v3092, 0.0
          %v3157 = vmax.f32 %v3093, 0.0
          %v3158 = vmax.f32 %v3094, 0.0
          %v3159 = vmax.f32 %v3095, 0.0
          %v3160 = vmax.f32 %v3096, 0.0
          %v3161 = vmax.f32 %v3097, 0.0
          %v3162 = vmax.f32 %v3098, 0.0
          %v3163 = vmax.f32 %v3099, 0.0
          %v3164 = vmax.f32 %v3100, 0.0
          %v3165 = vmax.f32 %v3101, 0.0
          %v3166 = vmax.f32 %v3102, 0.0
          %v3167 = vmax.f32 %v3103, 0.0
          %v3168 = vmax.f32 %v3104, 0.0
          %v3169 = vmax.f32 %v3105, 0.0
          %v3170 = vmax.f32 %v3106, 0.0
          %v3171 = vmax.f32 %v3107, 0.0
          %v3172 = vmax.f32 %v3108, 0.0
          %v3173 = vmax.f32 %v3109, 0.0
          %v3174 = vmax.f32 %v3110, 0.0
          %v3175 = vmax.f32 %v3111, 0.0
          %v3176 = vmax.f32 %v3112, 0.0
          %v3177 = vmax.f32 %v3113, 0.0
          %v3178 = vmax.f32 %v3114, 0.0
          %v3179 = vmax.f32 %v3115, 0.0
          %v3180 = vmax.f32 %v3116, 0.0
          %v3181 = vmax.f32 %v3117, 0.0
          %v3182 = vmax.f32 %v3118, 0.0
          %v3183 = vmax.f32 %v3119, 0.0
          %v3184 = vmax.f32 %v3120, 0.0
          %v3185 = vmax.f32 %v3121, 0.0
          %v3186 = vmax.f32 %v3122, 0.0
          %v3187 = vmax.f32 %v3123, 0.0
          %v3188 = vmax.f32 %v3124, 0.0
          %v3189 = vmax.f32 %v3125, 0.0
          %v3190 = vmax.f32 %v3126, 0.0
          %v3191 = vmax.f32 %v3127, 0.0
          %v3192 = vmax.f32 %v3128, 0.0
          %v3193 = vmax.f32 %v3129, 0.0
          %v3194 = vmax.f32 %v3130, 0.0
          %v3195 = vmax.f32 %v3131, 0.0
          %v3196 = vmax.f32 %v3132, 0.0
          %v3197 = vmax.f32 %v3133, 0.0
          %v3198 = vmax.f32 %v3134, 0.0
          %v3199 = vmax.f32 %v3135, 0.0
          %v3200 = vmax.f32 %v3136, 0.0
          %v3201 = vmax.f32 %v3137, 0.0
          %v3202 = vmax.f32 %v3138, 0.0
          %v3203 = vmax.f32 %v3139, 0.0
          %v3204 = vmax.f32 %v3140, 0.0
          %v3205 = vmax.f32 %v3141, 0.0
          %v3206 = vmax.f32 %v3142, 0.0
          %v3207 = vmax.f32 %v3143, 0.0
          %v3208 = vmax.f32 %v3144, 0.0
          %v3209 = vmax.f32 %v3145, 0.0
          %v3210 = vmax.f32 %v3146, 0.0
          %v3211 = vmax.f32 %v3147, 0.0
          %v3212 = vmax.f32 %v3148, 0.0
          %v3213 = vmax.f32 %v3149, 0.0
          %v3214 = vmax.f32 %v3150, 0.0
          %v3215 = vmax.f32 %v3151, 0.0
          %v3216 = vmax.f32 %v3152, 0.0
          %v3217 = vmax.f32 %v3153, 0.0
          %3218 = vst [vmem:[%s369] sm:$0xff] %v3154
          %3219 = vst [vmem:[%s369 + $0x8] sm:$0xff] %v3155
          %3220 = vst [vmem:[%s369 + $0x10] sm:$0xff] %v3156
          %3221 = vst [vmem:[%s369 + $0x18] sm:$0xff] %v3157
          %3222 = vst [vmem:[%s369 + $0x20] sm:$0xff] %v3158
          %3223 = vst [vmem:[%s369 + $0x28] sm:$0xff] %v3159
          %3224 = vst [vmem:[%s369 + $0x30] sm:$0xff] %v3160
          %3225 = vst [vmem:[%s369 + $0x38] sm:$0xff] %v3161
          %3226 = vst [vmem:[%s369 + $0x40] sm:$0xff] %v3162
          %3227 = vst [vmem:[%s369 + $0x48] sm:$0xff] %v3163
          %3228 = vst [vmem:[%s369 + $0x50] sm:$0xff] %v3164
          %3229 = vst [vmem:[%s369 + $0x58] sm:$0xff] %v3165
          %3230 = vst [vmem:[%s369 + $0x60] sm:$0xff] %v3166
          %3231 = vst [vmem:[%s369 + $0x68] sm:$0xff] %v3167
          %3232 = vst [vmem:[%s369 + $0x70] sm:$0xff] %v3168
          %3233 = vst [vmem:[%s369 + $0x78] sm:$0xff] %v3169
          %3234 = vst [vmem:[%s369 + $0x80] sm:$0xff] %v3170
          %3235 = vst [vmem:[%s369 + $0x88] sm:$0xff] %v3171
          %3236 = vst [vmem:[%s369 + $0x90] sm:$0xff] %v3172
          %3237 = vst [vmem:[%s369 + $0x98] sm:$0xff] %v3173
          %3238 = vst [vmem:[%s369 + $0xa0] sm:$0xff] %v3174
          %3239 = vst [vmem:[%s369 + $0xa8] sm:$0xff] %v3175
          %3240 = vst [vmem:[%s369 + $0xb0] sm:$0xff] %v3176
          %3241 = vst [vmem:[%s369 + $0xb8] sm:$0xff] %v3177
          %3242 = vst [vmem:[%s369 + $0xc0] sm:$0xff] %v3178
          %3243 = vst [vmem:[%s369 + $0xc8] sm:$0xff] %v3179
          %3244 = vst [vmem:[%s369 + $0xd0] sm:$0xff] %v3180
          %3245 = vst [vmem:[%s369 + $0xd8] sm:$0xff] %v3181
          %3246 = vst [vmem:[%s369 + $0xe0] sm:$0xff] %v3182
          %3247 = vst [vmem:[%s369 + $0xe8] sm:$0xff] %v3183
          %3248 = vst [vmem:[%s369 + $0xf0] sm:$0xff] %v3184
          %3249 = vst [vmem:[%s369 + $0xf8] sm:$0xff] %v3185
          %3250 = vst [vmem:[%s369 + $0x100] sm:$0xff] %v3186
          %3251 = vst [vmem:[%s369 + $0x108] sm:$0xff] %v3187
          %3252 = vst [vmem:[%s369 + $0x110] sm:$0xff] %v3188
          %3253 = vst [vmem:[%s369 + $0x118] sm:$0xff] %v3189
          %3254 = vst [vmem:[%s369 + $0x120] sm:$0xff] %v3190
          %3255 = vst [vmem:[%s369 + $0x128] sm:$0xff] %v3191
          %3256 = vst [vmem:[%s369 + $0x130] sm:$0xff] %v3192
          %3257 = vst [vmem:[%s369 + $0x138] sm:$0xff] %v3193
          %3258 = vst [vmem:[%s369 + $0x140] sm:$0xff] %v3194
          %3259 = vst [vmem:[%s369 + $0x148] sm:$0xff] %v3195
          %3260 = vst [vmem:[%s369 + $0x150] sm:$0xff] %v3196
          %3261 = vst [vmem:[%s369 + $0x158] sm:$0xff] %v3197
          %3262 = vst [vmem:[%s369 + $0x160] sm:$0xff] %v3198
          %3263 = vst [vmem:[%s369 + $0x168] sm:$0xff] %v3199
          %3264 = vst [vmem:[%s369 + $0x170] sm:$0xff] %v3200
          %3265 = vst [vmem:[%s369 + $0x178] sm:$0xff] %v3201
          %3266 = vst [vmem:[%s369 + $0x180] sm:$0xff] %v3202
          %3267 = vst [vmem:[%s369 + $0x188] sm:$0xff] %v3203
          %3268 = vst [vmem:[%s369 + $0x190] sm:$0xff] %v3204
          %3269 = vst [vmem:[%s369 + $0x198] sm:$0xff] %v3205
          %3270 = vst [vmem:[%s369 + $0x1a0] sm:$0xff] %v3206
          %3271 = vst [vmem:[%s369 + $0x1a8] sm:$0xff] %v3207
          %3272 = vst [vmem:[%s369 + $0x1b0] sm:$0xff] %v3208
          %3273 = vst [vmem:[%s369 + $0x1b8] sm:$0xff] %v3209
          %3274 = vst [vmem:[%s369 + $0x1c0] sm:$0xff] %v3210
          %3275 = vst [vmem:[%s369 + $0x1c8] sm:$0xff] %v3211
          %3276 = vst [vmem:[%s369 + $0x1d0] sm:$0xff] %v3212
          %3277 = vst [vmem:[%s369 + $0x1d8] sm:$0xff] %v3213
          %3278 = vst [vmem:[%s369 + $0x1e0] sm:$0xff] %v3214
          %3279 = vst [vmem:[%s369 + $0x1e8] sm:$0xff] %v3215
          %3280 = vst [vmem:[%s369 + $0x1f0] sm:$0xff] %v3216
          %3281 = vst [vmem:[%s369 + $0x1f8] sm:$0xff] %v3217
        $region60: #{tpu_custom_call.1} parent=39 // pred_fallthru
          _
        %s3282 = sand.u32 %s188, 1
        %s3283 = scalar_lea.sflag [#allocation5], %s3282
        %s3284 = sand.u32 %s188, 1
        %s3285 = smul.addr %s3284, 512
        %s3286 = scalar_lea.vmem [#allocation9], %s3285
        // Predicated region
        $region61: #{tpu_custom_call.1} parent=39 // pred_check
          %p3287 = pneg %p198
        $region62: #{tpu_custom_call.1} parent=39 // pred_check_branch
          %3289 = sbr.rel (%p3287) target = $region64
        $region63: #{tpu_custom_call.1} parent=39 // pred_region
          %s3290 = smul.u32 2, %s30
          %s3292 = ssub.s32 8192, 8192
          %3293 = vsyncadd %s3283, %s3292
          %s3294 = smul.addr %s3290, 96
          %s3295 = sadd.s32 %s31, %s3294
          %s3296 = smul.addr %s3295, 128
          %s3297 = scalar_lea.hbm %s5, %s3296
          %s3298 = sshll.u32 %s3286, 4
          %s3299 = int_to_ptr.vmem [resolvable:$true] %s3298
          %3304 = dma.vmem_to_hbm [thread:$0]  %s3299, 8192, %s3297, %s3283, 128, 384, 8
        $region64: #{tpu_custom_call.1} parent=39 // pred_fallthru
          _
      $region40: #{tpu_custom_call.1} parent=5 // pred_fallthru
        _
      %p3305 = scmp.le.s32.totalorder 2, %s20
      // Predicated region
      $region65: #{tpu_custom_call.1} parent=5 // pred_check
        %p3306 = pneg %p3305
      $region66: #{tpu_custom_call.1} parent=5 // pred_check_branch
        %3308 = sbr.rel (%p3306) target = $region68
      $region67: #{tpu_custom_call.1} parent=5 // pred_region
        %s3309 = ssub.s32 %s20, 2
        // Predicated region
        $region69: #{tpu_custom_call.1} parent=67 // pred_check
          %p3310 = pneg %p204
        $region70: #{tpu_custom_call.1} parent=67 // pred_check_branch
          %3312 = sbr.rel (%p3310) target = $region72
        $region71: #{tpu_custom_call.1} parent=67 // pred_region
          %s3313 = sand.u32 %s189, 1
          %s3314 = scalar_lea.sflag [#allocation5], %s3313
          %s3315 = sand.u32 %s189, 1
          %s3316 = smul.addr %s3315, 512
          %s3317 = scalar_lea.vmem [#allocation9], %s3316
          %3318 = dma.done %s3314, 8192
        $region72: #{tpu_custom_call.1} parent=67 // pred_fallthru
          _
      $region68: #{tpu_custom_call.1} parent=5 // pred_fallthru
        _
    $region6: #{tpu_custom_call.1} parent=1 // loop_footer
      %s24 = sadd.s32 1, %s20
    $region7: #{tpu_custom_call.1} parent=1 // loop_footer_branch
      %19 = sbr.rel target = $region3
    $region8: #{tpu_custom_call.1} parent=1 // loop_exit
      _
    %3319 = vsyncpa [#allocation4], 1
    %s3320 = scalar_lea.sflag [#allocation4], 1
    %3321 = vsyncpa %s3320, 1
    %3322 = vsyncpa [#allocation7], 1
    %s3323 = scalar_lea.sflag [#allocation7], 1
    %3324 = vsyncpa %s3323, 1
    %3325 = vsyncpa [#allocation5], 1
    %s3326 = scalar_lea.sflag [#allocation5], 1
    %3327 = vsyncpa %s3326, 1

</llo_original>
